<compile_context>
chip_gen: v7x
topology: tpu7x:2x2x1
jax: 0.10.0
libtpu: 0.0.40
codegen_flags: <defaults>
</compile_context>

<pallas_src>
import functools

import jax
import jax.numpy as jnp
import numpy as np
from jax.experimental import pallas as pl
from jax.experimental.pallas import tpu as pltpu

_MARGIN = 128  # lane-aligned margin around the flattened pixels in the scratch


def _tree_sum(xs):
    xs = list(xs)
    while len(xs) > 1:
        nxt = [xs[i] + xs[i + 1] for i in range(0, len(xs) - 1, 2)]
        if len(xs) % 2:
            nxt.append(xs[-1])
        xs = nxt
    return xs[0]


def _residual_block_kernel(W, HW, x_ref, p_ref, m_ref, o_ref, ext_ref):
    """One grid step = `n_img` images of the batch, lane-concatenated.

    x_ref   : (n_img, C, HW)        input images (lane-dense, free reshape of NCHW)
    p_ref   : (2, C, 9*C + 1)       packed [w | b] for conv1 / conv2,
                                    w[co, t*C + ci] with t = ky*3 + kx
    m_ref   : (9, C, NHW)           per-tap validity masks, pre-broadcast over C
    o_ref   : (n_img, C, HW)        output images
    ext_ref : (C*C, NHW + 2*_MARGIN) channel-replicated, margin-padded staging
              scratch so every shifted tap row is a plain offset vector load.
    """
    n_img = o_ref.shape[0]
    C = o_ref.shape[1]
    NHW = n_img * HW
    nine_c = 9 * C
    f32 = jnp.float32

    # ---- zero the two 128-lane margins of the staging scratch --------------
    # Unconditional (not @pl.when(program_id==0)): it is only ~4 vreg stores and
    # remains safe if the grid axis is split "parallel" across TensorCores.
    zmargin = jnp.zeros((C * C, _MARGIN), f32)
    ext_ref[:, pl.ds(0, _MARGIN)] = zmargin
    ext_ref[:, pl.ds(_MARGIN + NHW, _MARGIN)] = zmargin

    def replicate_rows(slab):
        # (C, L) -> (C*C, L); rows [ci*C, ci*C+C) are C copies of channel ci.
        L = slab.shape[1]
        return jnp.concatenate(
            [jnp.broadcast_to(slab[ci:ci + 1, :], (C, L)) for ci in range(C)],
            axis=0)

    def conv3x3(conv_idx):
        # VPU conv: 9 shifted taps x C rank-1 MACs per output-channel slab.
        params = p_ref[conv_idx]                       # (C, 9C + 1)
        w_mat = params[:, :nine_c]                     # (C, 9C)
        b_col = params[:, nine_c:nine_c + 1]           # (C, 1)

        accs = [None, None, None]                      # one accumulator per ky
        accs[1] = jnp.broadcast_to(b_col, (C, NHW))    # bias fused into init
        for ky in range(3):
            for kx in range(3):
                t = ky * 3 + kx
                off = (ky - 1) * W + (kx - 1)
                terms = []
                for ci in range(C):
                    # Plain contiguous load of channel ci replicated over the C
                    # output-channel sublanes (no in-register sublane broadcast).
                    tap = ext_ref[pl.ds(ci * C, C), pl.ds(_MARGIN + off, NHW)]
                    # (C,1) weight column lane-broadcasts at the multiply.
                    terms.append(tap * w_mat[:, t * C + ci:t * C + ci + 1])
                part = _tree_sum(terms)                # (C, NHW)
                if not (ky == 1 and kx == 1):
                    part = part * m_ref[t]             # zero halo / cross-image taps
                accs[ky] = part if accs[ky] is None else accs[ky] + part
        return _tree_sum(accs)

    # ---- stage conv1 input (channel-replicated) and run conv1 + ReLU -------
    for n in range(n_img):
        ext_ref[:, pl.ds(_MARGIN + n * HW, HW)] = replicate_rows(x_ref[n])
    h = jnp.maximum(conv3x3(0), 0.0)

    # ---- stage hidden, run conv2; residual added at the per-image store ----
    ext_ref[:, pl.ds(_MARGIN, NHW)] = replicate_rows(h)
    out = conv3x3(1)
    for n in range(n_img):
        o_ref[n, :, :] = out[:, n * HW:(n + 1) * HW] + x_ref[n]


def _tap_masks(H, W):
    """(9, H*W) float32 masks: 1 where the (ky,kx) tap's source pixel is in-bounds."""
    p = jnp.arange(H * W, dtype=jnp.int32)
    y = p // W
    x = p % W
    rows = []
    for ky in range(3):
        for kx in range(3):
            dy, dx = ky - 1, kx - 1
            valid = ((y + dy >= 0) & (y + dy < H) &
                     (x + dx >= 0) & (x + dx < W))
            rows.append(valid.astype(jnp.float32))
    return jnp.stack(rows, axis=0)


def residual_block_nchw(x_nchw, w1_hwio, b1, w2_hwio, b2, *, grid_steps=1):
    """PyTorch-facing: NCHW input/output, HWIO (3,3,Cin,Cout) weights, (C,) biases.

    grid_steps=1 is best on v5e/v6e (single TensorCore); grid_steps=2 splits the
    batch over a "parallel" grid axis so both v7x TensorCores get work.
    """
    N, C, H, W = x_nchw.shape
    HW = H * W
    assert N % grid_steps == 0, "grid_steps must divide the batch"
    n_per = N // grid_steps
    NHW = n_per * HW

    # Free contiguous reshape (no pad, no transpose) into the lane-dense layout.
    x_flat = x_nchw.reshape(N, C, HW).astype(jnp.float32)

    # Pack (w1|b1|w2|b2) into one constant: (2, C, 9*C + 1), w[co, t*C + ci].
    def wpack(w_hwio):
        return jnp.transpose(w_hwio, (3, 0, 1, 2)).reshape(C, 9 * C)

    params = jnp.stack([
        jnp.concatenate([wpack(w1_hwio), b1.reshape(C, 1)], axis=1),
        jnp.concatenate([wpack(w2_hwio), b2.reshape(C, 1)], axis=1),
    ], axis=0).astype(jnp.float32)

    # Per-tap masks, tiled per image within a grid step, pre-broadcast over C.
    masks = _tap_masks(H, W)                                     # (9, HW)
    masks = jnp.tile(masks, (1, n_per))                          # (9, NHW)
    masks = jnp.broadcast_to(masks[:, None, :], (9, C, NHW))
    masks = masks.astype(jnp.float32)

    kernel = functools.partial(_residual_block_kernel, W, HW)

    out_flat = pl.pallas_call(
        kernel,
        out_shape=jax.ShapeDtypeStruct((N, C, HW), jnp.float32),
        grid_spec=pltpu.PrefetchScalarGridSpec(
            num_scalar_prefetch=0,
            grid=(grid_steps,),
            in_specs=[
                pl.BlockSpec((n_per, C, HW), lambda g: (g, 0, 0)),        # x
                pl.BlockSpec((2, C, 9 * C + 1), lambda g: (0, 0, 0)),     # packed params
                pl.BlockSpec((9, C, NHW), lambda g: (0, 0, 0)),           # tap masks
            ],
            out_specs=pl.BlockSpec((n_per, C, HW), lambda g: (g, 0, 0)),
            scratch_shapes=[
                pltpu.VMEM((C * C, NHW + 2 * _MARGIN), jnp.float32),      # staging
            ],
        ),
        compiler_params=pltpu.CompilerParams(
            dimension_semantics=("parallel",)),
    )(x_flat, params, masks)

    return out_flat.reshape(N, C, H, W)


def _reference_nchw(x_nchw, w1, b1, w2, b2):
    x = jnp.transpose(x_nchw, (0, 2, 3, 1))
    dn = jax.lax.conv_dimension_numbers(x.shape, w1.shape, ("NHWC", "HWIO", "NHWC"))
    h = jax.lax.conv_general_dilated(x, w1, (1, 1), "SAME", dimension_numbers=dn) + b1
    h = jnp.maximum(h, 0.0)
    o = jax.lax.conv_general_dilated(h, w2, (1, 1), "SAME", dimension_numbers=dn) + b2
    return jnp.transpose(o + x, (0, 3, 1, 2))


if __name__ == "__main__":
    key = jax.random.PRNGKey(0)
    N, C, H, W = 2, 4, 16, 16
    k_x, k_w1, k_b1, k_w2, k_b2 = jax.random.split(key, 5)

    # Input (PyTorch NCHW convention)
    x_nchw = jax.random.normal(k_x, (N, C, H, W), dtype=jnp.float32)

    # Deterministic parameter init (Kaiming-uniform-ish, like nn.Conv2d default)
    fan_in = C * 3 * 3
    bound = 1.0 / np.sqrt(fan_in)
    w1 = jax.random.uniform(k_w1, (3, 3, C, C), jnp.float32, -bound, bound)
    b1 = jax.random.uniform(k_b1, (C,), jnp.float32, -bound, bound)
    w2 = jax.random.uniform(k_w2, (3, 3, C, C), jnp.float32, -bound, bound)
    b2 = jax.random.uniform(k_b2, (C,), jnp.float32, -bound, bound)

    y_ref = _reference_nchw(x_nchw, w1, b1, w2, b2)

    # Default: whole batch in one grid step (best on v5e/v6e).
    y = residual_block_nchw(x_nchw, w1, b1, w2, b2, grid_steps=1)
    y = jax.block_until_ready(y)
    assert y.shape == (N, C, H, W)
    assert jnp.allclose(y, y_ref, atol=1e-4, rtol=1e-4), "mismatch vs reference (grid_steps=1)"

    # v7x-style 2-way "parallel" split (one half-batch per TensorCore).
    y2 = residual_block_nchw(x_nchw, w1, b1, w2, b2, grid_steps=2)
    y2 = jax.block_until_ready(y2)
    assert jnp.allclose(y2, y_ref, atol=1e-4, rtol=1e-4), "mismatch vs reference (grid_steps=2)"

    print("KERNEL_OK")
</pallas_src>

<mosaic_0001>
module attributes {stable_mosaic.version = 11 : i64} {
  func.func @_residual_block_kernel(%arg0: i32, %arg1: memref<2x4x256xf32, #tpu.memory_space<vmem>>, %arg2: memref<2x4x37xf32, #tpu.memory_space<vmem>>, %arg3: memref<9x4x512xf32, #tpu.memory_space<vmem>>, %arg4: memref<2x4x256xf32, #tpu.memory_space<vmem>>, %arg5: memref<16x768xf32, #tpu.memory_space<vmem>>) attributes {dimension_semantics = [#tpu.dimension_semantics<parallel>], iteration_bounds = array<i64: 1>, scalar_prefetch = 0 : i64, scratch_operands = 1 : i64, tpu.core_type = #tpu.core_type<tc>, window_params = [{transform_indices = @transform_0, window_bounds = array<i64: 2, 4, 256>}, {pipeline_mode = #tpu.pipeline_mode<synchronous>, transform_indices = @transform_1, window_bounds = array<i64: 2, 4, 37>}, {pipeline_mode = #tpu.pipeline_mode<synchronous>, transform_indices = @transform_2, window_bounds = array<i64: 9, 4, 512>}, {transform_indices = @transform_3, window_bounds = array<i64: 2, 4, 256>}]} {
    %cst = arith.constant 0.000000e+00 : f32
    %0 = vector.broadcast %cst : f32 to vector<16x128xf32>
    %c0 = arith.constant 0 : index
    %c0_0 = arith.constant 0 : index
    %1 = vector.load %arg5[%c0, %c0_0] : memref<16x768xf32, #tpu.memory_space<vmem>>, vector<16x128xf32>
    tpu.vector_store %arg5[%c0, %c0_0], %0 {strides = array<i32>} : memref<16x768xf32, #tpu.memory_space<vmem>>, vector<16x128xf32>,
    %c0_1 = arith.constant 0 : index
    %c640 = arith.constant 640 : index
    %2 = vector.load %arg5[%c0_1, %c640] : memref<16x768xf32, #tpu.memory_space<vmem>>, vector<16x128xf32>
    tpu.vector_store %arg5[%c0_1, %c640], %0 {strides = array<i32>} : memref<16x768xf32, #tpu.memory_space<vmem>>, vector<16x128xf32>,
    %c0_2 = arith.constant 0 : index
    %c0_3 = arith.constant 0 : index
    %c0_4 = arith.constant 0 : index
    %3 = vector.load %arg1[%c0_2, %c0_3, %c0_4] : memref<2x4x256xf32, #tpu.memory_space<vmem>>, vector<1x4x256xf32>
    %4 = vector.shape_cast %3 : vector<1x4x256xf32> to vector<4x256xf32>
    %5 = vector.extract_strided_slice %4 {offsets = [0, 0], sizes = [1, 256], strides = [1, 1]} : vector<4x256xf32> to vector<1x256xf32>
    %6 = vector.shape_cast %5 : vector<1x256xf32> to vector<1x256xf32>
    %7 = vector.broadcast %6 : vector<1x256xf32> to vector<4x256xf32>
    %8 = vector.extract_strided_slice %4 {offsets = [1, 0], sizes = [1, 256], strides = [1, 1]} : vector<4x256xf32> to vector<1x256xf32>
    %9 = vector.shape_cast %8 : vector<1x256xf32> to vector<1x256xf32>
    %10 = vector.broadcast %9 : vector<1x256xf32> to vector<4x256xf32>
    %11 = vector.extract_strided_slice %4 {offsets = [2, 0], sizes = [1, 256], strides = [1, 1]} : vector<4x256xf32> to vector<1x256xf32>
    %12 = vector.shape_cast %11 : vector<1x256xf32> to vector<1x256xf32>
    %13 = vector.broadcast %12 : vector<1x256xf32> to vector<4x256xf32>
    %14 = vector.extract_strided_slice %4 {offsets = [3, 0], sizes = [1, 256], strides = [1, 1]} : vector<4x256xf32> to vector<1x256xf32>
    %15 = vector.shape_cast %14 : vector<1x256xf32> to vector<1x256xf32>
    %16 = vector.broadcast %15 : vector<1x256xf32> to vector<4x256xf32>
    %17 = tpu.concatenate %7, %10, %13, %16 in 0 : vector<4x256xf32>, vector<4x256xf32>, vector<4x256xf32>, vector<4x256xf32> -> vector<16x256xf32>
    %c0_5 = arith.constant 0 : index
    %c128 = arith.constant 128 : index
    %18 = vector.load %arg5[%c0_5, %c128] : memref<16x768xf32, #tpu.memory_space<vmem>>, vector<16x256xf32>
    tpu.vector_store %arg5[%c0_5, %c128], %17 {strides = array<i32>} : memref<16x768xf32, #tpu.memory_space<vmem>>, vector<16x256xf32>,
    %c1 = arith.constant 1 : index
    %c0_6 = arith.constant 0 : index
    %c0_7 = arith.constant 0 : index
    %19 = vector.load %arg1[%c1, %c0_6, %c0_7] : memref<2x4x256xf32, #tpu.memory_space<vmem>>, vector<1x4x256xf32>
    %20 = vector.shape_cast %19 : vector<1x4x256xf32> to vector<4x256xf32>
    %21 = vector.extract_strided_slice %20 {offsets = [0, 0], sizes = [1, 256], strides = [1, 1]} : vector<4x256xf32> to vector<1x256xf32>
    %22 = vector.shape_cast %21 : vector<1x256xf32> to vector<1x256xf32>
    %23 = vector.broadcast %22 : vector<1x256xf32> to vector<4x256xf32>
    %24 = vector.extract_strided_slice %20 {offsets = [1, 0], sizes = [1, 256], strides = [1, 1]} : vector<4x256xf32> to vector<1x256xf32>
    %25 = vector.shape_cast %24 : vector<1x256xf32> to vector<1x256xf32>
    %26 = vector.broadcast %25 : vector<1x256xf32> to vector<4x256xf32>
    %27 = vector.extract_strided_slice %20 {offsets = [2, 0], sizes = [1, 256], strides = [1, 1]} : vector<4x256xf32> to vector<1x256xf32>
    %28 = vector.shape_cast %27 : vector<1x256xf32> to vector<1x256xf32>
    %29 = vector.broadcast %28 : vector<1x256xf32> to vector<4x256xf32>
    %30 = vector.extract_strided_slice %20 {offsets = [3, 0], sizes = [1, 256], strides = [1, 1]} : vector<4x256xf32> to vector<1x256xf32>
    %31 = vector.shape_cast %30 : vector<1x256xf32> to vector<1x256xf32>
    %32 = vector.broadcast %31 : vector<1x256xf32> to vector<4x256xf32>
    %33 = tpu.concatenate %23, %26, %29, %32 in 0 : vector<4x256xf32>, vector<4x256xf32>, vector<4x256xf32>, vector<4x256xf32> -> vector<16x256xf32>
    %c0_8 = arith.constant 0 : index
    %c384 = arith.constant 384 : index
    %34 = vector.load %arg5[%c0_8, %c384] : memref<16x768xf32, #tpu.memory_space<vmem>>, vector<16x256xf32>
    tpu.vector_store %arg5[%c0_8, %c384], %33 {strides = array<i32>} : memref<16x768xf32, #tpu.memory_space<vmem>>, vector<16x256xf32>,
    %c0_9 = arith.constant 0 : index
    %c0_10 = arith.constant 0 : index
    %c0_11 = arith.constant 0 : index
    %35 = vector.load %arg2[%c0_9, %c0_10, %c0_11] : memref<2x4x37xf32, #tpu.memory_space<vmem>>, vector<1x4x37xf32>
    %36 = vector.shape_cast %35 : vector<1x4x37xf32> to vector<4x37xf32>
    %37 = vector.extract_strided_slice %36 {offsets = [0, 0], sizes = [4, 36], strides = [1, 1]} : vector<4x37xf32> to vector<4x36xf32>
    %38 = vector.extract_strided_slice %36 {offsets = [0, 36], sizes = [4, 1], strides = [1, 1]} : vector<4x37xf32> to vector<4x1xf32>
    %39 = vector.shape_cast %38 : vector<4x1xf32> to vector<4x1xf32>
    %40 = vector.broadcast %39 : vector<4x1xf32> to vector<4x512xf32>
    %c0_12 = arith.constant 0 : index
    %c111 = arith.constant 111 : index
    %41 = vector.load %arg5[%c0_12, %c111] : memref<16x768xf32, #tpu.memory_space<vmem>>, vector<4x512xf32>
    %42 = vector.extract_strided_slice %37 {offsets = [0, 0], sizes = [4, 1], strides = [1, 1]} : vector<4x36xf32> to vector<4x1xf32>
    %43 = vector.broadcast %42 : vector<4x1xf32> to vector<4x512xf32>
    %44 = arith.mulf %41, %43 : vector<4x512xf32>
    %c4 = arith.constant 4 : index
    %c111_13 = arith.constant 111 : index
    %45 = vector.load %arg5[%c4, %c111_13] : memref<16x768xf32, #tpu.memory_space<vmem>>, vector<4x512xf32>
    %46 = vector.extract_strided_slice %37 {offsets = [0, 1], sizes = [4, 1], strides = [1, 1]} : vector<4x36xf32> to vector<4x1xf32>
    %47 = vector.broadcast %46 : vector<4x1xf32> to vector<4x512xf32>
    %48 = arith.mulf %45, %47 : vector<4x512xf32>
    %c8 = arith.constant 8 : index
    %c111_14 = arith.constant 111 : index
    %49 = vector.load %arg5[%c8, %c111_14] : memref<16x768xf32, #tpu.memory_space<vmem>>, vector<4x512xf32>
    %50 = vector.extract_strided_slice %37 {offsets = [0, 2], sizes = [4, 1], strides = [1, 1]} : vector<4x36xf32> to vector<4x1xf32>
    %51 = vector.broadcast %50 : vector<4x1xf32> to vector<4x512xf32>
    %52 = arith.mulf %49, %51 : vector<4x512xf32>
    %c12 = arith.constant 12 : index
    %c111_15 = arith.constant 111 : index
    %53 = vector.load %arg5[%c12, %c111_15] : memref<16x768xf32, #tpu.memory_space<vmem>>, vector<4x512xf32>
    %54 = vector.extract_strided_slice %37 {offsets = [0, 3], sizes = [4, 1], strides = [1, 1]} : vector<4x36xf32> to vector<4x1xf32>
    %55 = vector.broadcast %54 : vector<4x1xf32> to vector<4x512xf32>
    %56 = arith.mulf %53, %55 : vector<4x512xf32>
    %57 = arith.addf %44, %48 : vector<4x512xf32>
    %58 = arith.addf %52, %56 : vector<4x512xf32>
    %59 = arith.addf %57, %58 : vector<4x512xf32>
    %c0_16 = arith.constant 0 : index
    %c0_17 = arith.constant 0 : index
    %c0_18 = arith.constant 0 : index
    %60 = vector.load %arg3[%c0_16, %c0_17, %c0_18] : memref<9x4x512xf32, #tpu.memory_space<vmem>>, vector<1x4x512xf32>
    %61 = vector.shape_cast %60 : vector<1x4x512xf32> to vector<4x512xf32>
    %62 = arith.mulf %59, %61 : vector<4x512xf32>
    %c0_19 = arith.constant 0 : index
    %c112 = arith.constant 112 : index
    %63 = vector.load %arg5[%c0_19, %c112] : memref<16x768xf32, #tpu.memory_space<vmem>>, vector<4x512xf32>
    %64 = vector.extract_strided_slice %37 {offsets = [0, 4], sizes = [4, 1], strides = [1, 1]} : vector<4x36xf32> to vector<4x1xf32>
    %65 = vector.broadcast %64 : vector<4x1xf32> to vector<4x512xf32>
    %66 = arith.mulf %63, %65 : vector<4x512xf32>
    %c4_20 = arith.constant 4 : index
    %c112_21 = arith.constant 112 : index
    %67 = vector.load %arg5[%c4_20, %c112_21] : memref<16x768xf32, #tpu.memory_space<vmem>>, vector<4x512xf32>
    %68 = vector.extract_strided_slice %37 {offsets = [0, 5], sizes = [4, 1], strides = [1, 1]} : vector<4x36xf32> to vector<4x1xf32>
    %69 = vector.broadcast %68 : vector<4x1xf32> to vector<4x512xf32>
    %70 = arith.mulf %67, %69 : vector<4x512xf32>
    %c8_22 = arith.constant 8 : index
    %c112_23 = arith.constant 112 : index
    %71 = vector.load %arg5[%c8_22, %c112_23] : memref<16x768xf32, #tpu.memory_space<vmem>>, vector<4x512xf32>
    %72 = vector.extract_strided_slice %37 {offsets = [0, 6], sizes = [4, 1], strides = [1, 1]} : vector<4x36xf32> to vector<4x1xf32>
    %73 = vector.broadcast %72 : vector<4x1xf32> to vector<4x512xf32>
    %74 = arith.mulf %71, %73 : vector<4x512xf32>
    %c12_24 = arith.constant 12 : index
    %c112_25 = arith.constant 112 : index
    %75 = vector.load %arg5[%c12_24, %c112_25] : memref<16x768xf32, #tpu.memory_space<vmem>>, vector<4x512xf32>
    %76 = vector.extract_strided_slice %37 {offsets = [0, 7], sizes = [4, 1], strides = [1, 1]} : vector<4x36xf32> to vector<4x1xf32>
    %77 = vector.broadcast %76 : vector<4x1xf32> to vector<4x512xf32>
    %78 = arith.mulf %75, %77 : vector<4x512xf32>
    %79 = arith.addf %66, %70 : vector<4x512xf32>
    %80 = arith.addf %74, %78 : vector<4x512xf32>
    %81 = arith.addf %79, %80 : vector<4x512xf32>
    %c1_26 = arith.constant 1 : index
    %c0_27 = arith.constant 0 : index
    %c0_28 = arith.constant 0 : index
    %82 = vector.load %arg3[%c1_26, %c0_27, %c0_28] : memref<9x4x512xf32, #tpu.memory_space<vmem>>, vector<1x4x512xf32>
    %83 = vector.shape_cast %82 : vector<1x4x512xf32> to vector<4x512xf32>
    %84 = arith.mulf %81, %83 : vector<4x512xf32>
    %85 = arith.addf %62, %84 : vector<4x512xf32>
    %c0_29 = arith.constant 0 : index
    %c113 = arith.constant 113 : index
    %86 = vector.load %arg5[%c0_29, %c113] : memref<16x768xf32, #tpu.memory_space<vmem>>, vector<4x512xf32>
    %87 = vector.extract_strided_slice %37 {offsets = [0, 8], sizes = [4, 1], strides = [1, 1]} : vector<4x36xf32> to vector<4x1xf32>
    %88 = vector.broadcast %87 : vector<4x1xf32> to vector<4x512xf32>
    %89 = arith.mulf %86, %88 : vector<4x512xf32>
    %c4_30 = arith.constant 4 : index
    %c113_31 = arith.constant 113 : index
    %90 = vector.load %arg5[%c4_30, %c113_31] : memref<16x768xf32, #tpu.memory_space<vmem>>, vector<4x512xf32>
    %91 = vector.extract_strided_slice %37 {offsets = [0, 9], sizes = [4, 1], strides = [1, 1]} : vector<4x36xf32> to vector<4x1xf32>
    %92 = vector.broadcast %91 : vector<4x1xf32> to vector<4x512xf32>
    %93 = arith.mulf %90, %92 : vector<4x512xf32>
    %c8_32 = arith.constant 8 : index
    %c113_33 = arith.constant 113 : index
    %94 = vector.load %arg5[%c8_32, %c113_33] : memref<16x768xf32, #tpu.memory_space<vmem>>, vector<4x512xf32>
    %95 = vector.extract_strided_slice %37 {offsets = [0, 10], sizes = [4, 1], strides = [1, 1]} : vector<4x36xf32> to vector<4x1xf32>
    %96 = vector.broadcast %95 : vector<4x1xf32> to vector<4x512xf32>
    %97 = arith.mulf %94, %96 : vector<4x512xf32>
    %c12_34 = arith.constant 12 : index
    %c113_35 = arith.constant 113 : index
    %98 = vector.load %arg5[%c12_34, %c113_35] : memref<16x768xf32, #tpu.memory_space<vmem>>, vector<4x512xf32>
    %99 = vector.extract_strided_slice %37 {offsets = [0, 11], sizes = [4, 1], strides = [1, 1]} : vector<4x36xf32> to vector<4x1xf32>
    %100 = vector.broadcast %99 : vector<4x1xf32> to vector<4x512xf32>
    %101 = arith.mulf %98, %100 : vector<4x512xf32>
    %102 = arith.addf %89, %93 : vector<4x512xf32>
    %103 = arith.addf %97, %101 : vector<4x512xf32>
    %104 = arith.addf %102, %103 : vector<4x512xf32>
    %c2 = arith.constant 2 : index
    %c0_36 = arith.constant 0 : index
    %c0_37 = arith.constant 0 : index
    %105 = vector.load %arg3[%c2, %c0_36, %c0_37] : memref<9x4x512xf32, #tpu.memory_space<vmem>>, vector<1x4x512xf32>
    %106 = vector.shape_cast %105 : vector<1x4x512xf32> to vector<4x512xf32>
    %107 = arith.mulf %104, %106 : vector<4x512xf32>
    %108 = arith.addf %85, %107 : vector<4x512xf32>
    %c0_38 = arith.constant 0 : index
    %c127 = arith.constant 127 : index
    %109 = vector.load %arg5[%c0_38, %c127] : memref<16x768xf32, #tpu.memory_space<vmem>>, vector<4x512xf32>
    %110 = vector.extract_strided_slice %37 {offsets = [0, 12], sizes = [4, 1], strides = [1, 1]} : vector<4x36xf32> to vector<4x1xf32>
    %111 = vector.broadcast %110 : vector<4x1xf32> to vector<4x512xf32>
    %112 = arith.mulf %109, %111 : vector<4x512xf32>
    %c4_39 = arith.constant 4 : index
    %c127_40 = arith.constant 127 : index
    %113 = vector.load %arg5[%c4_39, %c127_40] : memref<16x768xf32, #tpu.memory_space<vmem>>, vector<4x512xf32>
    %114 = vector.extract_strided_slice %37 {offsets = [0, 13], sizes = [4, 1], strides = [1, 1]} : vector<4x36xf32> to vector<4x1xf32>
    %115 = vector.broadcast %114 : vector<4x1xf32> to vector<4x512xf32>
    %116 = arith.mulf %113, %115 : vector<4x512xf32>
    %c8_41 = arith.constant 8 : index
    %c127_42 = arith.constant 127 : index
    %117 = vector.load %arg5[%c8_41, %c127_42] : memref<16x768xf32, #tpu.memory_space<vmem>>, vector<4x512xf32>
    %118 = vector.extract_strided_slice %37 {offsets = [0, 14], sizes = [4, 1], strides = [1, 1]} : vector<4x36xf32> to vector<4x1xf32>
    %119 = vector.broadcast %118 : vector<4x1xf32> to vector<4x512xf32>
    %120 = arith.mulf %117, %119 : vector<4x512xf32>
    %c12_43 = arith.constant 12 : index
    %c127_44 = arith.constant 127 : index
    %121 = vector.load %arg5[%c12_43, %c127_44] : memref<16x768xf32, #tpu.memory_space<vmem>>, vector<4x512xf32>
    %122 = vector.extract_strided_slice %37 {offsets = [0, 15], sizes = [4, 1], strides = [1, 1]} : vector<4x36xf32> to vector<4x1xf32>
    %123 = vector.broadcast %122 : vector<4x1xf32> to vector<4x512xf32>
    %124 = arith.mulf %121, %123 : vector<4x512xf32>
    %125 = arith.addf %112, %116 : vector<4x512xf32>
    %126 = arith.addf %120, %124 : vector<4x512xf32>
    %127 = arith.addf %125, %126 : vector<4x512xf32>
    %c3 = arith.constant 3 : index
    %c0_45 = arith.constant 0 : index
    %c0_46 = arith.constant 0 : index
    %128 = vector.load %arg3[%c3, %c0_45, %c0_46] : memref<9x4x512xf32, #tpu.memory_space<vmem>>, vector<1x4x512xf32>
    %129 = vector.shape_cast %128 : vector<1x4x512xf32> to vector<4x512xf32>
    %130 = arith.mulf %127, %129 : vector<4x512xf32>
    %131 = arith.addf %40, %130 : vector<4x512xf32>
    %c0_47 = arith.constant 0 : index
    %c128_48 = arith.constant 128 : index
    %132 = vector.load %arg5[%c0_47, %c128_48] : memref<16x768xf32, #tpu.memory_space<vmem>>, vector<4x512xf32>
    %133 = vector.extract_strided_slice %37 {offsets = [0, 16], sizes = [4, 1], strides = [1, 1]} : vector<4x36xf32> to vector<4x1xf32>
    %134 = vector.broadcast %133 : vector<4x1xf32> to vector<4x512xf32>
    %135 = arith.mulf %132, %134 : vector<4x512xf32>
    %c4_49 = arith.constant 4 : index
    %c128_50 = arith.constant 128 : index
    %136 = vector.load %arg5[%c4_49, %c128_50] : memref<16x768xf32, #tpu.memory_space<vmem>>, vector<4x512xf32>
    %137 = vector.extract_strided_slice %37 {offsets = [0, 17], sizes = [4, 1], strides = [1, 1]} : vector<4x36xf32> to vector<4x1xf32>
    %138 = vector.broadcast %137 : vector<4x1xf32> to vector<4x512xf32>
    %139 = arith.mulf %136, %138 : vector<4x512xf32>
    %c8_51 = arith.constant 8 : index
    %c128_52 = arith.constant 128 : index
    %140 = vector.load %arg5[%c8_51, %c128_52] : memref<16x768xf32, #tpu.memory_space<vmem>>, vector<4x512xf32>
    %141 = vector.extract_strided_slice %37 {offsets = [0, 18], sizes = [4, 1], strides = [1, 1]} : vector<4x36xf32> to vector<4x1xf32>
    %142 = vector.broadcast %141 : vector<4x1xf32> to vector<4x512xf32>
    %143 = arith.mulf %140, %142 : vector<4x512xf32>
    %c12_53 = arith.constant 12 : index
    %c128_54 = arith.constant 128 : index
    %144 = vector.load %arg5[%c12_53, %c128_54] : memref<16x768xf32, #tpu.memory_space<vmem>>, vector<4x512xf32>
    %145 = vector.extract_strided_slice %37 {offsets = [0, 19], sizes = [4, 1], strides = [1, 1]} : vector<4x36xf32> to vector<4x1xf32>
    %146 = vector.broadcast %145 : vector<4x1xf32> to vector<4x512xf32>
    %147 = arith.mulf %144, %146 : vector<4x512xf32>
    %148 = arith.addf %135, %139 : vector<4x512xf32>
    %149 = arith.addf %143, %147 : vector<4x512xf32>
    %150 = arith.addf %148, %149 : vector<4x512xf32>
    %151 = arith.addf %131, %150 : vector<4x512xf32>
    %c0_55 = arith.constant 0 : index
    %c129 = arith.constant 129 : index
    %152 = vector.load %arg5[%c0_55, %c129] : memref<16x768xf32, #tpu.memory_space<vmem>>, vector<4x512xf32>
    %153 = vector.extract_strided_slice %37 {offsets = [0, 20], sizes = [4, 1], strides = [1, 1]} : vector<4x36xf32> to vector<4x1xf32>
    %154 = vector.broadcast %153 : vector<4x1xf32> to vector<4x512xf32>
    %155 = arith.mulf %152, %154 : vector<4x512xf32>
    %c4_56 = arith.constant 4 : index
    %c129_57 = arith.constant 129 : index
    %156 = vector.load %arg5[%c4_56, %c129_57] : memref<16x768xf32, #tpu.memory_space<vmem>>, vector<4x512xf32>
    %157 = vector.extract_strided_slice %37 {offsets = [0, 21], sizes = [4, 1], strides = [1, 1]} : vector<4x36xf32> to vector<4x1xf32>
    %158 = vector.broadcast %157 : vector<4x1xf32> to vector<4x512xf32>
    %159 = arith.mulf %156, %158 : vector<4x512xf32>
    %c8_58 = arith.constant 8 : index
    %c129_59 = arith.constant 129 : index
    %160 = vector.load %arg5[%c8_58, %c129_59] : memref<16x768xf32, #tpu.memory_space<vmem>>, vector<4x512xf32>
    %161 = vector.extract_strided_slice %37 {offsets = [0, 22], sizes = [4, 1], strides = [1, 1]} : vector<4x36xf32> to vector<4x1xf32>
    %162 = vector.broadcast %161 : vector<4x1xf32> to vector<4x512xf32>
    %163 = arith.mulf %160, %162 : vector<4x512xf32>
    %c12_60 = arith.constant 12 : index
    %c129_61 = arith.constant 129 : index
    %164 = vector.load %arg5[%c12_60, %c129_61] : memref<16x768xf32, #tpu.memory_space<vmem>>, vector<4x512xf32>
    %165 = vector.extract_strided_slice %37 {offsets = [0, 23], sizes = [4, 1], strides = [1, 1]} : vector<4x36xf32> to vector<4x1xf32>
    %166 = vector.broadcast %165 : vector<4x1xf32> to vector<4x512xf32>
    %167 = arith.mulf %164, %166 : vector<4x512xf32>
    %168 = arith.addf %155, %159 : vector<4x512xf32>
    %169 = arith.addf %163, %167 : vector<4x512xf32>
    %170 = arith.addf %168, %169 : vector<4x512xf32>
    %c5 = arith.constant 5 : index
    %c0_62 = arith.constant 0 : index
    %c0_63 = arith.constant 0 : index
    %171 = vector.load %arg3[%c5, %c0_62, %c0_63] : memref<9x4x512xf32, #tpu.memory_space<vmem>>, vector<1x4x512xf32>
    %172 = vector.shape_cast %171 : vector<1x4x512xf32> to vector<4x512xf32>
    %173 = arith.mulf %170, %172 : vector<4x512xf32>
    %174 = arith.addf %151, %173 : vector<4x512xf32>
    %c0_64 = arith.constant 0 : index
    %c143 = arith.constant 143 : index
    %175 = vector.load %arg5[%c0_64, %c143] : memref<16x768xf32, #tpu.memory_space<vmem>>, vector<4x512xf32>
    %176 = vector.extract_strided_slice %37 {offsets = [0, 24], sizes = [4, 1], strides = [1, 1]} : vector<4x36xf32> to vector<4x1xf32>
    %177 = vector.broadcast %176 : vector<4x1xf32> to vector<4x512xf32>
    %178 = arith.mulf %175, %177 : vector<4x512xf32>
    %c4_65 = arith.constant 4 : index
    %c143_66 = arith.constant 143 : index
    %179 = vector.load %arg5[%c4_65, %c143_66] : memref<16x768xf32, #tpu.memory_space<vmem>>, vector<4x512xf32>
    %180 = vector.extract_strided_slice %37 {offsets = [0, 25], sizes = [4, 1], strides = [1, 1]} : vector<4x36xf32> to vector<4x1xf32>
    %181 = vector.broadcast %180 : vector<4x1xf32> to vector<4x512xf32>
    %182 = arith.mulf %179, %181 : vector<4x512xf32>
    %c8_67 = arith.constant 8 : index
    %c143_68 = arith.constant 143 : index
    %183 = vector.load %arg5[%c8_67, %c143_68] : memref<16x768xf32, #tpu.memory_space<vmem>>, vector<4x512xf32>
    %184 = vector.extract_strided_slice %37 {offsets = [0, 26], sizes = [4, 1], strides = [1, 1]} : vector<4x36xf32> to vector<4x1xf32>
    %185 = vector.broadcast %184 : vector<4x1xf32> to vector<4x512xf32>
    %186 = arith.mulf %183, %185 : vector<4x512xf32>
    %c12_69 = arith.constant 12 : index
    %c143_70 = arith.constant 143 : index
    %187 = vector.load %arg5[%c12_69, %c143_70] : memref<16x768xf32, #tpu.memory_space<vmem>>, vector<4x512xf32>
    %188 = vector.extract_strided_slice %37 {offsets = [0, 27], sizes = [4, 1], strides = [1, 1]} : vector<4x36xf32> to vector<4x1xf32>
    %189 = vector.broadcast %188 : vector<4x1xf32> to vector<4x512xf32>
    %190 = arith.mulf %187, %189 : vector<4x512xf32>
    %191 = arith.addf %178, %182 : vector<4x512xf32>
    %192 = arith.addf %186, %190 : vector<4x512xf32>
    %193 = arith.addf %191, %192 : vector<4x512xf32>
    %c6 = arith.constant 6 : index
    %c0_71 = arith.constant 0 : index
    %c0_72 = arith.constant 0 : index
    %194 = vector.load %arg3[%c6, %c0_71, %c0_72] : memref<9x4x512xf32, #tpu.memory_space<vmem>>, vector<1x4x512xf32>
    %195 = vector.shape_cast %194 : vector<1x4x512xf32> to vector<4x512xf32>
    %196 = arith.mulf %193, %195 : vector<4x512xf32>
    %c0_73 = arith.constant 0 : index
    %c144 = arith.constant 144 : index
    %197 = vector.load %arg5[%c0_73, %c144] : memref<16x768xf32, #tpu.memory_space<vmem>>, vector<4x512xf32>
    %198 = vector.extract_strided_slice %37 {offsets = [0, 28], sizes = [4, 1], strides = [1, 1]} : vector<4x36xf32> to vector<4x1xf32>
    %199 = vector.broadcast %198 : vector<4x1xf32> to vector<4x512xf32>
    %200 = arith.mulf %197, %199 : vector<4x512xf32>
    %c4_74 = arith.constant 4 : index
    %c144_75 = arith.constant 144 : index
    %201 = vector.load %arg5[%c4_74, %c144_75] : memref<16x768xf32, #tpu.memory_space<vmem>>, vector<4x512xf32>
    %202 = vector.extract_strided_slice %37 {offsets = [0, 29], sizes = [4, 1], strides = [1, 1]} : vector<4x36xf32> to vector<4x1xf32>
    %203 = vector.broadcast %202 : vector<4x1xf32> to vector<4x512xf32>
    %204 = arith.mulf %201, %203 : vector<4x512xf32>
    %c8_76 = arith.constant 8 : index
    %c144_77 = arith.constant 144 : index
    %205 = vector.load %arg5[%c8_76, %c144_77] : memref<16x768xf32, #tpu.memory_space<vmem>>, vector<4x512xf32>
    %206 = vector.extract_strided_slice %37 {offsets = [0, 30], sizes = [4, 1], strides = [1, 1]} : vector<4x36xf32> to vector<4x1xf32>
    %207 = vector.broadcast %206 : vector<4x1xf32> to vector<4x512xf32>
    %208 = arith.mulf %205, %207 : vector<4x512xf32>
    %c12_78 = arith.constant 12 : index
    %c144_79 = arith.constant 144 : index
    %209 = vector.load %arg5[%c12_78, %c144_79] : memref<16x768xf32, #tpu.memory_space<vmem>>, vector<4x512xf32>
    %210 = vector.extract_strided_slice %37 {offsets = [0, 31], sizes = [4, 1], strides = [1, 1]} : vector<4x36xf32> to vector<4x1xf32>
    %211 = vector.broadcast %210 : vector<4x1xf32> to vector<4x512xf32>
    %212 = arith.mulf %209, %211 : vector<4x512xf32>
    %213 = arith.addf %200, %204 : vector<4x512xf32>
    %214 = arith.addf %208, %212 : vector<4x512xf32>
    %215 = arith.addf %213, %214 : vector<4x512xf32>
    %c7 = arith.constant 7 : index
    %c0_80 = arith.constant 0 : index
    %c0_81 = arith.constant 0 : index
    %216 = vector.load %arg3[%c7, %c0_80, %c0_81] : memref<9x4x512xf32, #tpu.memory_space<vmem>>, vector<1x4x512xf32>
    %217 = vector.shape_cast %216 : vector<1x4x512xf32> to vector<4x512xf32>
    %218 = arith.mulf %215, %217 : vector<4x512xf32>
    %219 = arith.addf %196, %218 : vector<4x512xf32>
    %c0_82 = arith.constant 0 : index
    %c145 = arith.constant 145 : index
    %220 = vector.load %arg5[%c0_82, %c145] : memref<16x768xf32, #tpu.memory_space<vmem>>, vector<4x512xf32>
    %221 = vector.extract_strided_slice %37 {offsets = [0, 32], sizes = [4, 1], strides = [1, 1]} : vector<4x36xf32> to vector<4x1xf32>
    %222 = vector.broadcast %221 : vector<4x1xf32> to vector<4x512xf32>
    %223 = arith.mulf %220, %222 : vector<4x512xf32>
    %c4_83 = arith.constant 4 : index
    %c145_84 = arith.constant 145 : index
    %224 = vector.load %arg5[%c4_83, %c145_84] : memref<16x768xf32, #tpu.memory_space<vmem>>, vector<4x512xf32>
    %225 = vector.extract_strided_slice %37 {offsets = [0, 33], sizes = [4, 1], strides = [1, 1]} : vector<4x36xf32> to vector<4x1xf32>
    %226 = vector.broadcast %225 : vector<4x1xf32> to vector<4x512xf32>
    %227 = arith.mulf %224, %226 : vector<4x512xf32>
    %c8_85 = arith.constant 8 : index
    %c145_86 = arith.constant 145 : index
    %228 = vector.load %arg5[%c8_85, %c145_86] : memref<16x768xf32, #tpu.memory_space<vmem>>, vector<4x512xf32>
    %229 = vector.extract_strided_slice %37 {offsets = [0, 34], sizes = [4, 1], strides = [1, 1]} : vector<4x36xf32> to vector<4x1xf32>
    %230 = vector.broadcast %229 : vector<4x1xf32> to vector<4x512xf32>
    %231 = arith.mulf %228, %230 : vector<4x512xf32>
    %c12_87 = arith.constant 12 : index
    %c145_88 = arith.constant 145 : index
    %232 = vector.load %arg5[%c12_87, %c145_88] : memref<16x768xf32, #tpu.memory_space<vmem>>, vector<4x512xf32>
    %233 = vector.extract_strided_slice %37 {offsets = [0, 35], sizes = [4, 1], strides = [1, 1]} : vector<4x36xf32> to vector<4x1xf32>
    %234 = vector.broadcast %233 : vector<4x1xf32> to vector<4x512xf32>
    %235 = arith.mulf %232, %234 : vector<4x512xf32>
    %236 = arith.addf %223, %227 : vector<4x512xf32>
    %237 = arith.addf %231, %235 : vector<4x512xf32>
    %238 = arith.addf %236, %237 : vector<4x512xf32>
    %c8_89 = arith.constant 8 : index
    %c0_90 = arith.constant 0 : index
    %c0_91 = arith.constant 0 : index
    %239 = vector.load %arg3[%c8_89, %c0_90, %c0_91] : memref<9x4x512xf32, #tpu.memory_space<vmem>>, vector<1x4x512xf32>
    %240 = vector.shape_cast %239 : vector<1x4x512xf32> to vector<4x512xf32>
    %241 = arith.mulf %238, %240 : vector<4x512xf32>
    %242 = arith.addf %219, %241 : vector<4x512xf32>
    %243 = arith.addf %108, %174 : vector<4x512xf32>
    %244 = arith.addf %243, %242 : vector<4x512xf32>
    %cst_92 = arith.constant 0.000000e+00 : f32
    %245 = vector.broadcast %cst_92 : f32 to vector<4x512xf32>
    %246 = arith.maximumf %244, %245 : vector<4x512xf32>
    %247 = vector.extract_strided_slice %246 {offsets = [0, 0], sizes = [1, 512], strides = [1, 1]} : vector<4x512xf32> to vector<1x512xf32>
    %248 = vector.shape_cast %247 : vector<1x512xf32> to vector<1x512xf32>
    %249 = vector.broadcast %248 : vector<1x512xf32> to vector<4x512xf32>
    %250 = vector.extract_strided_slice %246 {offsets = [1, 0], sizes = [1, 512], strides = [1, 1]} : vector<4x512xf32> to vector<1x512xf32>
    %251 = vector.shape_cast %250 : vector<1x512xf32> to vector<1x512xf32>
    %252 = vector.broadcast %251 : vector<1x512xf32> to vector<4x512xf32>
    %253 = vector.extract_strided_slice %246 {offsets = [2, 0], sizes = [1, 512], strides = [1, 1]} : vector<4x512xf32> to vector<1x512xf32>
    %254 = vector.shape_cast %253 : vector<1x512xf32> to vector<1x512xf32>
    %255 = vector.broadcast %254 : vector<1x512xf32> to vector<4x512xf32>
    %256 = vector.extract_strided_slice %246 {offsets = [3, 0], sizes = [1, 512], strides = [1, 1]} : vector<4x512xf32> to vector<1x512xf32>
    %257 = vector.shape_cast %256 : vector<1x512xf32> to vector<1x512xf32>
    %258 = vector.broadcast %257 : vector<1x512xf32> to vector<4x512xf32>
    %259 = tpu.concatenate %249, %252, %255, %258 in 0 : vector<4x512xf32>, vector<4x512xf32>, vector<4x512xf32>, vector<4x512xf32> -> vector<16x512xf32>
    %c0_93 = arith.constant 0 : index
    %c128_94 = arith.constant 128 : index
    %260 = vector.load %arg5[%c0_93, %c128_94] : memref<16x768xf32, #tpu.memory_space<vmem>>, vector<16x512xf32>
    tpu.vector_store %arg5[%c0_93, %c128_94], %259 {strides = array<i32>} : memref<16x768xf32, #tpu.memory_space<vmem>>, vector<16x512xf32>,
    %c1_95 = arith.constant 1 : index
    %c0_96 = arith.constant 0 : index
    %c0_97 = arith.constant 0 : index
    %261 = vector.load %arg2[%c1_95, %c0_96, %c0_97] : memref<2x4x37xf32, #tpu.memory_space<vmem>>, vector<1x4x37xf32>
    %262 = vector.shape_cast %261 : vector<1x4x37xf32> to vector<4x37xf32>
    %263 = vector.extract_strided_slice %262 {offsets = [0, 0], sizes = [4, 36], strides = [1, 1]} : vector<4x37xf32> to vector<4x36xf32>
    %264 = vector.extract_strided_slice %262 {offsets = [0, 36], sizes = [4, 1], strides = [1, 1]} : vector<4x37xf32> to vector<4x1xf32>
    %265 = vector.shape_cast %264 : vector<4x1xf32> to vector<4x1xf32>
    %266 = vector.broadcast %265 : vector<4x1xf32> to vector<4x512xf32>
    %c0_98 = arith.constant 0 : index
    %c111_99 = arith.constant 111 : index
    %267 = vector.load %arg5[%c0_98, %c111_99] : memref<16x768xf32, #tpu.memory_space<vmem>>, vector<4x512xf32>
    %268 = vector.extract_strided_slice %263 {offsets = [0, 0], sizes = [4, 1], strides = [1, 1]} : vector<4x36xf32> to vector<4x1xf32>
    %269 = vector.broadcast %268 : vector<4x1xf32> to vector<4x512xf32>
    %270 = arith.mulf %267, %269 : vector<4x512xf32>
    %c4_100 = arith.constant 4 : index
    %c111_101 = arith.constant 111 : index
    %271 = vector.load %arg5[%c4_100, %c111_101] : memref<16x768xf32, #tpu.memory_space<vmem>>, vector<4x512xf32>
    %272 = vector.extract_strided_slice %263 {offsets = [0, 1], sizes = [4, 1], strides = [1, 1]} : vector<4x36xf32> to vector<4x1xf32>
    %273 = vector.broadcast %272 : vector<4x1xf32> to vector<4x512xf32>
    %274 = arith.mulf %271, %273 : vector<4x512xf32>
    %c8_102 = arith.constant 8 : index
    %c111_103 = arith.constant 111 : index
    %275 = vector.load %arg5[%c8_102, %c111_103] : memref<16x768xf32, #tpu.memory_space<vmem>>, vector<4x512xf32>
    %276 = vector.extract_strided_slice %263 {offsets = [0, 2], sizes = [4, 1], strides = [1, 1]} : vector<4x36xf32> to vector<4x1xf32>
    %277 = vector.broadcast %276 : vector<4x1xf32> to vector<4x512xf32>
    %278 = arith.mulf %275, %277 : vector<4x512xf32>
    %c12_104 = arith.constant 12 : index
    %c111_105 = arith.constant 111 : index
    %279 = vector.load %arg5[%c12_104, %c111_105] : memref<16x768xf32, #tpu.memory_space<vmem>>, vector<4x512xf32>
    %280 = vector.extract_strided_slice %263 {offsets = [0, 3], sizes = [4, 1], strides = [1, 1]} : vector<4x36xf32> to vector<4x1xf32>
    %281 = vector.broadcast %280 : vector<4x1xf32> to vector<4x512xf32>
    %282 = arith.mulf %279, %281 : vector<4x512xf32>
    %283 = arith.addf %270, %274 : vector<4x512xf32>
    %284 = arith.addf %278, %282 : vector<4x512xf32>
    %285 = arith.addf %283, %284 : vector<4x512xf32>
    %c0_106 = arith.constant 0 : index
    %c0_107 = arith.constant 0 : index
    %c0_108 = arith.constant 0 : index
    %286 = vector.load %arg3[%c0_106, %c0_107, %c0_108] : memref<9x4x512xf32, #tpu.memory_space<vmem>>, vector<1x4x512xf32>
    %287 = vector.shape_cast %286 : vector<1x4x512xf32> to vector<4x512xf32>
    %288 = arith.mulf %285, %287 : vector<4x512xf32>
    %c0_109 = arith.constant 0 : index
    %c112_110 = arith.constant 112 : index
    %289 = vector.load %arg5[%c0_109, %c112_110] : memref<16x768xf32, #tpu.memory_space<vmem>>, vector<4x512xf32>
    %290 = vector.extract_strided_slice %263 {offsets = [0, 4], sizes = [4, 1], strides = [1, 1]} : vector<4x36xf32> to vector<4x1xf32>
    %291 = vector.broadcast %290 : vector<4x1xf32> to vector<4x512xf32>
    %292 = arith.mulf %289, %291 : vector<4x512xf32>
    %c4_111 = arith.constant 4 : index
    %c112_112 = arith.constant 112 : index
    %293 = vector.load %arg5[%c4_111, %c112_112] : memref<16x768xf32, #tpu.memory_space<vmem>>, vector<4x512xf32>
    %294 = vector.extract_strided_slice %263 {offsets = [0, 5], sizes = [4, 1], strides = [1, 1]} : vector<4x36xf32> to vector<4x1xf32>
    %295 = vector.broadcast %294 : vector<4x1xf32> to vector<4x512xf32>
    %296 = arith.mulf %293, %295 : vector<4x512xf32>
    %c8_113 = arith.constant 8 : index
    %c112_114 = arith.constant 112 : index
    %297 = vector.load %arg5[%c8_113, %c112_114] : memref<16x768xf32, #tpu.memory_space<vmem>>, vector<4x512xf32>
    %298 = vector.extract_strided_slice %263 {offsets = [0, 6], sizes = [4, 1], strides = [1, 1]} : vector<4x36xf32> to vector<4x1xf32>
    %299 = vector.broadcast %298 : vector<4x1xf32> to vector<4x512xf32>
    %300 = arith.mulf %297, %299 : vector<4x512xf32>
    %c12_115 = arith.constant 12 : index
    %c112_116 = arith.constant 112 : index
    %301 = vector.load %arg5[%c12_115, %c112_116] : memref<16x768xf32, #tpu.memory_space<vmem>>, vector<4x512xf32>
    %302 = vector.extract_strided_slice %263 {offsets = [0, 7], sizes = [4, 1], strides = [1, 1]} : vector<4x36xf32> to vector<4x1xf32>
    %303 = vector.broadcast %302 : vector<4x1xf32> to vector<4x512xf32>
    %304 = arith.mulf %301, %303 : vector<4x512xf32>
    %305 = arith.addf %292, %296 : vector<4x512xf32>
    %306 = arith.addf %300, %304 : vector<4x512xf32>
    %307 = arith.addf %305, %306 : vector<4x512xf32>
    %c1_117 = arith.constant 1 : index
    %c0_118 = arith.constant 0 : index
    %c0_119 = arith.constant 0 : index
    %308 = vector.load %arg3[%c1_117, %c0_118, %c0_119] : memref<9x4x512xf32, #tpu.memory_space<vmem>>, vector<1x4x512xf32>
    %309 = vector.shape_cast %308 : vector<1x4x512xf32> to vector<4x512xf32>
    %310 = arith.mulf %307, %309 : vector<4x512xf32>
    %311 = arith.addf %288, %310 : vector<4x512xf32>
    %c0_120 = arith.constant 0 : index
    %c113_121 = arith.constant 113 : index
    %312 = vector.load %arg5[%c0_120, %c113_121] : memref<16x768xf32, #tpu.memory_space<vmem>>, vector<4x512xf32>
    %313 = vector.extract_strided_slice %263 {offsets = [0, 8], sizes = [4, 1], strides = [1, 1]} : vector<4x36xf32> to vector<4x1xf32>
    %314 = vector.broadcast %313 : vector<4x1xf32> to vector<4x512xf32>
    %315 = arith.mulf %312, %314 : vector<4x512xf32>
    %c4_122 = arith.constant 4 : index
    %c113_123 = arith.constant 113 : index
    %316 = vector.load %arg5[%c4_122, %c113_123] : memref<16x768xf32, #tpu.memory_space<vmem>>, vector<4x512xf32>
    %317 = vector.extract_strided_slice %263 {offsets = [0, 9], sizes = [4, 1], strides = [1, 1]} : vector<4x36xf32> to vector<4x1xf32>
    %318 = vector.broadcast %317 : vector<4x1xf32> to vector<4x512xf32>
    %319 = arith.mulf %316, %318 : vector<4x512xf32>
    %c8_124 = arith.constant 8 : index
    %c113_125 = arith.constant 113 : index
    %320 = vector.load %arg5[%c8_124, %c113_125] : memref<16x768xf32, #tpu.memory_space<vmem>>, vector<4x512xf32>
    %321 = vector.extract_strided_slice %263 {offsets = [0, 10], sizes = [4, 1], strides = [1, 1]} : vector<4x36xf32> to vector<4x1xf32>
    %322 = vector.broadcast %321 : vector<4x1xf32> to vector<4x512xf32>
    %323 = arith.mulf %320, %322 : vector<4x512xf32>
    %c12_126 = arith.constant 12 : index
    %c113_127 = arith.constant 113 : index
    %324 = vector.load %arg5[%c12_126, %c113_127] : memref<16x768xf32, #tpu.memory_space<vmem>>, vector<4x512xf32>
    %325 = vector.extract_strided_slice %263 {offsets = [0, 11], sizes = [4, 1], strides = [1, 1]} : vector<4x36xf32> to vector<4x1xf32>
    %326 = vector.broadcast %325 : vector<4x1xf32> to vector<4x512xf32>
    %327 = arith.mulf %324, %326 : vector<4x512xf32>
    %328 = arith.addf %315, %319 : vector<4x512xf32>
    %329 = arith.addf %323, %327 : vector<4x512xf32>
    %330 = arith.addf %328, %329 : vector<4x512xf32>
    %c2_128 = arith.constant 2 : index
    %c0_129 = arith.constant 0 : index
    %c0_130 = arith.constant 0 : index
    %331 = vector.load %arg3[%c2_128, %c0_129, %c0_130] : memref<9x4x512xf32, #tpu.memory_space<vmem>>, vector<1x4x512xf32>
    %332 = vector.shape_cast %331 : vector<1x4x512xf32> to vector<4x512xf32>
    %333 = arith.mulf %330, %332 : vector<4x512xf32>
    %334 = arith.addf %311, %333 : vector<4x512xf32>
    %c0_131 = arith.constant 0 : index
    %c127_132 = arith.constant 127 : index
    %335 = vector.load %arg5[%c0_131, %c127_132] : memref<16x768xf32, #tpu.memory_space<vmem>>, vector<4x512xf32>
    %336 = vector.extract_strided_slice %263 {offsets = [0, 12], sizes = [4, 1], strides = [1, 1]} : vector<4x36xf32> to vector<4x1xf32>
    %337 = vector.broadcast %336 : vector<4x1xf32> to vector<4x512xf32>
    %338 = arith.mulf %335, %337 : vector<4x512xf32>
    %c4_133 = arith.constant 4 : index
    %c127_134 = arith.constant 127 : index
    %339 = vector.load %arg5[%c4_133, %c127_134] : memref<16x768xf32, #tpu.memory_space<vmem>>, vector<4x512xf32>
    %340 = vector.extract_strided_slice %263 {offsets = [0, 13], sizes = [4, 1], strides = [1, 1]} : vector<4x36xf32> to vector<4x1xf32>
    %341 = vector.broadcast %340 : vector<4x1xf32> to vector<4x512xf32>
    %342 = arith.mulf %339, %341 : vector<4x512xf32>
    %c8_135 = arith.constant 8 : index
    %c127_136 = arith.constant 127 : index
    %343 = vector.load %arg5[%c8_135, %c127_136] : memref<16x768xf32, #tpu.memory_space<vmem>>, vector<4x512xf32>
    %344 = vector.extract_strided_slice %263 {offsets = [0, 14], sizes = [4, 1], strides = [1, 1]} : vector<4x36xf32> to vector<4x1xf32>
    %345 = vector.broadcast %344 : vector<4x1xf32> to vector<4x512xf32>
    %346 = arith.mulf %343, %345 : vector<4x512xf32>
    %c12_137 = arith.constant 12 : index
    %c127_138 = arith.constant 127 : index
    %347 = vector.load %arg5[%c12_137, %c127_138] : memref<16x768xf32, #tpu.memory_space<vmem>>, vector<4x512xf32>
    %348 = vector.extract_strided_slice %263 {offsets = [0, 15], sizes = [4, 1], strides = [1, 1]} : vector<4x36xf32> to vector<4x1xf32>
    %349 = vector.broadcast %348 : vector<4x1xf32> to vector<4x512xf32>
    %350 = arith.mulf %347, %349 : vector<4x512xf32>
    %351 = arith.addf %338, %342 : vector<4x512xf32>
    %352 = arith.addf %346, %350 : vector<4x512xf32>
    %353 = arith.addf %351, %352 : vector<4x512xf32>
    %c3_139 = arith.constant 3 : index
    %c0_140 = arith.constant 0 : index
    %c0_141 = arith.constant 0 : index
    %354 = vector.load %arg3[%c3_139, %c0_140, %c0_141] : memref<9x4x512xf32, #tpu.memory_space<vmem>>, vector<1x4x512xf32>
    %355 = vector.shape_cast %354 : vector<1x4x512xf32> to vector<4x512xf32>
    %356 = arith.mulf %353, %355 : vector<4x512xf32>
    %357 = arith.addf %266, %356 : vector<4x512xf32>
    %c0_142 = arith.constant 0 : index
    %c128_143 = arith.constant 128 : index
    %358 = vector.load %arg5[%c0_142, %c128_143] : memref<16x768xf32, #tpu.memory_space<vmem>>, vector<4x512xf32>
    %359 = vector.extract_strided_slice %263 {offsets = [0, 16], sizes = [4, 1], strides = [1, 1]} : vector<4x36xf32> to vector<4x1xf32>
    %360 = vector.broadcast %359 : vector<4x1xf32> to vector<4x512xf32>
    %361 = arith.mulf %358, %360 : vector<4x512xf32>
    %c4_144 = arith.constant 4 : index
    %c128_145 = arith.constant 128 : index
    %362 = vector.load %arg5[%c4_144, %c128_145] : memref<16x768xf32, #tpu.memory_space<vmem>>, vector<4x512xf32>
    %363 = vector.extract_strided_slice %263 {offsets = [0, 17], sizes = [4, 1], strides = [1, 1]} : vector<4x36xf32> to vector<4x1xf32>
    %364 = vector.broadcast %363 : vector<4x1xf32> to vector<4x512xf32>
    %365 = arith.mulf %362, %364 : vector<4x512xf32>
    %c8_146 = arith.constant 8 : index
    %c128_147 = arith.constant 128 : index
    %366 = vector.load %arg5[%c8_146, %c128_147] : memref<16x768xf32, #tpu.memory_space<vmem>>, vector<4x512xf32>
    %367 = vector.extract_strided_slice %263 {offsets = [0, 18], sizes = [4, 1], strides = [1, 1]} : vector<4x36xf32> to vector<4x1xf32>
    %368 = vector.broadcast %367 : vector<4x1xf32> to vector<4x512xf32>
    %369 = arith.mulf %366, %368 : vector<4x512xf32>
    %c12_148 = arith.constant 12 : index
    %c128_149 = arith.constant 128 : index
    %370 = vector.load %arg5[%c12_148, %c128_149] : memref<16x768xf32, #tpu.memory_space<vmem>>, vector<4x512xf32>
    %371 = vector.extract_strided_slice %263 {offsets = [0, 19], sizes = [4, 1], strides = [1, 1]} : vector<4x36xf32> to vector<4x1xf32>
    %372 = vector.broadcast %371 : vector<4x1xf32> to vector<4x512xf32>
    %373 = arith.mulf %370, %372 : vector<4x512xf32>
    %374 = arith.addf %361, %365 : vector<4x512xf32>
    %375 = arith.addf %369, %373 : vector<4x512xf32>
    %376 = arith.addf %374, %375 : vector<4x512xf32>
    %377 = arith.addf %357, %376 : vector<4x512xf32>
    %c0_150 = arith.constant 0 : index
    %c129_151 = arith.constant 129 : index
    %378 = vector.load %arg5[%c0_150, %c129_151] : memref<16x768xf32, #tpu.memory_space<vmem>>, vector<4x512xf32>
    %379 = vector.extract_strided_slice %263 {offsets = [0, 20], sizes = [4, 1], strides = [1, 1]} : vector<4x36xf32> to vector<4x1xf32>
    %380 = vector.broadcast %379 : vector<4x1xf32> to vector<4x512xf32>
    %381 = arith.mulf %378, %380 : vector<4x512xf32>
    %c4_152 = arith.constant 4 : index
    %c129_153 = arith.constant 129 : index
    %382 = vector.load %arg5[%c4_152, %c129_153] : memref<16x768xf32, #tpu.memory_space<vmem>>, vector<4x512xf32>
    %383 = vector.extract_strided_slice %263 {offsets = [0, 21], sizes = [4, 1], strides = [1, 1]} : vector<4x36xf32> to vector<4x1xf32>
    %384 = vector.broadcast %383 : vector<4x1xf32> to vector<4x512xf32>
    %385 = arith.mulf %382, %384 : vector<4x512xf32>
    %c8_154 = arith.constant 8 : index
    %c129_155 = arith.constant 129 : index
    %386 = vector.load %arg5[%c8_154, %c129_155] : memref<16x768xf32, #tpu.memory_space<vmem>>, vector<4x512xf32>
    %387 = vector.extract_strided_slice %263 {offsets = [0, 22], sizes = [4, 1], strides = [1, 1]} : vector<4x36xf32> to vector<4x1xf32>
    %388 = vector.broadcast %387 : vector<4x1xf32> to vector<4x512xf32>
    %389 = arith.mulf %386, %388 : vector<4x512xf32>
    %c12_156 = arith.constant 12 : index
    %c129_157 = arith.constant 129 : index
    %390 = vector.load %arg5[%c12_156, %c129_157] : memref<16x768xf32, #tpu.memory_space<vmem>>, vector<4x512xf32>
    %391 = vector.extract_strided_slice %263 {offsets = [0, 23], sizes = [4, 1], strides = [1, 1]} : vector<4x36xf32> to vector<4x1xf32>
    %392 = vector.broadcast %391 : vector<4x1xf32> to vector<4x512xf32>
    %393 = arith.mulf %390, %392 : vector<4x512xf32>
    %394 = arith.addf %381, %385 : vector<4x512xf32>
    %395 = arith.addf %389, %393 : vector<4x512xf32>
    %396 = arith.addf %394, %395 : vector<4x512xf32>
    %c5_158 = arith.constant 5 : index
    %c0_159 = arith.constant 0 : index
    %c0_160 = arith.constant 0 : index
    %397 = vector.load %arg3[%c5_158, %c0_159, %c0_160] : memref<9x4x512xf32, #tpu.memory_space<vmem>>, vector<1x4x512xf32>
    %398 = vector.shape_cast %397 : vector<1x4x512xf32> to vector<4x512xf32>
    %399 = arith.mulf %396, %398 : vector<4x512xf32>
    %400 = arith.addf %377, %399 : vector<4x512xf32>
    %c0_161 = arith.constant 0 : index
    %c143_162 = arith.constant 143 : index
    %401 = vector.load %arg5[%c0_161, %c143_162] : memref<16x768xf32, #tpu.memory_space<vmem>>, vector<4x512xf32>
    %402 = vector.extract_strided_slice %263 {offsets = [0, 24], sizes = [4, 1], strides = [1, 1]} : vector<4x36xf32> to vector<4x1xf32>
    %403 = vector.broadcast %402 : vector<4x1xf32> to vector<4x512xf32>
    %404 = arith.mulf %401, %403 : vector<4x512xf32>
    %c4_163 = arith.constant 4 : index
    %c143_164 = arith.constant 143 : index
    %405 = vector.load %arg5[%c4_163, %c143_164] : memref<16x768xf32, #tpu.memory_space<vmem>>, vector<4x512xf32>
    %406 = vector.extract_strided_slice %263 {offsets = [0, 25], sizes = [4, 1], strides = [1, 1]} : vector<4x36xf32> to vector<4x1xf32>
    %407 = vector.broadcast %406 : vector<4x1xf32> to vector<4x512xf32>
    %408 = arith.mulf %405, %407 : vector<4x512xf32>
    %c8_165 = arith.constant 8 : index
    %c143_166 = arith.constant 143 : index
    %409 = vector.load %arg5[%c8_165, %c143_166] : memref<16x768xf32, #tpu.memory_space<vmem>>, vector<4x512xf32>
    %410 = vector.extract_strided_slice %263 {offsets = [0, 26], sizes = [4, 1], strides = [1, 1]} : vector<4x36xf32> to vector<4x1xf32>
    %411 = vector.broadcast %410 : vector<4x1xf32> to vector<4x512xf32>
    %412 = arith.mulf %409, %411 : vector<4x512xf32>
    %c12_167 = arith.constant 12 : index
    %c143_168 = arith.constant 143 : index
    %413 = vector.load %arg5[%c12_167, %c143_168] : memref<16x768xf32, #tpu.memory_space<vmem>>, vector<4x512xf32>
    %414 = vector.extract_strided_slice %263 {offsets = [0, 27], sizes = [4, 1], strides = [1, 1]} : vector<4x36xf32> to vector<4x1xf32>
    %415 = vector.broadcast %414 : vector<4x1xf32> to vector<4x512xf32>
    %416 = arith.mulf %413, %415 : vector<4x512xf32>
    %417 = arith.addf %404, %408 : vector<4x512xf32>
    %418 = arith.addf %412, %416 : vector<4x512xf32>
    %419 = arith.addf %417, %418 : vector<4x512xf32>
    %c6_169 = arith.constant 6 : index
    %c0_170 = arith.constant 0 : index
    %c0_171 = arith.constant 0 : index
    %420 = vector.load %arg3[%c6_169, %c0_170, %c0_171] : memref<9x4x512xf32, #tpu.memory_space<vmem>>, vector<1x4x512xf32>
    %421 = vector.shape_cast %420 : vector<1x4x512xf32> to vector<4x512xf32>
    %422 = arith.mulf %419, %421 : vector<4x512xf32>
    %c0_172 = arith.constant 0 : index
    %c144_173 = arith.constant 144 : index
    %423 = vector.load %arg5[%c0_172, %c144_173] : memref<16x768xf32, #tpu.memory_space<vmem>>, vector<4x512xf32>
    %424 = vector.extract_strided_slice %263 {offsets = [0, 28], sizes = [4, 1], strides = [1, 1]} : vector<4x36xf32> to vector<4x1xf32>
    %425 = vector.broadcast %424 : vector<4x1xf32> to vector<4x512xf32>
    %426 = arith.mulf %423, %425 : vector<4x512xf32>
    %c4_174 = arith.constant 4 : index
    %c144_175 = arith.constant 144 : index
    %427 = vector.load %arg5[%c4_174, %c144_175] : memref<16x768xf32, #tpu.memory_space<vmem>>, vector<4x512xf32>
    %428 = vector.extract_strided_slice %263 {offsets = [0, 29], sizes = [4, 1], strides = [1, 1]} : vector<4x36xf32> to vector<4x1xf32>
    %429 = vector.broadcast %428 : vector<4x1xf32> to vector<4x512xf32>
    %430 = arith.mulf %427, %429 : vector<4x512xf32>
    %c8_176 = arith.constant 8 : index
    %c144_177 = arith.constant 144 : index
    %431 = vector.load %arg5[%c8_176, %c144_177] : memref<16x768xf32, #tpu.memory_space<vmem>>, vector<4x512xf32>
    %432 = vector.extract_strided_slice %263 {offsets = [0, 30], sizes = [4, 1], strides = [1, 1]} : vector<4x36xf32> to vector<4x1xf32>
    %433 = vector.broadcast %432 : vector<4x1xf32> to vector<4x512xf32>
    %434 = arith.mulf %431, %433 : vector<4x512xf32>
    %c12_178 = arith.constant 12 : index
    %c144_179 = arith.constant 144 : index
    %435 = vector.load %arg5[%c12_178, %c144_179] : memref<16x768xf32, #tpu.memory_space<vmem>>, vector<4x512xf32>
    %436 = vector.extract_strided_slice %263 {offsets = [0, 31], sizes = [4, 1], strides = [1, 1]} : vector<4x36xf32> to vector<4x1xf32>
    %437 = vector.broadcast %436 : vector<4x1xf32> to vector<4x512xf32>
    %438 = arith.mulf %435, %437 : vector<4x512xf32>
    %439 = arith.addf %426, %430 : vector<4x512xf32>
    %440 = arith.addf %434, %438 : vector<4x512xf32>
    %441 = arith.addf %439, %440 : vector<4x512xf32>
    %c7_180 = arith.constant 7 : index
    %c0_181 = arith.constant 0 : index
    %c0_182 = arith.constant 0 : index
    %442 = vector.load %arg3[%c7_180, %c0_181, %c0_182] : memref<9x4x512xf32, #tpu.memory_space<vmem>>, vector<1x4x512xf32>
    %443 = vector.shape_cast %442 : vector<1x4x512xf32> to vector<4x512xf32>
    %444 = arith.mulf %441, %443 : vector<4x512xf32>
    %445 = arith.addf %422, %444 : vector<4x512xf32>
    %c0_183 = arith.constant 0 : index
    %c145_184 = arith.constant 145 : index
    %446 = vector.load %arg5[%c0_183, %c145_184] : memref<16x768xf32, #tpu.memory_space<vmem>>, vector<4x512xf32>
    %447 = vector.extract_strided_slice %263 {offsets = [0, 32], sizes = [4, 1], strides = [1, 1]} : vector<4x36xf32> to vector<4x1xf32>
    %448 = vector.broadcast %447 : vector<4x1xf32> to vector<4x512xf32>
    %449 = arith.mulf %446, %448 : vector<4x512xf32>
    %c4_185 = arith.constant 4 : index
    %c145_186 = arith.constant 145 : index
    %450 = vector.load %arg5[%c4_185, %c145_186] : memref<16x768xf32, #tpu.memory_space<vmem>>, vector<4x512xf32>
    %451 = vector.extract_strided_slice %263 {offsets = [0, 33], sizes = [4, 1], strides = [1, 1]} : vector<4x36xf32> to vector<4x1xf32>
    %452 = vector.broadcast %451 : vector<4x1xf32> to vector<4x512xf32>
    %453 = arith.mulf %450, %452 : vector<4x512xf32>
    %c8_187 = arith.constant 8 : index
    %c145_188 = arith.constant 145 : index
    %454 = vector.load %arg5[%c8_187, %c145_188] : memref<16x768xf32, #tpu.memory_space<vmem>>, vector<4x512xf32>
    %455 = vector.extract_strided_slice %263 {offsets = [0, 34], sizes = [4, 1], strides = [1, 1]} : vector<4x36xf32> to vector<4x1xf32>
    %456 = vector.broadcast %455 : vector<4x1xf32> to vector<4x512xf32>
    %457 = arith.mulf %454, %456 : vector<4x512xf32>
    %c12_189 = arith.constant 12 : index
    %c145_190 = arith.constant 145 : index
    %458 = vector.load %arg5[%c12_189, %c145_190] : memref<16x768xf32, #tpu.memory_space<vmem>>, vector<4x512xf32>
    %459 = vector.extract_strided_slice %263 {offsets = [0, 35], sizes = [4, 1], strides = [1, 1]} : vector<4x36xf32> to vector<4x1xf32>
    %460 = vector.broadcast %459 : vector<4x1xf32> to vector<4x512xf32>
    %461 = arith.mulf %458, %460 : vector<4x512xf32>
    %462 = arith.addf %449, %453 : vector<4x512xf32>
    %463 = arith.addf %457, %461 : vector<4x512xf32>
    %464 = arith.addf %462, %463 : vector<4x512xf32>
    %c8_191 = arith.constant 8 : index
    %c0_192 = arith.constant 0 : index
    %c0_193 = arith.constant 0 : index
    %465 = vector.load %arg3[%c8_191, %c0_192, %c0_193] : memref<9x4x512xf32, #tpu.memory_space<vmem>>, vector<1x4x512xf32>
    %466 = vector.shape_cast %465 : vector<1x4x512xf32> to vector<4x512xf32>
    %467 = arith.mulf %464, %466 : vector<4x512xf32>
    %468 = arith.addf %445, %467 : vector<4x512xf32>
    %469 = arith.addf %334, %400 : vector<4x512xf32>
    %470 = arith.addf %469, %468 : vector<4x512xf32>
    %471 = vector.extract_strided_slice %470 {offsets = [0, 0], sizes = [4, 256], strides = [1, 1]} : vector<4x512xf32> to vector<4x256xf32>
    %c0_194 = arith.constant 0 : index
    %c0_195 = arith.constant 0 : index
    %c0_196 = arith.constant 0 : index
    %472 = vector.load %arg1[%c0_194, %c0_195, %c0_196] : memref<2x4x256xf32, #tpu.memory_space<vmem>>, vector<1x4x256xf32>
    %473 = vector.shape_cast %472 : vector<1x4x256xf32> to vector<4x256xf32>
    %474 = arith.addf %471, %473 : vector<4x256xf32>
    %c0_197 = arith.constant 0 : index
    %c0_198 = arith.constant 0 : index
    %c0_199 = arith.constant 0 : index
    %475 = vector.load %arg4[%c0_197, %c0_198, %c0_199] : memref<2x4x256xf32, #tpu.memory_space<vmem>>, vector<1x4x256xf32>
    %476 = vector.shape_cast %475 : vector<1x4x256xf32> to vector<4x256xf32>
    %477 = vector.shape_cast %474 : vector<4x256xf32> to vector<1x4x256xf32>
    tpu.vector_store %arg4[%c0_197, %c0_198, %c0_199], %477 {strides = array<i32>} : memref<2x4x256xf32, #tpu.memory_space<vmem>>, vector<1x4x256xf32>,
    %478 = vector.extract_strided_slice %470 {offsets = [0, 256], sizes = [4, 256], strides = [1, 1]} : vector<4x512xf32> to vector<4x256xf32>
    %c1_200 = arith.constant 1 : index
    %c0_201 = arith.constant 0 : index
    %c0_202 = arith.constant 0 : index
    %479 = vector.load %arg1[%c1_200, %c0_201, %c0_202] : memref<2x4x256xf32, #tpu.memory_space<vmem>>, vector<1x4x256xf32>
    %480 = vector.shape_cast %479 : vector<1x4x256xf32> to vector<4x256xf32>
    %481 = arith.addf %478, %480 : vector<4x256xf32>
    %c1_203 = arith.constant 1 : index
    %c0_204 = arith.constant 0 : index
    %c0_205 = arith.constant 0 : index
    %482 = vector.load %arg4[%c1_203, %c0_204, %c0_205] : memref<2x4x256xf32, #tpu.memory_space<vmem>>, vector<1x4x256xf32>
    %483 = vector.shape_cast %482 : vector<1x4x256xf32> to vector<4x256xf32>
    %484 = vector.shape_cast %481 : vector<4x256xf32> to vector<1x4x256xf32>
    tpu.vector_store %arg4[%c1_203, %c0_204, %c0_205], %484 {strides = array<i32>} : memref<2x4x256xf32, #tpu.memory_space<vmem>>, vector<1x4x256xf32>,
    return
  }
  func.func @transform_0(%arg0: i32) -> (i32, i32, i32) {
    %c0_i32 = arith.constant 0 : i32
    %c0_i32_0 = arith.constant 0 : i32
    %c0_i32_1 = arith.constant 0 : i32
    return %arg0, %c0_i32, %c0_i32_0 : i32, i32, i32
  }
  func.func @transform_1(%arg0: i32) -> (i32, i32, i32) {
    %c0_i32 = arith.constant 0 : i32
    %c0_i32_0 = arith.constant 0 : i32
    %c0_i32_1 = arith.constant 0 : i32
    %c0_i32_2 = arith.constant 0 : i32
    return %c0_i32, %c0_i32_0, %c0_i32_1 : i32, i32, i32
  }
  func.func @transform_2(%arg0: i32) -> (i32, i32, i32) {
    %c0_i32 = arith.constant 0 : i32
    %c0_i32_0 = arith.constant 0 : i32
    %c0_i32_1 = arith.constant 0 : i32
    %c0_i32_2 = arith.constant 0 : i32
    return %c0_i32, %c0_i32_0, %c0_i32_1 : i32, i32, i32
  }
  func.func @transform_3(%arg0: i32) -> (i32, i32, i32) {
    %c0_i32 = arith.constant 0 : i32
    %c0_i32_0 = arith.constant 0 : i32
    %c0_i32_1 = arith.constant 0 : i32
    return %arg0, %c0_i32, %c0_i32_0 : i32, i32, i32
  }
}

</mosaic_0001>

<llo_original>
// kernel: tpu_custom_call.1
$region0: #{tpu_custom_call.1}
  #allocation0 [shape = 'u32[]', space=smem, size = 0x4, offset = 0x4, fixed_abs, tag = 'smem constant byte address 0x4 - core index']
  #allocation1 [shape = 'u32[144,128]{1,0:T(1,128)}', space=vmem, size = 0x12000, scoped, tag = 'internal scratch']
  #allocation2 [shape = 'f32[16,768]{1,0:T(8,128)}', space=vmem, size = 0xc000, scoped, tag = 'scratch operand']
  %s0 = inlined_call_operand.hbm [shape: f32[2,4,256], index: 0, kind: input, shape index: {}]
  %s1 = inlined_call_operand.hbm [shape: f32[2,4,37], index: 1, kind: input, shape index: {}]
  %s2 = inlined_call_operand.hbm [shape: f32[9,4,512], index: 2, kind: input, shape index: {}]
  %s3 = inlined_call_operand.hbm [shape: f32[2,4,256], index: 3, kind: output, shape index: {}]
  %s4 = sld [smem:[#allocation0]]
  $region34: #{tpu_custom_call.1} parent=0
    _
  %s6 = ssub.s32 1, %s4
  %s7 = scalar_select 0, %s6, %s4
  $region1: #{tpu_custom_call.1} parent=0
    #allocation3 [shape = 'u8[8192]{0}', space=vmem, size = 0x2000, scoped, tag = 'input window, operand 0, single buffered']
    #allocation4 [shape = 's32[1]{0}', space=sflag, size = 0x4, scoped, tag = 'scoped memory for tpu_custom_call.1']
    #allocation5 [shape = 's32[1]{0}', space=sflag, size = 0x4, scoped, tag = 'scoped memory for tpu_custom_call.1']
    #allocation6 [shape = 'u8[4096]{0}', space=vmem, size = 0x1000, scoped, tag = 'input window, operand 1, single buffered']
    #allocation7 [shape = 's32[1]{0}', space=sflag, size = 0x4, scoped, tag = 'scoped memory for tpu_custom_call.1']
    #allocation8 [shape = 'u8[73728]{0}', space=vmem, size = 0x12000, scoped, tag = 'input window, operand 2, single buffered']
    #allocation9 [shape = 'u8[8192]{0}', space=vmem, size = 0x2000, scoped, tag = 'output window, operand 0, single buffered']
    %8 = vsyncpa [#allocation4], 0
    %9 = vsyncpa [#allocation7], 0
    %10 = vsyncpa [#allocation5], 0
    // Predicated region
    $region2: #{tpu_custom_call.1} parent=1 // pred_check
      _
    $region3: #{tpu_custom_call.1} parent=1 // pred_check_branch
      %12 = sbr.rel (0) target = $region5
    $region4: #{tpu_custom_call.1} parent=1 // pred_region
      %s14 = ssub.s32 256, 256
      %15 = vsyncadd [#allocation4], %s14
      %s16 = sshll.u32 [#allocation3], 4
      %s17 = int_to_ptr.vmem [resolvable:$true] %s16
      %22 = dma.hbm_to_vmem [thread:$0]  %s0, 256, %s17, [#allocation4], 128, 128, 8
    $region5: #{tpu_custom_call.1} parent=1 // pred_fallthru
      _
    // Predicated region
    $region6: #{tpu_custom_call.1} parent=1 // pred_check
      _
    $region7: #{tpu_custom_call.1} parent=1 // pred_check_branch
      %24 = sbr.rel (0) target = $region9
    $region8: #{tpu_custom_call.1} parent=1 // pred_region
      %s26 = ssub.s32 128, 128
      %27 = vsyncadd [#allocation7], %s26
      %s28 = sshll.u32 [#allocation6], 4
      %s29 = int_to_ptr.vmem [resolvable:$true] %s28
      %34 = dma.hbm_to_vmem [thread:$0]  %s1, 128, %s29, [#allocation7], 64, 64, 4
    $region9: #{tpu_custom_call.1} parent=1 // pred_fallthru
      _
    // Predicated region
    $region10: #{tpu_custom_call.1} parent=1 // pred_check
      _
    $region11: #{tpu_custom_call.1} parent=1 // pred_check_branch
      %36 = sbr.rel (0) target = $region13
    $region12: #{tpu_custom_call.1} parent=1 // pred_region
      %s38 = ssub.s32 2304, 2304
      %39 = vsyncadd [#allocation7], %s38
      %s40 = sshll.u32 [#allocation8], 4
      %s41 = int_to_ptr.vmem [resolvable:$true] %s40
      %46 = dma.hbm_to_vmem [thread:$0]  %s2, 2304, %s41, [#allocation7], 256, 256, 16
    $region13: #{tpu_custom_call.1} parent=1 // pred_fallthru
      _
    // Predicated region
    $region14: #{tpu_custom_call.1} parent=1 // pred_check
      _
    $region15: #{tpu_custom_call.1} parent=1 // pred_check_branch
      %48 = sbr.rel (0) target = $region17
    $region16: #{tpu_custom_call.1} parent=1 // pred_region
      %49 = dma.done [#allocation4], 256
    $region17: #{tpu_custom_call.1} parent=1 // pred_fallthru
      _
    // Predicated region
    $region18: #{tpu_custom_call.1} parent=1 // pred_check
      _
    $region19: #{tpu_custom_call.1} parent=1 // pred_check_branch
      %51 = sbr.rel (0) target = $region21
    $region20: #{tpu_custom_call.1} parent=1 // pred_region
      %52 = dma.done [#allocation7], 128
    $region21: #{tpu_custom_call.1} parent=1 // pred_fallthru
      _
    // Predicated region
    $region22: #{tpu_custom_call.1} parent=1 // pred_check
      _
    $region23: #{tpu_custom_call.1} parent=1 // pred_check_branch
      %54 = sbr.rel (0) target = $region25
    $region24: #{tpu_custom_call.1} parent=1 // pred_region
      %55 = dma.done [#allocation7], 2304
    $region25: #{tpu_custom_call.1} parent=1 // pred_fallthru
      _
    %56 = vst [vmem:[#allocation2] sm:$0xff] 0.0
    %57 = vst [vmem:[#allocation2 + $0x30] sm:$0xff] 0.0
    %58 = vst [vmem:[#allocation2 + $0x28] sm:$0xff] 0.0
    %59 = vst [vmem:[#allocation2 + $0x58] sm:$0xff] 0.0
    %v60 = vld [vmem:[#allocation3] sm:$0xff]
    %v62 = vlaneseq
    %v63 = vshrl.u32 %v62, 7
    %v64 = vsub.s32 0, %v63
    %v65 = vrot.slane %v60, %v64
    %v66 = vlaneseq
    %v67 = vshrl.u32 %v66, 7
    %v68 = vsub.s32 4, %v67
    %v69 = vrot.slane %v60, %v68
    %v72 = vlaneseq
    %v73 = vshrl.u32 %v72, 7
    %v74 = vsub.s32 0, %v73
    %v75 = vrot.slane %v65, %v74
    %v76 = vlaneseq
    %v77 = vshrl.u32 %v76, 7
    %v78 = vsub.s32 0, %v77
    %v79 = vrot.slane %v69, %v78
    %v80 = vlaneseq
    %v81 = vshrl.u32 %v80, 7
    %v82 = vsub.s32 1, %v81
    %v83 = vrot.slane %v60, %v82
    %v84 = vlaneseq
    %v85 = vshrl.u32 %v84, 7
    %v86 = vsub.s32 5, %v85
    %v87 = vrot.slane %v60, %v86
    %v90 = vlaneseq
    %v91 = vshrl.u32 %v90, 7
    %v92 = vsub.s32 1, %v91
    %v93 = vrot.slane %v83, %v92
    %v94 = vlaneseq
    %v95 = vshrl.u32 %v94, 7
    %v96 = vsub.s32 1, %v95
    %v97 = vrot.slane %v87, %v96
    %v98 = vlaneseq
    %v99 = vshrl.u32 %v98, 7
    %v100 = vsub.s32 2, %v99
    %v101 = vrot.slane %v60, %v100
    %v102 = vlaneseq
    %v103 = vshrl.u32 %v102, 7
    %v104 = vsub.s32 6, %v103
    %v105 = vrot.slane %v60, %v104
    %v108 = vlaneseq
    %v109 = vshrl.u32 %v108, 7
    %v110 = vsub.s32 2, %v109
    %v111 = vrot.slane %v101, %v110
    %v112 = vlaneseq
    %v113 = vshrl.u32 %v112, 7
    %v114 = vsub.s32 2, %v113
    %v115 = vrot.slane %v105, %v114
    %v116 = vlaneseq
    %v117 = vshrl.u32 %v116, 7
    %v118 = vsub.s32 3, %v117
    %v119 = vrot.slane %v60, %v118
    %v120 = vlaneseq
    %v121 = vshrl.u32 %v120, 7
    %v122 = vsub.s32 7, %v121
    %v123 = vrot.slane %v60, %v122
    %v126 = vlaneseq
    %v127 = vshrl.u32 %v126, 7
    %v128 = vsub.s32 3, %v127
    %v129 = vrot.slane %v119, %v128
    %v130 = vlaneseq
    %v131 = vshrl.u32 %v130, 7
    %v132 = vsub.s32 3, %v131
    %v133 = vrot.slane %v123, %v132
    %vm134 = vcmask 1043456
    %v135 = vsel %vm134, %v75, %v93
    %v136 = vsel %vm134, %v79, %v97
    %v137 = vsel %vm134, %v111, %v129
    %v138 = vsel %vm134, %v115, %v133
    %139 = vst [vmem:[#allocation2 + $0x8] sm:$0xff] %v135
    %140 = vst [vmem:[#allocation2 + $0x10] sm:$0xff] %v136
    %141 = vst [vmem:[#allocation2 + $0x38] sm:$0xff] %v137
    %142 = vst [vmem:[#allocation2 + $0x40] sm:$0xff] %v138
    %s143 = scalar_lea.vmem [#allocation3], 8
    %v144 = vld [vmem:[%s143] sm:$0xff]
    %v146 = vlaneseq
    %v147 = vshrl.u32 %v146, 7
    %v148 = vsub.s32 0, %v147
    %v149 = vrot.slane %v144, %v148
    %v150 = vlaneseq
    %v151 = vshrl.u32 %v150, 7
    %v152 = vsub.s32 4, %v151
    %v153 = vrot.slane %v144, %v152
    %v156 = vlaneseq
    %v157 = vshrl.u32 %v156, 7
    %v158 = vsub.s32 0, %v157
    %v159 = vrot.slane %v149, %v158
    %v160 = vlaneseq
    %v161 = vshrl.u32 %v160, 7
    %v162 = vsub.s32 0, %v161
    %v163 = vrot.slane %v153, %v162
    %v164 = vlaneseq
    %v165 = vshrl.u32 %v164, 7
    %v166 = vsub.s32 1, %v165
    %v167 = vrot.slane %v144, %v166
    %v168 = vlaneseq
    %v169 = vshrl.u32 %v168, 7
    %v170 = vsub.s32 5, %v169
    %v171 = vrot.slane %v144, %v170
    %v174 = vlaneseq
    %v175 = vshrl.u32 %v174, 7
    %v176 = vsub.s32 1, %v175
    %v177 = vrot.slane %v167, %v176
    %v178 = vlaneseq
    %v179 = vshrl.u32 %v178, 7
    %v180 = vsub.s32 1, %v179
    %v181 = vrot.slane %v171, %v180
    %v182 = vlaneseq
    %v183 = vshrl.u32 %v182, 7
    %v184 = vsub.s32 2, %v183
    %v185 = vrot.slane %v144, %v184
    %v186 = vlaneseq
    %v187 = vshrl.u32 %v186, 7
    %v188 = vsub.s32 6, %v187
    %v189 = vrot.slane %v144, %v188
    %v192 = vlaneseq
    %v193 = vshrl.u32 %v192, 7
    %v194 = vsub.s32 2, %v193
    %v195 = vrot.slane %v185, %v194
    %v196 = vlaneseq
    %v197 = vshrl.u32 %v196, 7
    %v198 = vsub.s32 2, %v197
    %v199 = vrot.slane %v189, %v198
    %v200 = vlaneseq
    %v201 = vshrl.u32 %v200, 7
    %v202 = vsub.s32 3, %v201
    %v203 = vrot.slane %v144, %v202
    %v204 = vlaneseq
    %v205 = vshrl.u32 %v204, 7
    %v206 = vsub.s32 7, %v205
    %v207 = vrot.slane %v144, %v206
    %v210 = vlaneseq
    %v211 = vshrl.u32 %v210, 7
    %v212 = vsub.s32 3, %v211
    %v213 = vrot.slane %v203, %v212
    %v214 = vlaneseq
    %v215 = vshrl.u32 %v214, 7
    %v216 = vsub.s32 3, %v215
    %v217 = vrot.slane %v207, %v216
    %v218 = vsel %vm134, %v159, %v177
    %v219 = vsel %vm134, %v163, %v181
    %v220 = vsel %vm134, %v195, %v213
    %v221 = vsel %vm134, %v199, %v217
    %222 = vst [vmem:[#allocation2 + $0x18] sm:$0xff] %v218
    %223 = vst [vmem:[#allocation2 + $0x20] sm:$0xff] %v219
    %224 = vst [vmem:[#allocation2 + $0x48] sm:$0xff] %v220
    %225 = vst [vmem:[#allocation2 + $0x50] sm:$0xff] %v221
    %v226 = vld [vmem:[#allocation6] sm:$0xf]
    %228 = vset.pattern.permute.xlu0 36
    %229 = vperm.xlu0 %228, %v226
    %v230 = vpop.permute.xlu0 %229
    %v232 = vld [vmem:[#allocation2] sm:$0xf]
    %v233 = vld [vmem:[#allocation2 + $0x8] sm:$0xf]
    %v234 = vld [vmem:[#allocation2 + $0x10] sm:$0xf]
    %v235 = vld [vmem:[#allocation2 + $0x18] sm:$0xf]
    %v236 = vld [vmem:[#allocation2 + $0x20] sm:$0xf]
    %237 = vset.pattern.permute.xlu0 0
    %238 = vperm.xlu0 %237, %v226
    %v239 = vpop.permute.xlu0 %238
    %v241 = vmul.f32 %v232, %v239
    %v242 = vmul.f32 %v233, %v239
    %v243 = vmul.f32 %v234, %v239
    %v244 = vmul.f32 %v235, %v239
    %v245 = vmul.f32 %v236, %v239
    %v246 = vld [vmem:[#allocation2] sm:$0xf0]
    %v247 = vld [vmem:[#allocation2 + $0x8] sm:$0xf0]
    %v248 = vld [vmem:[#allocation2 + $0x10] sm:$0xf0]
    %v249 = vld [vmem:[#allocation2 + $0x18] sm:$0xf0]
    %v250 = vld [vmem:[#allocation2 + $0x20] sm:$0xf0]
    %251 = vset.pattern.permute.xlu0 1
    %252 = vperm.xlu0 %251, %v226
    %v253 = vpop.permute.xlu0 %252
    %v254 = vrot.slane %v253, 4
    %v256 = vmul.f32 %v246, %v254
    %v257 = vmul.f32 %v247, %v254
    %v258 = vmul.f32 %v248, %v254
    %v259 = vmul.f32 %v249, %v254
    %v260 = vmul.f32 %v250, %v254
    %v261 = vld [vmem:[#allocation2 + $0x30] sm:$0xf]
    %v262 = vld [vmem:[#allocation2 + $0x38] sm:$0xf]
    %v263 = vld [vmem:[#allocation2 + $0x40] sm:$0xf]
    %v264 = vld [vmem:[#allocation2 + $0x48] sm:$0xf]
    %v265 = vld [vmem:[#allocation2 + $0x50] sm:$0xf]
    %266 = vset.pattern.permute.xlu0 2
    %267 = vperm.xlu0 %266, %v226
    %v268 = vpop.permute.xlu0 %267
    %v270 = vmul.f32 %v261, %v268
    %v271 = vmul.f32 %v262, %v268
    %v272 = vmul.f32 %v263, %v268
    %v273 = vmul.f32 %v264, %v268
    %v274 = vmul.f32 %v265, %v268
    %v275 = vld [vmem:[#allocation2 + $0x30] sm:$0xf0]
    %v276 = vld [vmem:[#allocation2 + $0x38] sm:$0xf0]
    %v277 = vld [vmem:[#allocation2 + $0x40] sm:$0xf0]
    %v278 = vld [vmem:[#allocation2 + $0x48] sm:$0xf0]
    %v279 = vld [vmem:[#allocation2 + $0x50] sm:$0xf0]
    %280 = vset.pattern.permute.xlu0 3
    %281 = vperm.xlu0 %280, %v226
    %v282 = vpop.permute.xlu0 %281
    %v283 = vrot.slane %v282, 4
    %v285 = vmul.f32 %v275, %v283
    %v286 = vmul.f32 %v276, %v283
    %v287 = vmul.f32 %v277, %v283
    %v288 = vmul.f32 %v278, %v283
    %v289 = vmul.f32 %v279, %v283
    %v295 = vrot.slane %v256, 4
    %v296 = vrot.slane %v257, 4
    %v297 = vrot.slane %v258, 4
    %v298 = vrot.slane %v259, 4
    %v299 = vrot.slane %v260, 4
    %v305 = vadd.f32 %v241, %v295
    %v306 = vadd.f32 %v242, %v296
    %v307 = vadd.f32 %v243, %v297
    %v308 = vadd.f32 %v244, %v298
    %v309 = vadd.f32 %v245, %v299
    %v315 = vrot.slane %v285, 4
    %v316 = vrot.slane %v286, 4
    %v317 = vrot.slane %v287, 4
    %v318 = vrot.slane %v288, 4
    %v319 = vrot.slane %v289, 4
    %v325 = vadd.f32 %v270, %v315
    %v326 = vadd.f32 %v271, %v316
    %v327 = vadd.f32 %v272, %v317
    %v328 = vadd.f32 %v273, %v318
    %v329 = vadd.f32 %v274, %v319
    %v330 = vadd.f32 %v305, %v325
    %v331 = vadd.f32 %v306, %v326
    %v332 = vadd.f32 %v307, %v327
    %v333 = vadd.f32 %v308, %v328
    %v334 = vadd.f32 %v309, %v329
    %v335 = vld [vmem:[#allocation8] sm:$0xff]
    %v336 = vld [vmem:[#allocation8 + $0x8] sm:$0xff]
    %v339 = vcombine.high %v335, %v335
    %v340 = vcombine.high %v336, %v336
    %341 = vrot.lane.b32.xlu0 %v335, 111
    %v342 = vpop.permute.xlu0 %341
    %343 = vrot.lane.b32.xlu0 %v339, 111
    %v344 = vpop.permute.xlu0 %343
    %345 = vrot.lane.b32.xlu0 %v336, 111
    %v346 = vpop.permute.xlu0 %345
    %347 = vrot.lane.b32.xlu0 %v340, 111
    %v348 = vpop.permute.xlu0 %347
    %vm349 = vcmask 908288
    %v350 = vsel %vm349, %v342, %v344
    %v351 = vsel %vm349, %v344, %v346
    %v352 = vsel %vm349, %v346, %v348
    %v358 = vmul.f32 %v330, %v342
    %v359 = vmul.f32 %v331, %v350
    %v360 = vmul.f32 %v332, %v351
    %v361 = vmul.f32 %v333, %v352
    %v362 = vmul.f32 %v334, %v348
    %v363 = vld [vmem:[#allocation2] sm:$0xf]
    %v364 = vld [vmem:[#allocation2 + $0x8] sm:$0xf]
    %v365 = vld [vmem:[#allocation2 + $0x10] sm:$0xf]
    %v366 = vld [vmem:[#allocation2 + $0x18] sm:$0xf]
    %v367 = vld [vmem:[#allocation2 + $0x20] sm:$0xf]
    %368 = vset.pattern.permute.xlu0 4
    %369 = vperm.xlu0 %368, %v226
    %v370 = vpop.permute.xlu0 %369
    %v372 = vmul.f32 %v363, %v370
    %v373 = vmul.f32 %v364, %v370
    %v374 = vmul.f32 %v365, %v370
    %v375 = vmul.f32 %v366, %v370
    %v376 = vmul.f32 %v367, %v370
    %v377 = vld [vmem:[#allocation2] sm:$0xf0]
    %v378 = vld [vmem:[#allocation2 + $0x8] sm:$0xf0]
    %v379 = vld [vmem:[#allocation2 + $0x10] sm:$0xf0]
    %v380 = vld [vmem:[#allocation2 + $0x18] sm:$0xf0]
    %v381 = vld [vmem:[#allocation2 + $0x20] sm:$0xf0]
    %382 = vset.pattern.permute.xlu0 5
    %383 = vperm.xlu0 %382, %v226
    %v384 = vpop.permute.xlu0 %383
    %v385 = vrot.slane %v384, 4
    %v387 = vmul.f32 %v377, %v385
    %v388 = vmul.f32 %v378, %v385
    %v389 = vmul.f32 %v379, %v385
    %v390 = vmul.f32 %v380, %v385
    %v391 = vmul.f32 %v381, %v385
    %v392 = vld [vmem:[#allocation2 + $0x30] sm:$0xf]
    %v393 = vld [vmem:[#allocation2 + $0x38] sm:$0xf]
    %v394 = vld [vmem:[#allocation2 + $0x40] sm:$0xf]
    %v395 = vld [vmem:[#allocation2 + $0x48] sm:$0xf]
    %v396 = vld [vmem:[#allocation2 + $0x50] sm:$0xf]
    %397 = vset.pattern.permute.xlu0 6
    %398 = vperm.xlu0 %397, %v226
    %v399 = vpop.permute.xlu0 %398
    %v401 = vmul.f32 %v392, %v399
    %v402 = vmul.f32 %v393, %v399
    %v403 = vmul.f32 %v394, %v399
    %v404 = vmul.f32 %v395, %v399
    %v405 = vmul.f32 %v396, %v399
    %v406 = vld [vmem:[#allocation2 + $0x30] sm:$0xf0]
    %v407 = vld [vmem:[#allocation2 + $0x38] sm:$0xf0]
    %v408 = vld [vmem:[#allocation2 + $0x40] sm:$0xf0]
    %v409 = vld [vmem:[#allocation2 + $0x48] sm:$0xf0]
    %v410 = vld [vmem:[#allocation2 + $0x50] sm:$0xf0]
    %411 = vset.pattern.permute.xlu0 7
    %412 = vperm.xlu0 %411, %v226
    %v413 = vpop.permute.xlu0 %412
    %v414 = vrot.slane %v413, 4
    %v416 = vmul.f32 %v406, %v414
    %v417 = vmul.f32 %v407, %v414
    %v418 = vmul.f32 %v408, %v414
    %v419 = vmul.f32 %v409, %v414
    %v420 = vmul.f32 %v410, %v414
    %v426 = vrot.slane %v387, 4
    %v427 = vrot.slane %v388, 4
    %v428 = vrot.slane %v389, 4
    %v429 = vrot.slane %v390, 4
    %v430 = vrot.slane %v391, 4
    %v436 = vadd.f32 %v372, %v426
    %v437 = vadd.f32 %v373, %v427
    %v438 = vadd.f32 %v374, %v428
    %v439 = vadd.f32 %v375, %v429
    %v440 = vadd.f32 %v376, %v430
    %v446 = vrot.slane %v416, 4
    %v447 = vrot.slane %v417, 4
    %v448 = vrot.slane %v418, 4
    %v449 = vrot.slane %v419, 4
    %v450 = vrot.slane %v420, 4
    %v456 = vadd.f32 %v401, %v446
    %v457 = vadd.f32 %v402, %v447
    %v458 = vadd.f32 %v403, %v448
    %v459 = vadd.f32 %v404, %v449
    %v460 = vadd.f32 %v405, %v450
    %v461 = vadd.f32 %v436, %v456
    %v462 = vadd.f32 %v437, %v457
    %v463 = vadd.f32 %v438, %v458
    %v464 = vadd.f32 %v439, %v459
    %v465 = vadd.f32 %v440, %v460
    %s466 = scalar_lea.vmem [#allocation8], 16
    %v467 = vld [vmem:[%s466] sm:$0xff]
    %v468 = vld [vmem:[%s466 + $0x8] sm:$0xff]
    %v471 = vcombine.high %v467, %v467
    %v472 = vcombine.high %v468, %v468
    %473 = vrot.lane.b32.xlu0 %v467, 112
    %v474 = vpop.permute.xlu0 %473
    %475 = vrot.lane.b32.xlu0 %v471, 112
    %v476 = vpop.permute.xlu0 %475
    %477 = vrot.lane.b32.xlu0 %v468, 112
    %v478 = vpop.permute.xlu0 %477
    %479 = vrot.lane.b32.xlu0 %v472, 112
    %v480 = vpop.permute.xlu0 %479
    %vm481 = vcmask 916480
    %v482 = vsel %vm481, %v474, %v476
    %v483 = vsel %vm481, %v476, %v478
    %v484 = vsel %vm481, %v478, %v480
    %v490 = vmul.f32 %v461, %v474
    %v491 = vmul.f32 %v462, %v482
    %v492 = vmul.f32 %v463, %v483
    %v493 = vmul.f32 %v464, %v484
    %v494 = vmul.f32 %v465, %v480
    %500 = vrot.lane.b32.xlu0 %v490, 127
    %v501 = vpop.permute.xlu0 %500
    %502 = vrot.lane.b32.xlu0 %v491, 127
    %v503 = vpop.permute.xlu0 %502
    %504 = vrot.lane.b32.xlu0 %v492, 127
    %v505 = vpop.permute.xlu0 %504
    %506 = vrot.lane.b32.xlu0 %v493, 127
    %v507 = vpop.permute.xlu0 %506
    %508 = vrot.lane.b32.xlu0 %v494, 127
    %v509 = vpop.permute.xlu0 %508
    %vm510 = vcmask 1039360
    %v511 = vsel %vm510, %v501, %v503
    %v512 = vsel %vm510, %v503, %v505
    %v513 = vsel %vm510, %v505, %v507
    %v514 = vsel %vm510, %v507, %v509
    %v520 = vadd.f32 %v358, %v511
    %v521 = vadd.f32 %v359, %v512
    %v522 = vadd.f32 %v360, %v513
    %v523 = vadd.f32 %v361, %v514
    %v524 = vadd.f32 %v362, %v509
    %v525 = vld [vmem:[#allocation2] sm:$0xf]
    %v526 = vld [vmem:[#allocation2 + $0x8] sm:$0xf]
    %v527 = vld [vmem:[#allocation2 + $0x10] sm:$0xf]
    %v528 = vld [vmem:[#allocation2 + $0x18] sm:$0xf]
    %v529 = vld [vmem:[#allocation2 + $0x20] sm:$0xf]
    %530 = vset.pattern.permute.xlu0 8
    %531 = vperm.xlu0 %530, %v226
    %v532 = vpop.permute.xlu0 %531
    %v534 = vmul.f32 %v525, %v532
    %v535 = vmul.f32 %v526, %v532
    %v536 = vmul.f32 %v527, %v532
    %v537 = vmul.f32 %v528, %v532
    %v538 = vmul.f32 %v529, %v532
    %v539 = vld [vmem:[#allocation2] sm:$0xf0]
    %v540 = vld [vmem:[#allocation2 + $0x8] sm:$0xf0]
    %v541 = vld [vmem:[#allocation2 + $0x10] sm:$0xf0]
    %v542 = vld [vmem:[#allocation2 + $0x18] sm:$0xf0]
    %v543 = vld [vmem:[#allocation2 + $0x20] sm:$0xf0]
    %544 = vset.pattern.permute.xlu0 9
    %545 = vperm.xlu0 %544, %v226
    %v546 = vpop.permute.xlu0 %545
    %v547 = vrot.slane %v546, 4
    %v549 = vmul.f32 %v539, %v547
    %v550 = vmul.f32 %v540, %v547
    %v551 = vmul.f32 %v541, %v547
    %v552 = vmul.f32 %v542, %v547
    %v553 = vmul.f32 %v543, %v547
    %v554 = vld [vmem:[#allocation2 + $0x30] sm:$0xf]
    %v555 = vld [vmem:[#allocation2 + $0x38] sm:$0xf]
    %v556 = vld [vmem:[#allocation2 + $0x40] sm:$0xf]
    %v557 = vld [vmem:[#allocation2 + $0x48] sm:$0xf]
    %v558 = vld [vmem:[#allocation2 + $0x50] sm:$0xf]
    %559 = vset.pattern.permute.xlu0 10
    %560 = vperm.xlu0 %559, %v226
    %v561 = vpop.permute.xlu0 %560
    %v563 = vmul.f32 %v554, %v561
    %v564 = vmul.f32 %v555, %v561
    %v565 = vmul.f32 %v556, %v561
    %v566 = vmul.f32 %v557, %v561
    %v567 = vmul.f32 %v558, %v561
    %v568 = vld [vmem:[#allocation2 + $0x30] sm:$0xf0]
    %v569 = vld [vmem:[#allocation2 + $0x38] sm:$0xf0]
    %v570 = vld [vmem:[#allocation2 + $0x40] sm:$0xf0]
    %v571 = vld [vmem:[#allocation2 + $0x48] sm:$0xf0]
    %v572 = vld [vmem:[#allocation2 + $0x50] sm:$0xf0]
    %573 = vset.pattern.permute.xlu0 11
    %574 = vperm.xlu0 %573, %v226
    %v575 = vpop.permute.xlu0 %574
    %v576 = vrot.slane %v575, 4
    %v578 = vmul.f32 %v568, %v576
    %v579 = vmul.f32 %v569, %v576
    %v580 = vmul.f32 %v570, %v576
    %v581 = vmul.f32 %v571, %v576
    %v582 = vmul.f32 %v572, %v576
    %v588 = vrot.slane %v549, 4
    %v589 = vrot.slane %v550, 4
    %v590 = vrot.slane %v551, 4
    %v591 = vrot.slane %v552, 4
    %v592 = vrot.slane %v553, 4
    %v598 = vadd.f32 %v534, %v588
    %v599 = vadd.f32 %v535, %v589
    %v600 = vadd.f32 %v536, %v590
    %v601 = vadd.f32 %v537, %v591
    %v602 = vadd.f32 %v538, %v592
    %v608 = vrot.slane %v578, 4
    %v609 = vrot.slane %v579, 4
    %v610 = vrot.slane %v580, 4
    %v611 = vrot.slane %v581, 4
    %v612 = vrot.slane %v582, 4
    %v618 = vadd.f32 %v563, %v608
    %v619 = vadd.f32 %v564, %v609
    %v620 = vadd.f32 %v565, %v610
    %v621 = vadd.f32 %v566, %v611
    %v622 = vadd.f32 %v567, %v612
    %v623 = vadd.f32 %v598, %v618
    %v624 = vadd.f32 %v599, %v619
    %v625 = vadd.f32 %v600, %v620
    %v626 = vadd.f32 %v601, %v621
    %v627 = vadd.f32 %v602, %v622
    %s628 = scalar_lea.vmem [#allocation8], 32
    %v629 = vld [vmem:[%s628] sm:$0xff]
    %v630 = vld [vmem:[%s628 + $0x8] sm:$0xff]
    %v633 = vcombine.high %v629, %v629
    %v634 = vcombine.high %v630, %v630
    %635 = vrot.lane.b32.xlu0 %v629, 113
    %v636 = vpop.permute.xlu0 %635
    %637 = vrot.lane.b32.xlu0 %v633, 113
    %v638 = vpop.permute.xlu0 %637
    %639 = vrot.lane.b32.xlu0 %v630, 113
    %v640 = vpop.permute.xlu0 %639
    %641 = vrot.lane.b32.xlu0 %v634, 113
    %v642 = vpop.permute.xlu0 %641
    %vm643 = vcmask 924672
    %v644 = vsel %vm643, %v636, %v638
    %v645 = vsel %vm643, %v638, %v640
    %v646 = vsel %vm643, %v640, %v642
    %v652 = vmul.f32 %v623, %v636
    %v653 = vmul.f32 %v624, %v644
    %v654 = vmul.f32 %v625, %v645
    %v655 = vmul.f32 %v626, %v646
    %v656 = vmul.f32 %v627, %v642
    %662 = vrot.lane.b32.xlu0 %v652, 126
    %v663 = vpop.permute.xlu0 %662
    %664 = vrot.lane.b32.xlu0 %v653, 126
    %v665 = vpop.permute.xlu0 %664
    %666 = vrot.lane.b32.xlu0 %v654, 126
    %v667 = vpop.permute.xlu0 %666
    %668 = vrot.lane.b32.xlu0 %v655, 126
    %v669 = vpop.permute.xlu0 %668
    %670 = vrot.lane.b32.xlu0 %v656, 126
    %v671 = vpop.permute.xlu0 %670
    %vm672 = vcmask 1031168
    %v673 = vsel %vm672, %v663, %v665
    %v674 = vsel %vm672, %v665, %v667
    %v675 = vsel %vm672, %v667, %v669
    %v676 = vsel %vm672, %v669, %v671
    %v682 = vadd.f32 %v520, %v673
    %v683 = vadd.f32 %v521, %v674
    %v684 = vadd.f32 %v522, %v675
    %v685 = vadd.f32 %v523, %v676
    %v686 = vadd.f32 %v524, %v671
    %v687 = vld [vmem:[#allocation2] sm:$0xf]
    %v688 = vld [vmem:[#allocation2 + $0x8] sm:$0xf]
    %v689 = vld [vmem:[#allocation2 + $0x10] sm:$0xf]
    %v690 = vld [vmem:[#allocation2 + $0x18] sm:$0xf]
    %v691 = vld [vmem:[#allocation2 + $0x20] sm:$0xf]
    %692 = vset.pattern.permute.xlu0 12
    %693 = vperm.xlu0 %692, %v226
    %v694 = vpop.permute.xlu0 %693
    %v696 = vmul.f32 %v687, %v694
    %v697 = vmul.f32 %v688, %v694
    %v698 = vmul.f32 %v689, %v694
    %v699 = vmul.f32 %v690, %v694
    %v700 = vmul.f32 %v691, %v694
    %v701 = vld [vmem:[#allocation2] sm:$0xf0]
    %v702 = vld [vmem:[#allocation2 + $0x8] sm:$0xf0]
    %v703 = vld [vmem:[#allocation2 + $0x10] sm:$0xf0]
    %v704 = vld [vmem:[#allocation2 + $0x18] sm:$0xf0]
    %v705 = vld [vmem:[#allocation2 + $0x20] sm:$0xf0]
    %706 = vset.pattern.permute.xlu0 13
    %707 = vperm.xlu0 %706, %v226
    %v708 = vpop.permute.xlu0 %707
    %v709 = vrot.slane %v708, 4
    %v711 = vmul.f32 %v701, %v709
    %v712 = vmul.f32 %v702, %v709
    %v713 = vmul.f32 %v703, %v709
    %v714 = vmul.f32 %v704, %v709
    %v715 = vmul.f32 %v705, %v709
    %v716 = vld [vmem:[#allocation2 + $0x30] sm:$0xf]
    %v717 = vld [vmem:[#allocation2 + $0x38] sm:$0xf]
    %v718 = vld [vmem:[#allocation2 + $0x40] sm:$0xf]
    %v719 = vld [vmem:[#allocation2 + $0x48] sm:$0xf]
    %v720 = vld [vmem:[#allocation2 + $0x50] sm:$0xf]
    %721 = vset.pattern.permute.xlu0 14
    %722 = vperm.xlu0 %721, %v226
    %v723 = vpop.permute.xlu0 %722
    %v725 = vmul.f32 %v716, %v723
    %v726 = vmul.f32 %v717, %v723
    %v727 = vmul.f32 %v718, %v723
    %v728 = vmul.f32 %v719, %v723
    %v729 = vmul.f32 %v720, %v723
    %v730 = vld [vmem:[#allocation2 + $0x30] sm:$0xf0]
    %v731 = vld [vmem:[#allocation2 + $0x38] sm:$0xf0]
    %v732 = vld [vmem:[#allocation2 + $0x40] sm:$0xf0]
    %v733 = vld [vmem:[#allocation2 + $0x48] sm:$0xf0]
    %v734 = vld [vmem:[#allocation2 + $0x50] sm:$0xf0]
    %735 = vset.pattern.permute.xlu0 15
    %736 = vperm.xlu0 %735, %v226
    %v737 = vpop.permute.xlu0 %736
    %v738 = vrot.slane %v737, 4
    %v740 = vmul.f32 %v730, %v738
    %v741 = vmul.f32 %v731, %v738
    %v742 = vmul.f32 %v732, %v738
    %v743 = vmul.f32 %v733, %v738
    %v744 = vmul.f32 %v734, %v738
    %v750 = vrot.slane %v711, 4
    %v751 = vrot.slane %v712, 4
    %v752 = vrot.slane %v713, 4
    %v753 = vrot.slane %v714, 4
    %v754 = vrot.slane %v715, 4
    %v760 = vadd.f32 %v696, %v750
    %v761 = vadd.f32 %v697, %v751
    %v762 = vadd.f32 %v698, %v752
    %v763 = vadd.f32 %v699, %v753
    %v764 = vadd.f32 %v700, %v754
    %v770 = vrot.slane %v740, 4
    %v771 = vrot.slane %v741, 4
    %v772 = vrot.slane %v742, 4
    %v773 = vrot.slane %v743, 4
    %v774 = vrot.slane %v744, 4
    %v780 = vadd.f32 %v725, %v770
    %v781 = vadd.f32 %v726, %v771
    %v782 = vadd.f32 %v727, %v772
    %v783 = vadd.f32 %v728, %v773
    %v784 = vadd.f32 %v729, %v774
    %v785 = vadd.f32 %v760, %v780
    %v786 = vadd.f32 %v761, %v781
    %v787 = vadd.f32 %v762, %v782
    %v788 = vadd.f32 %v763, %v783
    %v789 = vadd.f32 %v764, %v784
    %s790 = scalar_lea.vmem [#allocation8], 48
    %v791 = vld [vmem:[%s790] sm:$0xff]
    %v792 = vld [vmem:[%s790 + $0x8] sm:$0xff]
    %v795 = vcombine.high %v791, %v791
    %v796 = vcombine.high %v792, %v792
    %797 = vrot.lane.b32.xlu0 %v791, 127
    %v798 = vpop.permute.xlu0 %797
    %799 = vrot.lane.b32.xlu0 %v795, 127
    %v800 = vpop.permute.xlu0 %799
    %801 = vrot.lane.b32.xlu0 %v792, 127
    %v802 = vpop.permute.xlu0 %801
    %803 = vrot.lane.b32.xlu0 %v796, 127
    %v804 = vpop.permute.xlu0 %803
    %v805 = vsel %vm510, %v798, %v800
    %v806 = vsel %vm510, %v800, %v802
    %v807 = vsel %vm510, %v802, %v804
    %v813 = vmul.f32 %v785, %v798
    %v814 = vmul.f32 %v786, %v805
    %v815 = vmul.f32 %v787, %v806
    %v816 = vmul.f32 %v788, %v807
    %v817 = vmul.f32 %v789, %v804
    %v818 = vadd.f32 %v230, %v813
    %v819 = vadd.f32 %v230, %v814
    %v820 = vadd.f32 %v230, %v815
    %v821 = vadd.f32 %v230, %v816
    %v822 = vadd.f32 %v230, %v817
    %v823 = vld [vmem:[#allocation2 + $0x8] sm:$0xf]
    %v824 = vld [vmem:[#allocation2 + $0x10] sm:$0xf]
    %v825 = vld [vmem:[#allocation2 + $0x18] sm:$0xf]
    %v826 = vld [vmem:[#allocation2 + $0x20] sm:$0xf]
    %827 = vset.pattern.permute.xlu0 16
    %828 = vperm.xlu0 %827, %v226
    %v829 = vpop.permute.xlu0 %828
    %v831 = vmul.f32 %v823, %v829
    %v832 = vmul.f32 %v824, %v829
    %v833 = vmul.f32 %v825, %v829
    %v834 = vmul.f32 %v826, %v829
    %v835 = vld [vmem:[#allocation2 + $0x8] sm:$0xf0]
    %v836 = vld [vmem:[#allocation2 + $0x10] sm:$0xf0]
    %v837 = vld [vmem:[#allocation2 + $0x18] sm:$0xf0]
    %v838 = vld [vmem:[#allocation2 + $0x20] sm:$0xf0]
    %839 = vset.pattern.permute.xlu0 17
    %840 = vperm.xlu0 %839, %v226
    %v841 = vpop.permute.xlu0 %840
    %v842 = vrot.slane %v841, 4
    %v844 = vmul.f32 %v835, %v842
    %v845 = vmul.f32 %v836, %v842
    %v846 = vmul.f32 %v837, %v842
    %v847 = vmul.f32 %v838, %v842
    %v848 = vld [vmem:[#allocation2 + $0x38] sm:$0xf]
    %v849 = vld [vmem:[#allocation2 + $0x40] sm:$0xf]
    %v850 = vld [vmem:[#allocation2 + $0x48] sm:$0xf]
    %v851 = vld [vmem:[#allocation2 + $0x50] sm:$0xf]
    %852 = vset.pattern.permute.xlu0 18
    %853 = vperm.xlu0 %852, %v226
    %v854 = vpop.permute.xlu0 %853
    %v856 = vmul.f32 %v848, %v854
    %v857 = vmul.f32 %v849, %v854
    %v858 = vmul.f32 %v850, %v854
    %v859 = vmul.f32 %v851, %v854
    %v860 = vld [vmem:[#allocation2 + $0x38] sm:$0xf0]
    %v861 = vld [vmem:[#allocation2 + $0x40] sm:$0xf0]
    %v862 = vld [vmem:[#allocation2 + $0x48] sm:$0xf0]
    %v863 = vld [vmem:[#allocation2 + $0x50] sm:$0xf0]
    %864 = vset.pattern.permute.xlu0 19
    %865 = vperm.xlu0 %864, %v226
    %v866 = vpop.permute.xlu0 %865
    %v867 = vrot.slane %v866, 4
    %v869 = vmul.f32 %v860, %v867
    %v870 = vmul.f32 %v861, %v867
    %v871 = vmul.f32 %v862, %v867
    %v872 = vmul.f32 %v863, %v867
    %v877 = vrot.slane %v844, 4
    %v878 = vrot.slane %v845, 4
    %v879 = vrot.slane %v846, 4
    %v880 = vrot.slane %v847, 4
    %v885 = vadd.f32 %v831, %v877
    %v886 = vadd.f32 %v832, %v878
    %v887 = vadd.f32 %v833, %v879
    %v888 = vadd.f32 %v834, %v880
    %v893 = vrot.slane %v869, 4
    %v894 = vrot.slane %v870, 4
    %v895 = vrot.slane %v871, 4
    %v896 = vrot.slane %v872, 4
    %v901 = vadd.f32 %v856, %v893
    %v902 = vadd.f32 %v857, %v894
    %v903 = vadd.f32 %v858, %v895
    %v904 = vadd.f32 %v859, %v896
    %v905 = vadd.f32 %v885, %v901
    %v906 = vadd.f32 %v886, %v902
    %v907 = vadd.f32 %v887, %v903
    %v908 = vadd.f32 %v888, %v904
    %913 = vrot.lane.b32.xlu0 %v905, 127
    %v914 = vpop.permute.xlu0 %913
    %915 = vrot.lane.b32.xlu0 %v906, 127
    %v916 = vpop.permute.xlu0 %915
    %917 = vrot.lane.b32.xlu0 %v907, 127
    %v918 = vpop.permute.xlu0 %917
    %919 = vrot.lane.b32.xlu0 %v908, 127
    %v920 = vpop.permute.xlu0 %919
    %v921 = vsel %vm510, %v914, %v916
    %v922 = vsel %vm510, %v916, %v918
    %v923 = vsel %vm510, %v918, %v920
    %v929 = vadd.f32 %v818, %v914
    %v930 = vadd.f32 %v819, %v921
    %v931 = vadd.f32 %v820, %v922
    %v932 = vadd.f32 %v821, %v923
    %v933 = vadd.f32 %v822, %v920
    %v934 = vld [vmem:[#allocation2 + $0x8] sm:$0xf]
    %v935 = vld [vmem:[#allocation2 + $0x10] sm:$0xf]
    %v936 = vld [vmem:[#allocation2 + $0x18] sm:$0xf]
    %v937 = vld [vmem:[#allocation2 + $0x20] sm:$0xf]
    %v938 = vld [vmem:[#allocation2 + $0x28] sm:$0xf]
    %939 = vset.pattern.permute.xlu0 20
    %940 = vperm.xlu0 %939, %v226
    %v941 = vpop.permute.xlu0 %940
    %v943 = vmul.f32 %v934, %v941
    %v944 = vmul.f32 %v935, %v941
    %v945 = vmul.f32 %v936, %v941
    %v946 = vmul.f32 %v937, %v941
    %v947 = vmul.f32 %v938, %v941
    %v948 = vld [vmem:[#allocation2 + $0x8] sm:$0xf0]
    %v949 = vld [vmem:[#allocation2 + $0x10] sm:$0xf0]
    %v950 = vld [vmem:[#allocation2 + $0x18] sm:$0xf0]
    %v951 = vld [vmem:[#allocation2 + $0x20] sm:$0xf0]
    %v952 = vld [vmem:[#allocation2 + $0x28] sm:$0xf0]
    %953 = vset.pattern.permute.xlu0 21
    %954 = vperm.xlu0 %953, %v226
    %v955 = vpop.permute.xlu0 %954
    %v956 = vrot.slane %v955, 4
    %v958 = vmul.f32 %v948, %v956
    %v959 = vmul.f32 %v949, %v956
    %v960 = vmul.f32 %v950, %v956
    %v961 = vmul.f32 %v951, %v956
    %v962 = vmul.f32 %v952, %v956
    %v963 = vld [vmem:[#allocation2 + $0x38] sm:$0xf]
    %v964 = vld [vmem:[#allocation2 + $0x40] sm:$0xf]
    %v965 = vld [vmem:[#allocation2 + $0x48] sm:$0xf]
    %v966 = vld [vmem:[#allocation2 + $0x50] sm:$0xf]
    %v967 = vld [vmem:[#allocation2 + $0x58] sm:$0xf]
    %968 = vset.pattern.permute.xlu0 22
    %969 = vperm.xlu0 %968, %v226
    %v970 = vpop.permute.xlu0 %969
    %v972 = vmul.f32 %v963, %v970
    %v973 = vmul.f32 %v964, %v970
    %v974 = vmul.f32 %v965, %v970
    %v975 = vmul.f32 %v966, %v970
    %v976 = vmul.f32 %v967, %v970
    %v977 = vld [vmem:[#allocation2 + $0x38] sm:$0xf0]
    %v978 = vld [vmem:[#allocation2 + $0x40] sm:$0xf0]
    %v979 = vld [vmem:[#allocation2 + $0x48] sm:$0xf0]
    %v980 = vld [vmem:[#allocation2 + $0x50] sm:$0xf0]
    %v981 = vld [vmem:[#allocation2 + $0x58] sm:$0xf0]
    %982 = vset.pattern.permute.xlu0 23
    %983 = vperm.xlu0 %982, %v226
    %v984 = vpop.permute.xlu0 %983
    %v985 = vrot.slane %v984, 4
    %v987 = vmul.f32 %v977, %v985
    %v988 = vmul.f32 %v978, %v985
    %v989 = vmul.f32 %v979, %v985
    %v990 = vmul.f32 %v980, %v985
    %v991 = vmul.f32 %v981, %v985
    %v997 = vrot.slane %v958, 4
    %v998 = vrot.slane %v959, 4
    %v999 = vrot.slane %v960, 4
    %v1000 = vrot.slane %v961, 4
    %v1001 = vrot.slane %v962, 4
    %v1007 = vadd.f32 %v943, %v997
    %v1008 = vadd.f32 %v944, %v998
    %v1009 = vadd.f32 %v945, %v999
    %v1010 = vadd.f32 %v946, %v1000
    %v1011 = vadd.f32 %v947, %v1001
    %v1017 = vrot.slane %v987, 4
    %v1018 = vrot.slane %v988, 4
    %v1019 = vrot.slane %v989, 4
    %v1020 = vrot.slane %v990, 4
    %v1021 = vrot.slane %v991, 4
    %v1027 = vadd.f32 %v972, %v1017
    %v1028 = vadd.f32 %v973, %v1018
    %v1029 = vadd.f32 %v974, %v1019
    %v1030 = vadd.f32 %v975, %v1020
    %v1031 = vadd.f32 %v976, %v1021
    %v1032 = vadd.f32 %v1007, %v1027
    %v1033 = vadd.f32 %v1008, %v1028
    %v1034 = vadd.f32 %v1009, %v1029
    %v1035 = vadd.f32 %v1010, %v1030
    %v1036 = vadd.f32 %v1011, %v1031
    %s1037 = scalar_lea.vmem [#allocation8], 80
    %v1038 = vld [vmem:[%s1037] sm:$0xff]
    %v1039 = vld [vmem:[%s1037 + $0x8] sm:$0xff]
    %v1042 = vcombine.high %v1038, %v1038
    %v1043 = vcombine.high %v1039, %v1039
    %1044 = vrot.lane.b32.xlu0 %v1038, 1
    %v1045 = vpop.permute.xlu0 %1044
    %1046 = vrot.lane.b32.xlu0 %v1042, 1
    %v1047 = vpop.permute.xlu0 %1046
    %1048 = vrot.lane.b32.xlu0 %v1039, 1
    %v1049 = vpop.permute.xlu0 %1048
    %1050 = vrot.lane.b32.xlu0 %v1043, 1
    %v1051 = vpop.permute.xlu0 %1050
    %vm1052 = vcmask 7168
    %v1053 = vsel %vm1052, %v1045, %v1047
    %v1054 = vsel %vm1052, %v1047, %v1049
    %v1055 = vsel %vm1052, %v1049, %v1051
    %v1061 = vmul.f32 %v1032, %v1045
    %v1062 = vmul.f32 %v1033, %v1053
    %v1063 = vmul.f32 %v1034, %v1054
    %v1064 = vmul.f32 %v1035, %v1055
    %v1065 = vmul.f32 %v1036, %v1051
    %1071 = vrot.lane.b32.xlu0 %v1061, 126
    %v1072 = vpop.permute.xlu0 %1071
    %1073 = vrot.lane.b32.xlu0 %v1062, 126
    %v1074 = vpop.permute.xlu0 %1073
    %1075 = vrot.lane.b32.xlu0 %v1063, 126
    %v1076 = vpop.permute.xlu0 %1075
    %1077 = vrot.lane.b32.xlu0 %v1064, 126
    %v1078 = vpop.permute.xlu0 %1077
    %1079 = vrot.lane.b32.xlu0 %v1065, 126
    %v1080 = vpop.permute.xlu0 %1079
    %v1081 = vsel %vm672, %v1072, %v1074
    %v1082 = vsel %vm672, %v1074, %v1076
    %v1083 = vsel %vm672, %v1076, %v1078
    %v1084 = vsel %vm672, %v1078, %v1080
    %v1090 = vadd.f32 %v929, %v1072
    %v1091 = vadd.f32 %v930, %v1081
    %v1092 = vadd.f32 %v931, %v1082
    %v1093 = vadd.f32 %v932, %v1083
    %v1094 = vadd.f32 %v933, %v1084
    %v1095 = vld [vmem:[#allocation2 + $0x8] sm:$0xf]
    %v1096 = vld [vmem:[#allocation2 + $0x10] sm:$0xf]
    %v1097 = vld [vmem:[#allocation2 + $0x18] sm:$0xf]
    %v1098 = vld [vmem:[#allocation2 + $0x20] sm:$0xf]
    %v1099 = vld [vmem:[#allocation2 + $0x28] sm:$0xf]
    %1100 = vset.pattern.permute.xlu0 24
    %1101 = vperm.xlu0 %1100, %v226
    %v1102 = vpop.permute.xlu0 %1101
    %v1104 = vmul.f32 %v1095, %v1102
    %v1105 = vmul.f32 %v1096, %v1102
    %v1106 = vmul.f32 %v1097, %v1102
    %v1107 = vmul.f32 %v1098, %v1102
    %v1108 = vmul.f32 %v1099, %v1102
    %v1109 = vld [vmem:[#allocation2 + $0x8] sm:$0xf0]
    %v1110 = vld [vmem:[#allocation2 + $0x10] sm:$0xf0]
    %v1111 = vld [vmem:[#allocation2 + $0x18] sm:$0xf0]
    %v1112 = vld [vmem:[#allocation2 + $0x20] sm:$0xf0]
    %v1113 = vld [vmem:[#allocation2 + $0x28] sm:$0xf0]
    %1114 = vset.pattern.permute.xlu0 25
    %1115 = vperm.xlu0 %1114, %v226
    %v1116 = vpop.permute.xlu0 %1115
    %v1117 = vrot.slane %v1116, 4
    %v1119 = vmul.f32 %v1109, %v1117
    %v1120 = vmul.f32 %v1110, %v1117
    %v1121 = vmul.f32 %v1111, %v1117
    %v1122 = vmul.f32 %v1112, %v1117
    %v1123 = vmul.f32 %v1113, %v1117
    %v1124 = vld [vmem:[#allocation2 + $0x38] sm:$0xf]
    %v1125 = vld [vmem:[#allocation2 + $0x40] sm:$0xf]
    %v1126 = vld [vmem:[#allocation2 + $0x48] sm:$0xf]
    %v1127 = vld [vmem:[#allocation2 + $0x50] sm:$0xf]
    %v1128 = vld [vmem:[#allocation2 + $0x58] sm:$0xf]
    %1129 = vset.pattern.permute.xlu0 26
    %1130 = vperm.xlu0 %1129, %v226
    %v1131 = vpop.permute.xlu0 %1130
    %v1133 = vmul.f32 %v1124, %v1131
    %v1134 = vmul.f32 %v1125, %v1131
    %v1135 = vmul.f32 %v1126, %v1131
    %v1136 = vmul.f32 %v1127, %v1131
    %v1137 = vmul.f32 %v1128, %v1131
    %v1138 = vld [vmem:[#allocation2 + $0x38] sm:$0xf0]
    %v1139 = vld [vmem:[#allocation2 + $0x40] sm:$0xf0]
    %v1140 = vld [vmem:[#allocation2 + $0x48] sm:$0xf0]
    %v1141 = vld [vmem:[#allocation2 + $0x50] sm:$0xf0]
    %v1142 = vld [vmem:[#allocation2 + $0x58] sm:$0xf0]
    %1143 = vset.pattern.permute.xlu0 27
    %1144 = vperm.xlu0 %1143, %v226
    %v1145 = vpop.permute.xlu0 %1144
    %v1146 = vrot.slane %v1145, 4
    %v1148 = vmul.f32 %v1138, %v1146
    %v1149 = vmul.f32 %v1139, %v1146
    %v1150 = vmul.f32 %v1140, %v1146
    %v1151 = vmul.f32 %v1141, %v1146
    %v1152 = vmul.f32 %v1142, %v1146
    %v1158 = vrot.slane %v1119, 4
    %v1159 = vrot.slane %v1120, 4
    %v1160 = vrot.slane %v1121, 4
    %v1161 = vrot.slane %v1122, 4
    %v1162 = vrot.slane %v1123, 4
    %v1168 = vadd.f32 %v1104, %v1158
    %v1169 = vadd.f32 %v1105, %v1159
    %v1170 = vadd.f32 %v1106, %v1160
    %v1171 = vadd.f32 %v1107, %v1161
    %v1172 = vadd.f32 %v1108, %v1162
    %v1178 = vrot.slane %v1148, 4
    %v1179 = vrot.slane %v1149, 4
    %v1180 = vrot.slane %v1150, 4
    %v1181 = vrot.slane %v1151, 4
    %v1182 = vrot.slane %v1152, 4
    %v1188 = vadd.f32 %v1133, %v1178
    %v1189 = vadd.f32 %v1134, %v1179
    %v1190 = vadd.f32 %v1135, %v1180
    %v1191 = vadd.f32 %v1136, %v1181
    %v1192 = vadd.f32 %v1137, %v1182
    %v1193 = vadd.f32 %v1168, %v1188
    %v1194 = vadd.f32 %v1169, %v1189
    %v1195 = vadd.f32 %v1170, %v1190
    %v1196 = vadd.f32 %v1171, %v1191
    %v1197 = vadd.f32 %v1172, %v1192
    %s1198 = scalar_lea.vmem [#allocation8], 96
    %v1199 = vld [vmem:[%s1198] sm:$0xff]
    %v1200 = vld [vmem:[%s1198 + $0x8] sm:$0xff]
    %v1203 = vcombine.high %v1199, %v1199
    %v1204 = vcombine.high %v1200, %v1200
    %1205 = vrot.lane.b32.xlu0 %v1199, 15
    %v1206 = vpop.permute.xlu0 %1205
    %1207 = vrot.lane.b32.xlu0 %v1203, 15
    %v1208 = vpop.permute.xlu0 %1207
    %1209 = vrot.lane.b32.xlu0 %v1200, 15
    %v1210 = vpop.permute.xlu0 %1209
    %1211 = vrot.lane.b32.xlu0 %v1204, 15
    %v1212 = vpop.permute.xlu0 %1211
    %vm1213 = vcmask 121856
    %v1214 = vsel %vm1213, %v1206, %v1208
    %v1215 = vsel %vm1213, %v1208, %v1210
    %v1216 = vsel %vm1213, %v1210, %v1212
    %v1222 = vmul.f32 %v1193, %v1206
    %v1223 = vmul.f32 %v1194, %v1214
    %v1224 = vmul.f32 %v1195, %v1215
    %v1225 = vmul.f32 %v1196, %v1216
    %v1226 = vmul.f32 %v1197, %v1212
    %v1227 = vld [vmem:[#allocation2 + $0x8] sm:$0xf]
    %v1228 = vld [vmem:[#allocation2 + $0x10] sm:$0xf]
    %v1229 = vld [vmem:[#allocation2 + $0x18] sm:$0xf]
    %v1230 = vld [vmem:[#allocation2 + $0x20] sm:$0xf]
    %v1231 = vld [vmem:[#allocation2 + $0x28] sm:$0xf]
    %1232 = vset.pattern.permute.xlu0 28
    %1233 = vperm.xlu0 %1232, %v226
    %v1234 = vpop.permute.xlu0 %1233
    %v1236 = vmul.f32 %v1227, %v1234
    %v1237 = vmul.f32 %v1228, %v1234
    %v1238 = vmul.f32 %v1229, %v1234
    %v1239 = vmul.f32 %v1230, %v1234
    %v1240 = vmul.f32 %v1231, %v1234
    %v1241 = vld [vmem:[#allocation2 + $0x8] sm:$0xf0]
    %v1242 = vld [vmem:[#allocation2 + $0x10] sm:$0xf0]
    %v1243 = vld [vmem:[#allocation2 + $0x18] sm:$0xf0]
    %v1244 = vld [vmem:[#allocation2 + $0x20] sm:$0xf0]
    %v1245 = vld [vmem:[#allocation2 + $0x28] sm:$0xf0]
    %1246 = vset.pattern.permute.xlu0 29
    %1247 = vperm.xlu0 %1246, %v226
    %v1248 = vpop.permute.xlu0 %1247
    %v1249 = vrot.slane %v1248, 4
    %v1251 = vmul.f32 %v1241, %v1249
    %v1252 = vmul.f32 %v1242, %v1249
    %v1253 = vmul.f32 %v1243, %v1249
    %v1254 = vmul.f32 %v1244, %v1249
    %v1255 = vmul.f32 %v1245, %v1249
    %v1256 = vld [vmem:[#allocation2 + $0x38] sm:$0xf]
    %v1257 = vld [vmem:[#allocation2 + $0x40] sm:$0xf]
    %v1258 = vld [vmem:[#allocation2 + $0x48] sm:$0xf]
    %v1259 = vld [vmem:[#allocation2 + $0x50] sm:$0xf]
    %v1260 = vld [vmem:[#allocation2 + $0x58] sm:$0xf]
    %1261 = vset.pattern.permute.xlu0 30
    %1262 = vperm.xlu0 %1261, %v226
    %v1263 = vpop.permute.xlu0 %1262
    %v1265 = vmul.f32 %v1256, %v1263
    %v1266 = vmul.f32 %v1257, %v1263
    %v1267 = vmul.f32 %v1258, %v1263
    %v1268 = vmul.f32 %v1259, %v1263
    %v1269 = vmul.f32 %v1260, %v1263
    %v1270 = vld [vmem:[#allocation2 + $0x38] sm:$0xf0]
    %v1271 = vld [vmem:[#allocation2 + $0x40] sm:$0xf0]
    %v1272 = vld [vmem:[#allocation2 + $0x48] sm:$0xf0]
    %v1273 = vld [vmem:[#allocation2 + $0x50] sm:$0xf0]
    %v1274 = vld [vmem:[#allocation2 + $0x58] sm:$0xf0]
    %1275 = vset.pattern.permute.xlu0 31
    %1276 = vperm.xlu0 %1275, %v226
    %v1277 = vpop.permute.xlu0 %1276
    %v1278 = vrot.slane %v1277, 4
    %v1280 = vmul.f32 %v1270, %v1278
    %v1281 = vmul.f32 %v1271, %v1278
    %v1282 = vmul.f32 %v1272, %v1278
    %v1283 = vmul.f32 %v1273, %v1278
    %v1284 = vmul.f32 %v1274, %v1278
    %v1290 = vrot.slane %v1251, 4
    %v1291 = vrot.slane %v1252, 4
    %v1292 = vrot.slane %v1253, 4
    %v1293 = vrot.slane %v1254, 4
    %v1294 = vrot.slane %v1255, 4
    %v1300 = vadd.f32 %v1236, %v1290
    %v1301 = vadd.f32 %v1237, %v1291
    %v1302 = vadd.f32 %v1238, %v1292
    %v1303 = vadd.f32 %v1239, %v1293
    %v1304 = vadd.f32 %v1240, %v1294
    %v1310 = vrot.slane %v1280, 4
    %v1311 = vrot.slane %v1281, 4
    %v1312 = vrot.slane %v1282, 4
    %v1313 = vrot.slane %v1283, 4
    %v1314 = vrot.slane %v1284, 4
    %v1320 = vadd.f32 %v1265, %v1310
    %v1321 = vadd.f32 %v1266, %v1311
    %v1322 = vadd.f32 %v1267, %v1312
    %v1323 = vadd.f32 %v1268, %v1313
    %v1324 = vadd.f32 %v1269, %v1314
    %v1325 = vadd.f32 %v1300, %v1320
    %v1326 = vadd.f32 %v1301, %v1321
    %v1327 = vadd.f32 %v1302, %v1322
    %v1328 = vadd.f32 %v1303, %v1323
    %v1329 = vadd.f32 %v1304, %v1324
    %s1330 = scalar_lea.vmem [#allocation8], 112
    %v1331 = vld [vmem:[%s1330] sm:$0xff]
    %v1332 = vld [vmem:[%s1330 + $0x8] sm:$0xff]
    %v1335 = vcombine.high %v1331, %v1331
    %v1336 = vcombine.high %v1332, %v1332
    %1337 = vrot.lane.b32.xlu0 %v1331, 16
    %v1338 = vpop.permute.xlu0 %1337
    %1339 = vrot.lane.b32.xlu0 %v1335, 16
    %v1340 = vpop.permute.xlu0 %1339
    %1341 = vrot.lane.b32.xlu0 %v1332, 16
    %v1342 = vpop.permute.xlu0 %1341
    %1343 = vrot.lane.b32.xlu0 %v1336, 16
    %v1344 = vpop.permute.xlu0 %1343
    %vm1345 = vcmask 130048
    %v1346 = vsel %vm1345, %v1338, %v1340
    %v1347 = vsel %vm1345, %v1340, %v1342
    %v1348 = vsel %vm1345, %v1342, %v1344
    %v1354 = vmul.f32 %v1325, %v1338
    %v1355 = vmul.f32 %v1326, %v1346
    %v1356 = vmul.f32 %v1327, %v1347
    %v1357 = vmul.f32 %v1328, %v1348
    %v1358 = vmul.f32 %v1329, %v1344
    %1364 = vrot.lane.b32.xlu0 %v1354, 127
    %v1365 = vpop.permute.xlu0 %1364
    %1366 = vrot.lane.b32.xlu0 %v1355, 127
    %v1367 = vpop.permute.xlu0 %1366
    %1368 = vrot.lane.b32.xlu0 %v1356, 127
    %v1369 = vpop.permute.xlu0 %1368
    %1370 = vrot.lane.b32.xlu0 %v1357, 127
    %v1371 = vpop.permute.xlu0 %1370
    %1372 = vrot.lane.b32.xlu0 %v1358, 127
    %v1373 = vpop.permute.xlu0 %1372
    %v1374 = vsel %vm510, %v1365, %v1367
    %v1375 = vsel %vm510, %v1367, %v1369
    %v1376 = vsel %vm510, %v1369, %v1371
    %v1377 = vsel %vm510, %v1371, %v1373
    %v1383 = vadd.f32 %v1222, %v1374
    %v1384 = vadd.f32 %v1223, %v1375
    %v1385 = vadd.f32 %v1224, %v1376
    %v1386 = vadd.f32 %v1225, %v1377
    %v1387 = vadd.f32 %v1226, %v1373
    %v1388 = vld [vmem:[#allocation2 + $0x8] sm:$0xf]
    %v1389 = vld [vmem:[#allocation2 + $0x10] sm:$0xf]
    %v1390 = vld [vmem:[#allocation2 + $0x18] sm:$0xf]
    %v1391 = vld [vmem:[#allocation2 + $0x20] sm:$0xf]
    %v1392 = vld [vmem:[#allocation2 + $0x28] sm:$0xf]
    %1393 = vset.pattern.permute.xlu0 32
    %1394 = vperm.xlu0 %1393, %v226
    %v1395 = vpop.permute.xlu0 %1394
    %v1397 = vmul.f32 %v1388, %v1395
    %v1398 = vmul.f32 %v1389, %v1395
    %v1399 = vmul.f32 %v1390, %v1395
    %v1400 = vmul.f32 %v1391, %v1395
    %v1401 = vmul.f32 %v1392, %v1395
    %v1402 = vld [vmem:[#allocation2 + $0x8] sm:$0xf0]
    %v1403 = vld [vmem:[#allocation2 + $0x10] sm:$0xf0]
    %v1404 = vld [vmem:[#allocation2 + $0x18] sm:$0xf0]
    %v1405 = vld [vmem:[#allocation2 + $0x20] sm:$0xf0]
    %v1406 = vld [vmem:[#allocation2 + $0x28] sm:$0xf0]
    %1407 = vset.pattern.permute.xlu0 33
    %1408 = vperm.xlu0 %1407, %v226
    %v1409 = vpop.permute.xlu0 %1408
    %v1410 = vrot.slane %v1409, 4
    %v1412 = vmul.f32 %v1402, %v1410
    %v1413 = vmul.f32 %v1403, %v1410
    %v1414 = vmul.f32 %v1404, %v1410
    %v1415 = vmul.f32 %v1405, %v1410
    %v1416 = vmul.f32 %v1406, %v1410
    %v1417 = vld [vmem:[#allocation2 + $0x38] sm:$0xf]
    %v1418 = vld [vmem:[#allocation2 + $0x40] sm:$0xf]
    %v1419 = vld [vmem:[#allocation2 + $0x48] sm:$0xf]
    %v1420 = vld [vmem:[#allocation2 + $0x50] sm:$0xf]
    %v1421 = vld [vmem:[#allocation2 + $0x58] sm:$0xf]
    %1422 = vset.pattern.permute.xlu0 34
    %1423 = vperm.xlu0 %1422, %v226
    %v1424 = vpop.permute.xlu0 %1423
    %v1426 = vmul.f32 %v1417, %v1424
    %v1427 = vmul.f32 %v1418, %v1424
    %v1428 = vmul.f32 %v1419, %v1424
    %v1429 = vmul.f32 %v1420, %v1424
    %v1430 = vmul.f32 %v1421, %v1424
    %v1431 = vld [vmem:[#allocation2 + $0x38] sm:$0xf0]
    %v1432 = vld [vmem:[#allocation2 + $0x40] sm:$0xf0]
    %v1433 = vld [vmem:[#allocation2 + $0x48] sm:$0xf0]
    %v1434 = vld [vmem:[#allocation2 + $0x50] sm:$0xf0]
    %v1435 = vld [vmem:[#allocation2 + $0x58] sm:$0xf0]
    %1436 = vset.pattern.permute.xlu0 35
    %1437 = vperm.xlu0 %1436, %v226
    %v1438 = vpop.permute.xlu0 %1437
    %v1439 = vrot.slane %v1438, 4
    %v1441 = vmul.f32 %v1431, %v1439
    %v1442 = vmul.f32 %v1432, %v1439
    %v1443 = vmul.f32 %v1433, %v1439
    %v1444 = vmul.f32 %v1434, %v1439
    %v1445 = vmul.f32 %v1435, %v1439
    %v1451 = vrot.slane %v1412, 4
    %v1452 = vrot.slane %v1413, 4
    %v1453 = vrot.slane %v1414, 4
    %v1454 = vrot.slane %v1415, 4
    %v1455 = vrot.slane %v1416, 4
    %v1461 = vadd.f32 %v1397, %v1451
    %v1462 = vadd.f32 %v1398, %v1452
    %v1463 = vadd.f32 %v1399, %v1453
    %v1464 = vadd.f32 %v1400, %v1454
    %v1465 = vadd.f32 %v1401, %v1455
    %v1471 = vrot.slane %v1441, 4
    %v1472 = vrot.slane %v1442, 4
    %v1473 = vrot.slane %v1443, 4
    %v1474 = vrot.slane %v1444, 4
    %v1475 = vrot.slane %v1445, 4
    %v1481 = vadd.f32 %v1426, %v1471
    %v1482 = vadd.f32 %v1427, %v1472
    %v1483 = vadd.f32 %v1428, %v1473
    %v1484 = vadd.f32 %v1429, %v1474
    %v1485 = vadd.f32 %v1430, %v1475
    %v1486 = vadd.f32 %v1461, %v1481
    %v1487 = vadd.f32 %v1462, %v1482
    %v1488 = vadd.f32 %v1463, %v1483
    %v1489 = vadd.f32 %v1464, %v1484
    %v1490 = vadd.f32 %v1465, %v1485
    %s1491 = scalar_lea.vmem [#allocation8], 128
    %v1492 = vld [vmem:[%s1491] sm:$0xff]
    %v1493 = vld [vmem:[%s1491 + $0x8] sm:$0xff]
    %v1496 = vcombine.high %v1492, %v1492
    %v1497 = vcombine.high %v1493, %v1493
    %1498 = vrot.lane.b32.xlu0 %v1492, 17
    %v1499 = vpop.permute.xlu0 %1498
    %1500 = vrot.lane.b32.xlu0 %v1496, 17
    %v1501 = vpop.permute.xlu0 %1500
    %1502 = vrot.lane.b32.xlu0 %v1493, 17
    %v1503 = vpop.permute.xlu0 %1502
    %1504 = vrot.lane.b32.xlu0 %v1497, 17
    %v1505 = vpop.permute.xlu0 %1504
    %vm1506 = vcmask 138240
    %v1507 = vsel %vm1506, %v1499, %v1501
    %v1508 = vsel %vm1506, %v1501, %v1503
    %v1509 = vsel %vm1506, %v1503, %v1505
    %v1515 = vmul.f32 %v1486, %v1499
    %v1516 = vmul.f32 %v1487, %v1507
    %v1517 = vmul.f32 %v1488, %v1508
    %v1518 = vmul.f32 %v1489, %v1509
    %v1519 = vmul.f32 %v1490, %v1505
    %1525 = vrot.lane.b32.xlu0 %v1515, 126
    %v1526 = vpop.permute.xlu0 %1525
    %1527 = vrot.lane.b32.xlu0 %v1516, 126
    %v1528 = vpop.permute.xlu0 %1527
    %1529 = vrot.lane.b32.xlu0 %v1517, 126
    %v1530 = vpop.permute.xlu0 %1529
    %1531 = vrot.lane.b32.xlu0 %v1518, 126
    %v1532 = vpop.permute.xlu0 %1531
    %1533 = vrot.lane.b32.xlu0 %v1519, 126
    %v1534 = vpop.permute.xlu0 %1533
    %v1535 = vsel %vm672, %v1526, %v1528
    %v1536 = vsel %vm672, %v1528, %v1530
    %v1537 = vsel %vm672, %v1530, %v1532
    %v1538 = vsel %vm672, %v1532, %v1534
    %v1544 = vadd.f32 %v1383, %v1535
    %v1545 = vadd.f32 %v1384, %v1536
    %v1546 = vadd.f32 %v1385, %v1537
    %v1547 = vadd.f32 %v1386, %v1538
    %v1548 = vadd.f32 %v1387, %v1534
    %1554 = vrot.lane.b32.xlu0 %v1090, 112
    %v1555 = vpop.permute.xlu0 %1554
    %1556 = vrot.lane.b32.xlu0 %v1091, 112
    %v1557 = vpop.permute.xlu0 %1556
    %1558 = vrot.lane.b32.xlu0 %v1092, 112
    %v1559 = vpop.permute.xlu0 %1558
    %1560 = vrot.lane.b32.xlu0 %v1093, 112
    %v1561 = vpop.permute.xlu0 %1560
    %1562 = vrot.lane.b32.xlu0 %v1094, 112
    %v1563 = vpop.permute.xlu0 %1562
    %v1564 = vsel %vm481, %v1555, %v1557
    %v1565 = vsel %vm481, %v1557, %v1559
    %v1566 = vsel %vm481, %v1559, %v1561
    %v1567 = vsel %vm481, %v1561, %v1563
    %v1573 = vadd.f32 %v682, %v1564
    %v1574 = vadd.f32 %v683, %v1565
    %v1575 = vadd.f32 %v684, %v1566
    %v1576 = vadd.f32 %v685, %v1567
    %v1577 = vadd.f32 %v686, %v1563
    %1583 = vrot.lane.b32.xlu0 %v1544, 96
    %v1584 = vpop.permute.xlu0 %1583
    %1585 = vrot.lane.b32.xlu0 %v1545, 96
    %v1586 = vpop.permute.xlu0 %1585
    %1587 = vrot.lane.b32.xlu0 %v1546, 96
    %v1588 = vpop.permute.xlu0 %1587
    %1589 = vrot.lane.b32.xlu0 %v1547, 96
    %v1590 = vpop.permute.xlu0 %1589
    %1591 = vrot.lane.b32.xlu0 %v1548, 96
    %v1592 = vpop.permute.xlu0 %1591
    %vm1593 = vcmask 785408
    %v1594 = vsel %vm1593, %v1584, %v1586
    %v1595 = vsel %vm1593, %v1586, %v1588
    %v1596 = vsel %vm1593, %v1588, %v1590
    %v1597 = vsel %vm1593, %v1590, %v1592
    %v1603 = vadd.f32 %v1573, %v1584
    %v1604 = vadd.f32 %v1574, %v1594
    %v1605 = vadd.f32 %v1575, %v1595
    %v1606 = vadd.f32 %v1576, %v1596
    %v1607 = vadd.f32 %v1577, %v1597
    %v1608 = vmax.f32 %v1603, 0.0
    %v1609 = vmax.f32 %v1604, 0.0
    %v1610 = vmax.f32 %v1605, 0.0
    %v1611 = vmax.f32 %v1606, 0.0
    %v1612 = vmax.f32 %v1607, 0.0
    %v1613 = vlaneseq
    %v1614 = vshrl.u32 %v1613, 7
    %v1615 = vsub.s32 0, %v1614
    %v1616 = vrot.slane %v1608, %v1615
    %v1617 = vlaneseq
    %v1618 = vshrl.u32 %v1617, 7
    %v1619 = vsub.s32 0, %v1618
    %v1620 = vrot.slane %v1609, %v1619
    %v1621 = vlaneseq
    %v1622 = vshrl.u32 %v1621, 7
    %v1623 = vsub.s32 0, %v1622
    %v1624 = vrot.slane %v1610, %v1623
    %v1625 = vlaneseq
    %v1626 = vshrl.u32 %v1625, 7
    %v1627 = vsub.s32 0, %v1626
    %v1628 = vrot.slane %v1611, %v1627
    %v1629 = vlaneseq
    %v1630 = vshrl.u32 %v1629, 7
    %v1631 = vsub.s32 0, %v1630
    %v1632 = vrot.slane %v1612, %v1631
    %v1633 = vlaneseq
    %v1634 = vshrl.u32 %v1633, 7
    %v1635 = vsub.s32 1, %v1634
    %v1636 = vrot.slane %v1608, %v1635
    %v1637 = vlaneseq
    %v1638 = vshrl.u32 %v1637, 7
    %v1639 = vsub.s32 1, %v1638
    %v1640 = vrot.slane %v1609, %v1639
    %v1641 = vlaneseq
    %v1642 = vshrl.u32 %v1641, 7
    %v1643 = vsub.s32 1, %v1642
    %v1644 = vrot.slane %v1610, %v1643
    %v1645 = vlaneseq
    %v1646 = vshrl.u32 %v1645, 7
    %v1647 = vsub.s32 1, %v1646
    %v1648 = vrot.slane %v1611, %v1647
    %v1649 = vlaneseq
    %v1650 = vshrl.u32 %v1649, 7
    %v1651 = vsub.s32 1, %v1650
    %v1652 = vrot.slane %v1612, %v1651
    %v1653 = vlaneseq
    %v1654 = vshrl.u32 %v1653, 7
    %v1655 = vsub.s32 2, %v1654
    %v1656 = vrot.slane %v1608, %v1655
    %v1657 = vlaneseq
    %v1658 = vshrl.u32 %v1657, 7
    %v1659 = vsub.s32 2, %v1658
    %v1660 = vrot.slane %v1609, %v1659
    %v1661 = vlaneseq
    %v1662 = vshrl.u32 %v1661, 7
    %v1663 = vsub.s32 2, %v1662
    %v1664 = vrot.slane %v1610, %v1663
    %v1665 = vlaneseq
    %v1666 = vshrl.u32 %v1665, 7
    %v1667 = vsub.s32 2, %v1666
    %v1668 = vrot.slane %v1611, %v1667
    %v1669 = vlaneseq
    %v1670 = vshrl.u32 %v1669, 7
    %v1671 = vsub.s32 2, %v1670
    %v1672 = vrot.slane %v1612, %v1671
    %v1673 = vlaneseq
    %v1674 = vshrl.u32 %v1673, 7
    %v1675 = vsub.s32 3, %v1674
    %v1676 = vrot.slane %v1608, %v1675
    %v1677 = vlaneseq
    %v1678 = vshrl.u32 %v1677, 7
    %v1679 = vsub.s32 3, %v1678
    %v1680 = vrot.slane %v1609, %v1679
    %v1681 = vlaneseq
    %v1682 = vshrl.u32 %v1681, 7
    %v1683 = vsub.s32 3, %v1682
    %v1684 = vrot.slane %v1610, %v1683
    %v1685 = vlaneseq
    %v1686 = vshrl.u32 %v1685, 7
    %v1687 = vsub.s32 3, %v1686
    %v1688 = vrot.slane %v1611, %v1687
    %v1689 = vlaneseq
    %v1690 = vshrl.u32 %v1689, 7
    %v1691 = vsub.s32 3, %v1690
    %v1692 = vrot.slane %v1612, %v1691
    %v1693 = vsel %vm134, %v1616, %v1636
    %v1694 = vsel %vm134, %v1620, %v1640
    %v1695 = vsel %vm134, %v1624, %v1644
    %v1696 = vsel %vm134, %v1628, %v1648
    %v1697 = vsel %vm134, %v1632, %v1652
    %v1698 = vsel %vm134, %v1656, %v1676
    %v1699 = vsel %vm134, %v1660, %v1680
    %v1700 = vsel %vm134, %v1664, %v1684
    %v1701 = vsel %vm134, %v1668, %v1688
    %v1702 = vsel %vm134, %v1672, %v1692
    %1713 = vrot.lane.b32.xlu0 %v1693, 17
    %v1714 = vpop.permute.xlu0 %1713
    %1715 = vrot.lane.b32.xlu0 %v1694, 17
    %v1716 = vpop.permute.xlu0 %1715
    %1717 = vrot.lane.b32.xlu0 %v1695, 17
    %v1718 = vpop.permute.xlu0 %1717
    %1719 = vrot.lane.b32.xlu0 %v1696, 17
    %v1720 = vpop.permute.xlu0 %1719
    %1721 = vrot.lane.b32.xlu0 %v1697, 17
    %v1722 = vpop.permute.xlu0 %1721
    %1723 = vrot.lane.b32.xlu0 %v1698, 17
    %v1724 = vpop.permute.xlu0 %1723
    %1725 = vrot.lane.b32.xlu0 %v1699, 17
    %v1726 = vpop.permute.xlu0 %1725
    %1727 = vrot.lane.b32.xlu0 %v1700, 17
    %v1728 = vpop.permute.xlu0 %1727
    %1729 = vrot.lane.b32.xlu0 %v1701, 17
    %v1730 = vpop.permute.xlu0 %1729
    %1731 = vrot.lane.b32.xlu0 %v1702, 17
    %v1732 = vpop.permute.xlu0 %1731
    %v1733 = vsel %vm1506, %v1714, %v1716
    %v1734 = vsel %vm1506, %v1716, %v1718
    %v1735 = vsel %vm1506, %v1718, %v1720
    %v1736 = vsel %vm1506, %v1720, %v1722
    %v1737 = vsel %vm1506, %v1724, %v1726
    %v1738 = vsel %vm1506, %v1726, %v1728
    %v1739 = vsel %vm1506, %v1728, %v1730
    %v1740 = vsel %vm1506, %v1730, %v1732
    %1749 = vst [vmem:[#allocation2 + $0x8] sm:$0xff] %v1733
    %1750 = vst [vmem:[#allocation2 + $0x10] sm:$0xff] %v1734
    %1751 = vst [vmem:[#allocation2 + $0x18] sm:$0xff] %v1735
    %1752 = vst [vmem:[#allocation2 + $0x20] sm:$0xff] %v1736
    %1753 = vst [vmem:[#allocation2 + $0x38] sm:$0xff] %v1737
    %1754 = vst [vmem:[#allocation2 + $0x40] sm:$0xff] %v1738
    %1755 = vst [vmem:[#allocation2 + $0x48] sm:$0xff] %v1739
    %1756 = vst [vmem:[#allocation2 + $0x50] sm:$0xff] %v1740
    %s1757 = scalar_lea.vmem [#allocation6], 4
    %v1758 = vld [vmem:[%s1757] sm:$0xf]
    %1760 = vset.pattern.permute.xlu0 36
    %1761 = vperm.xlu0 %1760, %v1758
    %v1762 = vpop.permute.xlu0 %1761
    %v1764 = vld [vmem:[#allocation2] sm:$0xf]
    %v1765 = vld [vmem:[#allocation2 + $0x8] sm:$0xf]
    %v1766 = vld [vmem:[#allocation2 + $0x10] sm:$0xf]
    %v1767 = vld [vmem:[#allocation2 + $0x18] sm:$0xf]
    %v1768 = vld [vmem:[#allocation2 + $0x20] sm:$0xf]
    %1769 = vset.pattern.permute.xlu0 0
    %1770 = vperm.xlu0 %1769, %v1758
    %v1771 = vpop.permute.xlu0 %1770
    %v1773 = vmul.f32 %v1764, %v1771
    %v1774 = vmul.f32 %v1765, %v1771
    %v1775 = vmul.f32 %v1766, %v1771
    %v1776 = vmul.f32 %v1767, %v1771
    %v1777 = vmul.f32 %v1768, %v1771
    %v1778 = vld [vmem:[#allocation2] sm:$0xf0]
    %v1779 = vld [vmem:[#allocation2 + $0x8] sm:$0xf0]
    %v1780 = vld [vmem:[#allocation2 + $0x10] sm:$0xf0]
    %v1781 = vld [vmem:[#allocation2 + $0x18] sm:$0xf0]
    %v1782 = vld [vmem:[#allocation2 + $0x20] sm:$0xf0]
    %1783 = vset.pattern.permute.xlu0 1
    %1784 = vperm.xlu0 %1783, %v1758
    %v1785 = vpop.permute.xlu0 %1784
    %v1786 = vrot.slane %v1785, 4
    %v1788 = vmul.f32 %v1778, %v1786
    %v1789 = vmul.f32 %v1779, %v1786
    %v1790 = vmul.f32 %v1780, %v1786
    %v1791 = vmul.f32 %v1781, %v1786
    %v1792 = vmul.f32 %v1782, %v1786
    %v1793 = vld [vmem:[#allocation2 + $0x30] sm:$0xf]
    %v1794 = vld [vmem:[#allocation2 + $0x38] sm:$0xf]
    %v1795 = vld [vmem:[#allocation2 + $0x40] sm:$0xf]
    %v1796 = vld [vmem:[#allocation2 + $0x48] sm:$0xf]
    %v1797 = vld [vmem:[#allocation2 + $0x50] sm:$0xf]
    %1798 = vset.pattern.permute.xlu0 2
    %1799 = vperm.xlu0 %1798, %v1758
    %v1800 = vpop.permute.xlu0 %1799
    %v1802 = vmul.f32 %v1793, %v1800
    %v1803 = vmul.f32 %v1794, %v1800
    %v1804 = vmul.f32 %v1795, %v1800
    %v1805 = vmul.f32 %v1796, %v1800
    %v1806 = vmul.f32 %v1797, %v1800
    %v1807 = vld [vmem:[#allocation2 + $0x30] sm:$0xf0]
    %v1808 = vld [vmem:[#allocation2 + $0x38] sm:$0xf0]
    %v1809 = vld [vmem:[#allocation2 + $0x40] sm:$0xf0]
    %v1810 = vld [vmem:[#allocation2 + $0x48] sm:$0xf0]
    %v1811 = vld [vmem:[#allocation2 + $0x50] sm:$0xf0]
    %1812 = vset.pattern.permute.xlu0 3
    %1813 = vperm.xlu0 %1812, %v1758
    %v1814 = vpop.permute.xlu0 %1813
    %v1815 = vrot.slane %v1814, 4
    %v1817 = vmul.f32 %v1807, %v1815
    %v1818 = vmul.f32 %v1808, %v1815
    %v1819 = vmul.f32 %v1809, %v1815
    %v1820 = vmul.f32 %v1810, %v1815
    %v1821 = vmul.f32 %v1811, %v1815
    %v1827 = vrot.slane %v1788, 4
    %v1828 = vrot.slane %v1789, 4
    %v1829 = vrot.slane %v1790, 4
    %v1830 = vrot.slane %v1791, 4
    %v1831 = vrot.slane %v1792, 4
    %v1837 = vadd.f32 %v1773, %v1827
    %v1838 = vadd.f32 %v1774, %v1828
    %v1839 = vadd.f32 %v1775, %v1829
    %v1840 = vadd.f32 %v1776, %v1830
    %v1841 = vadd.f32 %v1777, %v1831
    %v1847 = vrot.slane %v1817, 4
    %v1848 = vrot.slane %v1818, 4
    %v1849 = vrot.slane %v1819, 4
    %v1850 = vrot.slane %v1820, 4
    %v1851 = vrot.slane %v1821, 4
    %v1857 = vadd.f32 %v1802, %v1847
    %v1858 = vadd.f32 %v1803, %v1848
    %v1859 = vadd.f32 %v1804, %v1849
    %v1860 = vadd.f32 %v1805, %v1850
    %v1861 = vadd.f32 %v1806, %v1851
    %v1862 = vadd.f32 %v1837, %v1857
    %v1863 = vadd.f32 %v1838, %v1858
    %v1864 = vadd.f32 %v1839, %v1859
    %v1865 = vadd.f32 %v1840, %v1860
    %v1866 = vadd.f32 %v1841, %v1861
    %v1867 = vld [vmem:[#allocation8] sm:$0xff]
    %v1868 = vld [vmem:[#allocation8 + $0x8] sm:$0xff]
    %v1871 = vcombine.high %v1867, %v1867
    %v1872 = vcombine.high %v1868, %v1868
    %1873 = vrot.lane.b32.xlu0 %v1867, 111
    %v1874 = vpop.permute.xlu0 %1873
    %1875 = vrot.lane.b32.xlu0 %v1871, 111
    %v1876 = vpop.permute.xlu0 %1875
    %1877 = vrot.lane.b32.xlu0 %v1868, 111
    %v1878 = vpop.permute.xlu0 %1877
    %1879 = vrot.lane.b32.xlu0 %v1872, 111
    %v1880 = vpop.permute.xlu0 %1879
    %v1881 = vsel %vm349, %v1874, %v1876
    %v1882 = vsel %vm349, %v1876, %v1878
    %v1883 = vsel %vm349, %v1878, %v1880
    %v1889 = vmul.f32 %v1862, %v1874
    %v1890 = vmul.f32 %v1863, %v1881
    %v1891 = vmul.f32 %v1864, %v1882
    %v1892 = vmul.f32 %v1865, %v1883
    %v1893 = vmul.f32 %v1866, %v1880
    %v1894 = vld [vmem:[#allocation2] sm:$0xf]
    %v1895 = vld [vmem:[#allocation2 + $0x8] sm:$0xf]
    %v1896 = vld [vmem:[#allocation2 + $0x10] sm:$0xf]
    %v1897 = vld [vmem:[#allocation2 + $0x18] sm:$0xf]
    %v1898 = vld [vmem:[#allocation2 + $0x20] sm:$0xf]
    %1899 = vset.pattern.permute.xlu0 4
    %1900 = vperm.xlu0 %1899, %v1758
    %v1901 = vpop.permute.xlu0 %1900
    %v1903 = vmul.f32 %v1894, %v1901
    %v1904 = vmul.f32 %v1895, %v1901
    %v1905 = vmul.f32 %v1896, %v1901
    %v1906 = vmul.f32 %v1897, %v1901
    %v1907 = vmul.f32 %v1898, %v1901
    %v1908 = vld [vmem:[#allocation2] sm:$0xf0]
    %v1909 = vld [vmem:[#allocation2 + $0x8] sm:$0xf0]
    %v1910 = vld [vmem:[#allocation2 + $0x10] sm:$0xf0]
    %v1911 = vld [vmem:[#allocation2 + $0x18] sm:$0xf0]
    %v1912 = vld [vmem:[#allocation2 + $0x20] sm:$0xf0]
    %1913 = vset.pattern.permute.xlu0 5
    %1914 = vperm.xlu0 %1913, %v1758
    %v1915 = vpop.permute.xlu0 %1914
    %v1916 = vrot.slane %v1915, 4
    %v1918 = vmul.f32 %v1908, %v1916
    %v1919 = vmul.f32 %v1909, %v1916
    %v1920 = vmul.f32 %v1910, %v1916
    %v1921 = vmul.f32 %v1911, %v1916
    %v1922 = vmul.f32 %v1912, %v1916
    %v1923 = vld [vmem:[#allocation2 + $0x30] sm:$0xf]
    %v1924 = vld [vmem:[#allocation2 + $0x38] sm:$0xf]
    %v1925 = vld [vmem:[#allocation2 + $0x40] sm:$0xf]
    %v1926 = vld [vmem:[#allocation2 + $0x48] sm:$0xf]
    %v1927 = vld [vmem:[#allocation2 + $0x50] sm:$0xf]
    %1928 = vset.pattern.permute.xlu0 6
    %1929 = vperm.xlu0 %1928, %v1758
    %v1930 = vpop.permute.xlu0 %1929
    %v1932 = vmul.f32 %v1923, %v1930
    %v1933 = vmul.f32 %v1924, %v1930
    %v1934 = vmul.f32 %v1925, %v1930
    %v1935 = vmul.f32 %v1926, %v1930
    %v1936 = vmul.f32 %v1927, %v1930
    %v1937 = vld [vmem:[#allocation2 + $0x30] sm:$0xf0]
    %v1938 = vld [vmem:[#allocation2 + $0x38] sm:$0xf0]
    %v1939 = vld [vmem:[#allocation2 + $0x40] sm:$0xf0]
    %v1940 = vld [vmem:[#allocation2 + $0x48] sm:$0xf0]
    %v1941 = vld [vmem:[#allocation2 + $0x50] sm:$0xf0]
    %1942 = vset.pattern.permute.xlu0 7
    %1943 = vperm.xlu0 %1942, %v1758
    %v1944 = vpop.permute.xlu0 %1943
    %v1945 = vrot.slane %v1944, 4
    %v1947 = vmul.f32 %v1937, %v1945
    %v1948 = vmul.f32 %v1938, %v1945
    %v1949 = vmul.f32 %v1939, %v1945
    %v1950 = vmul.f32 %v1940, %v1945
    %v1951 = vmul.f32 %v1941, %v1945
    %v1957 = vrot.slane %v1918, 4
    %v1958 = vrot.slane %v1919, 4
    %v1959 = vrot.slane %v1920, 4
    %v1960 = vrot.slane %v1921, 4
    %v1961 = vrot.slane %v1922, 4
    %v1967 = vadd.f32 %v1903, %v1957
    %v1968 = vadd.f32 %v1904, %v1958
    %v1969 = vadd.f32 %v1905, %v1959
    %v1970 = vadd.f32 %v1906, %v1960
    %v1971 = vadd.f32 %v1907, %v1961
    %v1977 = vrot.slane %v1947, 4
    %v1978 = vrot.slane %v1948, 4
    %v1979 = vrot.slane %v1949, 4
    %v1980 = vrot.slane %v1950, 4
    %v1981 = vrot.slane %v1951, 4
    %v1987 = vadd.f32 %v1932, %v1977
    %v1988 = vadd.f32 %v1933, %v1978
    %v1989 = vadd.f32 %v1934, %v1979
    %v1990 = vadd.f32 %v1935, %v1980
    %v1991 = vadd.f32 %v1936, %v1981
    %v1992 = vadd.f32 %v1967, %v1987
    %v1993 = vadd.f32 %v1968, %v1988
    %v1994 = vadd.f32 %v1969, %v1989
    %v1995 = vadd.f32 %v1970, %v1990
    %v1996 = vadd.f32 %v1971, %v1991
    %v1997 = vld [vmem:[%s466] sm:$0xff]
    %v1998 = vld [vmem:[%s466 + $0x8] sm:$0xff]
    %v2001 = vcombine.high %v1997, %v1997
    %v2002 = vcombine.high %v1998, %v1998
    %2003 = vrot.lane.b32.xlu0 %v1997, 112
    %v2004 = vpop.permute.xlu0 %2003
    %2005 = vrot.lane.b32.xlu0 %v2001, 112
    %v2006 = vpop.permute.xlu0 %2005
    %2007 = vrot.lane.b32.xlu0 %v1998, 112
    %v2008 = vpop.permute.xlu0 %2007
    %2009 = vrot.lane.b32.xlu0 %v2002, 112
    %v2010 = vpop.permute.xlu0 %2009
    %v2011 = vsel %vm481, %v2004, %v2006
    %v2012 = vsel %vm481, %v2006, %v2008
    %v2013 = vsel %vm481, %v2008, %v2010
    %v2019 = vmul.f32 %v1992, %v2004
    %v2020 = vmul.f32 %v1993, %v2011
    %v2021 = vmul.f32 %v1994, %v2012
    %v2022 = vmul.f32 %v1995, %v2013
    %v2023 = vmul.f32 %v1996, %v2010
    %2029 = vrot.lane.b32.xlu0 %v2019, 127
    %v2030 = vpop.permute.xlu0 %2029
    %2031 = vrot.lane.b32.xlu0 %v2020, 127
    %v2032 = vpop.permute.xlu0 %2031
    %2033 = vrot.lane.b32.xlu0 %v2021, 127
    %v2034 = vpop.permute.xlu0 %2033
    %2035 = vrot.lane.b32.xlu0 %v2022, 127
    %v2036 = vpop.permute.xlu0 %2035
    %2037 = vrot.lane.b32.xlu0 %v2023, 127
    %v2038 = vpop.permute.xlu0 %2037
    %v2039 = vsel %vm510, %v2030, %v2032
    %v2040 = vsel %vm510, %v2032, %v2034
    %v2041 = vsel %vm510, %v2034, %v2036
    %v2042 = vsel %vm510, %v2036, %v2038
    %v2048 = vadd.f32 %v1889, %v2039
    %v2049 = vadd.f32 %v1890, %v2040
    %v2050 = vadd.f32 %v1891, %v2041
    %v2051 = vadd.f32 %v1892, %v2042
    %v2052 = vadd.f32 %v1893, %v2038
    %v2053 = vld [vmem:[#allocation2] sm:$0xf]
    %v2054 = vld [vmem:[#allocation2 + $0x8] sm:$0xf]
    %v2055 = vld [vmem:[#allocation2 + $0x10] sm:$0xf]
    %v2056 = vld [vmem:[#allocation2 + $0x18] sm:$0xf]
    %v2057 = vld [vmem:[#allocation2 + $0x20] sm:$0xf]
    %2058 = vset.pattern.permute.xlu0 8
    %2059 = vperm.xlu0 %2058, %v1758
    %v2060 = vpop.permute.xlu0 %2059
    %v2062 = vmul.f32 %v2053, %v2060
    %v2063 = vmul.f32 %v2054, %v2060
    %v2064 = vmul.f32 %v2055, %v2060
    %v2065 = vmul.f32 %v2056, %v2060
    %v2066 = vmul.f32 %v2057, %v2060
    %v2067 = vld [vmem:[#allocation2] sm:$0xf0]
    %v2068 = vld [vmem:[#allocation2 + $0x8] sm:$0xf0]
    %v2069 = vld [vmem:[#allocation2 + $0x10] sm:$0xf0]
    %v2070 = vld [vmem:[#allocation2 + $0x18] sm:$0xf0]
    %v2071 = vld [vmem:[#allocation2 + $0x20] sm:$0xf0]
    %2072 = vset.pattern.permute.xlu0 9
    %2073 = vperm.xlu0 %2072, %v1758
    %v2074 = vpop.permute.xlu0 %2073
    %v2075 = vrot.slane %v2074, 4
    %v2077 = vmul.f32 %v2067, %v2075
    %v2078 = vmul.f32 %v2068, %v2075
    %v2079 = vmul.f32 %v2069, %v2075
    %v2080 = vmul.f32 %v2070, %v2075
    %v2081 = vmul.f32 %v2071, %v2075
    %v2082 = vld [vmem:[#allocation2 + $0x30] sm:$0xf]
    %v2083 = vld [vmem:[#allocation2 + $0x38] sm:$0xf]
    %v2084 = vld [vmem:[#allocation2 + $0x40] sm:$0xf]
    %v2085 = vld [vmem:[#allocation2 + $0x48] sm:$0xf]
    %v2086 = vld [vmem:[#allocation2 + $0x50] sm:$0xf]
    %2087 = vset.pattern.permute.xlu0 10
    %2088 = vperm.xlu0 %2087, %v1758
    %v2089 = vpop.permute.xlu0 %2088
    %v2091 = vmul.f32 %v2082, %v2089
    %v2092 = vmul.f32 %v2083, %v2089
    %v2093 = vmul.f32 %v2084, %v2089
    %v2094 = vmul.f32 %v2085, %v2089
    %v2095 = vmul.f32 %v2086, %v2089
    %v2096 = vld [vmem:[#allocation2 + $0x30] sm:$0xf0]
    %v2097 = vld [vmem:[#allocation2 + $0x38] sm:$0xf0]
    %v2098 = vld [vmem:[#allocation2 + $0x40] sm:$0xf0]
    %v2099 = vld [vmem:[#allocation2 + $0x48] sm:$0xf0]
    %v2100 = vld [vmem:[#allocation2 + $0x50] sm:$0xf0]
    %2101 = vset.pattern.permute.xlu0 11
    %2102 = vperm.xlu0 %2101, %v1758
    %v2103 = vpop.permute.xlu0 %2102
    %v2104 = vrot.slane %v2103, 4
    %v2106 = vmul.f32 %v2096, %v2104
    %v2107 = vmul.f32 %v2097, %v2104
    %v2108 = vmul.f32 %v2098, %v2104
    %v2109 = vmul.f32 %v2099, %v2104
    %v2110 = vmul.f32 %v2100, %v2104
    %v2116 = vrot.slane %v2077, 4
    %v2117 = vrot.slane %v2078, 4
    %v2118 = vrot.slane %v2079, 4
    %v2119 = vrot.slane %v2080, 4
    %v2120 = vrot.slane %v2081, 4
    %v2126 = vadd.f32 %v2062, %v2116
    %v2127 = vadd.f32 %v2063, %v2117
    %v2128 = vadd.f32 %v2064, %v2118
    %v2129 = vadd.f32 %v2065, %v2119
    %v2130 = vadd.f32 %v2066, %v2120
    %v2136 = vrot.slane %v2106, 4
    %v2137 = vrot.slane %v2107, 4
    %v2138 = vrot.slane %v2108, 4
    %v2139 = vrot.slane %v2109, 4
    %v2140 = vrot.slane %v2110, 4
    %v2146 = vadd.f32 %v2091, %v2136
    %v2147 = vadd.f32 %v2092, %v2137
    %v2148 = vadd.f32 %v2093, %v2138
    %v2149 = vadd.f32 %v2094, %v2139
    %v2150 = vadd.f32 %v2095, %v2140
    %v2151 = vadd.f32 %v2126, %v2146
    %v2152 = vadd.f32 %v2127, %v2147
    %v2153 = vadd.f32 %v2128, %v2148
    %v2154 = vadd.f32 %v2129, %v2149
    %v2155 = vadd.f32 %v2130, %v2150
    %v2156 = vld [vmem:[%s628] sm:$0xff]
    %v2157 = vld [vmem:[%s628 + $0x8] sm:$0xff]
    %v2160 = vcombine.high %v2156, %v2156
    %v2161 = vcombine.high %v2157, %v2157
    %2162 = vrot.lane.b32.xlu0 %v2156, 113
    %v2163 = vpop.permute.xlu0 %2162
    %2164 = vrot.lane.b32.xlu0 %v2160, 113
    %v2165 = vpop.permute.xlu0 %2164
    %2166 = vrot.lane.b32.xlu0 %v2157, 113
    %v2167 = vpop.permute.xlu0 %2166
    %2168 = vrot.lane.b32.xlu0 %v2161, 113
    %v2169 = vpop.permute.xlu0 %2168
    %v2170 = vsel %vm643, %v2163, %v2165
    %v2171 = vsel %vm643, %v2165, %v2167
    %v2172 = vsel %vm643, %v2167, %v2169
    %v2178 = vmul.f32 %v2151, %v2163
    %v2179 = vmul.f32 %v2152, %v2170
    %v2180 = vmul.f32 %v2153, %v2171
    %v2181 = vmul.f32 %v2154, %v2172
    %v2182 = vmul.f32 %v2155, %v2169
    %2188 = vrot.lane.b32.xlu0 %v2178, 126
    %v2189 = vpop.permute.xlu0 %2188
    %2190 = vrot.lane.b32.xlu0 %v2179, 126
    %v2191 = vpop.permute.xlu0 %2190
    %2192 = vrot.lane.b32.xlu0 %v2180, 126
    %v2193 = vpop.permute.xlu0 %2192
    %2194 = vrot.lane.b32.xlu0 %v2181, 126
    %v2195 = vpop.permute.xlu0 %2194
    %2196 = vrot.lane.b32.xlu0 %v2182, 126
    %v2197 = vpop.permute.xlu0 %2196
    %v2198 = vsel %vm672, %v2189, %v2191
    %v2199 = vsel %vm672, %v2191, %v2193
    %v2200 = vsel %vm672, %v2193, %v2195
    %v2201 = vsel %vm672, %v2195, %v2197
    %v2207 = vadd.f32 %v2048, %v2198
    %v2208 = vadd.f32 %v2049, %v2199
    %v2209 = vadd.f32 %v2050, %v2200
    %v2210 = vadd.f32 %v2051, %v2201
    %v2211 = vadd.f32 %v2052, %v2197
    %v2212 = vld [vmem:[#allocation2] sm:$0xf]
    %v2213 = vld [vmem:[#allocation2 + $0x8] sm:$0xf]
    %v2214 = vld [vmem:[#allocation2 + $0x10] sm:$0xf]
    %v2215 = vld [vmem:[#allocation2 + $0x18] sm:$0xf]
    %v2216 = vld [vmem:[#allocation2 + $0x20] sm:$0xf]
    %2217 = vset.pattern.permute.xlu0 12
    %2218 = vperm.xlu0 %2217, %v1758
    %v2219 = vpop.permute.xlu0 %2218
    %v2221 = vmul.f32 %v2212, %v2219
    %v2222 = vmul.f32 %v2213, %v2219
    %v2223 = vmul.f32 %v2214, %v2219
    %v2224 = vmul.f32 %v2215, %v2219
    %v2225 = vmul.f32 %v2216, %v2219
    %v2226 = vld [vmem:[#allocation2] sm:$0xf0]
    %v2227 = vld [vmem:[#allocation2 + $0x8] sm:$0xf0]
    %v2228 = vld [vmem:[#allocation2 + $0x10] sm:$0xf0]
    %v2229 = vld [vmem:[#allocation2 + $0x18] sm:$0xf0]
    %v2230 = vld [vmem:[#allocation2 + $0x20] sm:$0xf0]
    %2231 = vset.pattern.permute.xlu0 13
    %2232 = vperm.xlu0 %2231, %v1758
    %v2233 = vpop.permute.xlu0 %2232
    %v2234 = vrot.slane %v2233, 4
    %v2236 = vmul.f32 %v2226, %v2234
    %v2237 = vmul.f32 %v2227, %v2234
    %v2238 = vmul.f32 %v2228, %v2234
    %v2239 = vmul.f32 %v2229, %v2234
    %v2240 = vmul.f32 %v2230, %v2234
    %v2241 = vld [vmem:[#allocation2 + $0x30] sm:$0xf]
    %v2242 = vld [vmem:[#allocation2 + $0x38] sm:$0xf]
    %v2243 = vld [vmem:[#allocation2 + $0x40] sm:$0xf]
    %v2244 = vld [vmem:[#allocation2 + $0x48] sm:$0xf]
    %v2245 = vld [vmem:[#allocation2 + $0x50] sm:$0xf]
    %2246 = vset.pattern.permute.xlu0 14
    %2247 = vperm.xlu0 %2246, %v1758
    %v2248 = vpop.permute.xlu0 %2247
    %v2250 = vmul.f32 %v2241, %v2248
    %v2251 = vmul.f32 %v2242, %v2248
    %v2252 = vmul.f32 %v2243, %v2248
    %v2253 = vmul.f32 %v2244, %v2248
    %v2254 = vmul.f32 %v2245, %v2248
    %v2255 = vld [vmem:[#allocation2 + $0x30] sm:$0xf0]
    %v2256 = vld [vmem:[#allocation2 + $0x38] sm:$0xf0]
    %v2257 = vld [vmem:[#allocation2 + $0x40] sm:$0xf0]
    %v2258 = vld [vmem:[#allocation2 + $0x48] sm:$0xf0]
    %v2259 = vld [vmem:[#allocation2 + $0x50] sm:$0xf0]
    %2260 = vset.pattern.permute.xlu0 15
    %2261 = vperm.xlu0 %2260, %v1758
    %v2262 = vpop.permute.xlu0 %2261
    %v2263 = vrot.slane %v2262, 4
    %v2265 = vmul.f32 %v2255, %v2263
    %v2266 = vmul.f32 %v2256, %v2263
    %v2267 = vmul.f32 %v2257, %v2263
    %v2268 = vmul.f32 %v2258, %v2263
    %v2269 = vmul.f32 %v2259, %v2263
    %v2275 = vrot.slane %v2236, 4
    %v2276 = vrot.slane %v2237, 4
    %v2277 = vrot.slane %v2238, 4
    %v2278 = vrot.slane %v2239, 4
    %v2279 = vrot.slane %v2240, 4
    %v2285 = vadd.f32 %v2221, %v2275
    %v2286 = vadd.f32 %v2222, %v2276
    %v2287 = vadd.f32 %v2223, %v2277
    %v2288 = vadd.f32 %v2224, %v2278
    %v2289 = vadd.f32 %v2225, %v2279
    %v2295 = vrot.slane %v2265, 4
    %v2296 = vrot.slane %v2266, 4
    %v2297 = vrot.slane %v2267, 4
    %v2298 = vrot.slane %v2268, 4
    %v2299 = vrot.slane %v2269, 4
    %v2305 = vadd.f32 %v2250, %v2295
    %v2306 = vadd.f32 %v2251, %v2296
    %v2307 = vadd.f32 %v2252, %v2297
    %v2308 = vadd.f32 %v2253, %v2298
    %v2309 = vadd.f32 %v2254, %v2299
    %v2310 = vadd.f32 %v2285, %v2305
    %v2311 = vadd.f32 %v2286, %v2306
    %v2312 = vadd.f32 %v2287, %v2307
    %v2313 = vadd.f32 %v2288, %v2308
    %v2314 = vadd.f32 %v2289, %v2309
    %v2315 = vld [vmem:[%s790] sm:$0xff]
    %v2316 = vld [vmem:[%s790 + $0x8] sm:$0xff]
    %v2319 = vcombine.high %v2315, %v2315
    %v2320 = vcombine.high %v2316, %v2316
    %2321 = vrot.lane.b32.xlu0 %v2315, 127
    %v2322 = vpop.permute.xlu0 %2321
    %2323 = vrot.lane.b32.xlu0 %v2319, 127
    %v2324 = vpop.permute.xlu0 %2323
    %2325 = vrot.lane.b32.xlu0 %v2316, 127
    %v2326 = vpop.permute.xlu0 %2325
    %2327 = vrot.lane.b32.xlu0 %v2320, 127
    %v2328 = vpop.permute.xlu0 %2327
    %v2329 = vsel %vm510, %v2322, %v2324
    %v2330 = vsel %vm510, %v2324, %v2326
    %v2331 = vsel %vm510, %v2326, %v2328
    %v2337 = vmul.f32 %v2310, %v2322
    %v2338 = vmul.f32 %v2311, %v2329
    %v2339 = vmul.f32 %v2312, %v2330
    %v2340 = vmul.f32 %v2313, %v2331
    %v2341 = vmul.f32 %v2314, %v2328
    %v2342 = vadd.f32 %v1762, %v2337
    %v2343 = vadd.f32 %v1762, %v2338
    %v2344 = vadd.f32 %v1762, %v2339
    %v2345 = vadd.f32 %v1762, %v2340
    %v2346 = vadd.f32 %v1762, %v2341
    %v2347 = vld [vmem:[#allocation2 + $0x8] sm:$0xf]
    %v2348 = vld [vmem:[#allocation2 + $0x10] sm:$0xf]
    %v2349 = vld [vmem:[#allocation2 + $0x18] sm:$0xf]
    %v2350 = vld [vmem:[#allocation2 + $0x20] sm:$0xf]
    %2351 = vset.pattern.permute.xlu0 16
    %2352 = vperm.xlu0 %2351, %v1758
    %v2353 = vpop.permute.xlu0 %2352
    %v2355 = vmul.f32 %v2347, %v2353
    %v2356 = vmul.f32 %v2348, %v2353
    %v2357 = vmul.f32 %v2349, %v2353
    %v2358 = vmul.f32 %v2350, %v2353
    %v2359 = vld [vmem:[#allocation2 + $0x8] sm:$0xf0]
    %v2360 = vld [vmem:[#allocation2 + $0x10] sm:$0xf0]
    %v2361 = vld [vmem:[#allocation2 + $0x18] sm:$0xf0]
    %v2362 = vld [vmem:[#allocation2 + $0x20] sm:$0xf0]
    %2363 = vset.pattern.permute.xlu0 17
    %2364 = vperm.xlu0 %2363, %v1758
    %v2365 = vpop.permute.xlu0 %2364
    %v2366 = vrot.slane %v2365, 4
    %v2368 = vmul.f32 %v2359, %v2366
    %v2369 = vmul.f32 %v2360, %v2366
    %v2370 = vmul.f32 %v2361, %v2366
    %v2371 = vmul.f32 %v2362, %v2366
    %v2372 = vld [vmem:[#allocation2 + $0x38] sm:$0xf]
    %v2373 = vld [vmem:[#allocation2 + $0x40] sm:$0xf]
    %v2374 = vld [vmem:[#allocation2 + $0x48] sm:$0xf]
    %v2375 = vld [vmem:[#allocation2 + $0x50] sm:$0xf]
    %2376 = vset.pattern.permute.xlu0 18
    %2377 = vperm.xlu0 %2376, %v1758
    %v2378 = vpop.permute.xlu0 %2377
    %v2380 = vmul.f32 %v2372, %v2378
    %v2381 = vmul.f32 %v2373, %v2378
    %v2382 = vmul.f32 %v2374, %v2378
    %v2383 = vmul.f32 %v2375, %v2378
    %v2384 = vld [vmem:[#allocation2 + $0x38] sm:$0xf0]
    %v2385 = vld [vmem:[#allocation2 + $0x40] sm:$0xf0]
    %v2386 = vld [vmem:[#allocation2 + $0x48] sm:$0xf0]
    %v2387 = vld [vmem:[#allocation2 + $0x50] sm:$0xf0]
    %2388 = vset.pattern.permute.xlu0 19
    %2389 = vperm.xlu0 %2388, %v1758
    %v2390 = vpop.permute.xlu0 %2389
    %v2391 = vrot.slane %v2390, 4
    %v2393 = vmul.f32 %v2384, %v2391
    %v2394 = vmul.f32 %v2385, %v2391
    %v2395 = vmul.f32 %v2386, %v2391
    %v2396 = vmul.f32 %v2387, %v2391
    %v2401 = vrot.slane %v2368, 4
    %v2402 = vrot.slane %v2369, 4
    %v2403 = vrot.slane %v2370, 4
    %v2404 = vrot.slane %v2371, 4
    %v2409 = vadd.f32 %v2355, %v2401
    %v2410 = vadd.f32 %v2356, %v2402
    %v2411 = vadd.f32 %v2357, %v2403
    %v2412 = vadd.f32 %v2358, %v2404
    %v2417 = vrot.slane %v2393, 4
    %v2418 = vrot.slane %v2394, 4
    %v2419 = vrot.slane %v2395, 4
    %v2420 = vrot.slane %v2396, 4
    %v2425 = vadd.f32 %v2380, %v2417
    %v2426 = vadd.f32 %v2381, %v2418
    %v2427 = vadd.f32 %v2382, %v2419
    %v2428 = vadd.f32 %v2383, %v2420
    %v2429 = vadd.f32 %v2409, %v2425
    %v2430 = vadd.f32 %v2410, %v2426
    %v2431 = vadd.f32 %v2411, %v2427
    %v2432 = vadd.f32 %v2412, %v2428
    %2437 = vrot.lane.b32.xlu0 %v2429, 127
    %v2438 = vpop.permute.xlu0 %2437
    %2439 = vrot.lane.b32.xlu0 %v2430, 127
    %v2440 = vpop.permute.xlu0 %2439
    %2441 = vrot.lane.b32.xlu0 %v2431, 127
    %v2442 = vpop.permute.xlu0 %2441
    %2443 = vrot.lane.b32.xlu0 %v2432, 127
    %v2444 = vpop.permute.xlu0 %2443
    %v2445 = vsel %vm510, %v2438, %v2440
    %v2446 = vsel %vm510, %v2440, %v2442
    %v2447 = vsel %vm510, %v2442, %v2444
    %v2453 = vadd.f32 %v2342, %v2438
    %v2454 = vadd.f32 %v2343, %v2445
    %v2455 = vadd.f32 %v2344, %v2446
    %v2456 = vadd.f32 %v2345, %v2447
    %v2457 = vadd.f32 %v2346, %v2444
    %v2458 = vld [vmem:[#allocation2 + $0x8] sm:$0xf]
    %v2459 = vld [vmem:[#allocation2 + $0x10] sm:$0xf]
    %v2460 = vld [vmem:[#allocation2 + $0x18] sm:$0xf]
    %v2461 = vld [vmem:[#allocation2 + $0x20] sm:$0xf]
    %v2462 = vld [vmem:[#allocation2 + $0x28] sm:$0xf]
    %2463 = vset.pattern.permute.xlu0 20
    %2464 = vperm.xlu0 %2463, %v1758
    %v2465 = vpop.permute.xlu0 %2464
    %v2467 = vmul.f32 %v2458, %v2465
    %v2468 = vmul.f32 %v2459, %v2465
    %v2469 = vmul.f32 %v2460, %v2465
    %v2470 = vmul.f32 %v2461, %v2465
    %v2471 = vmul.f32 %v2462, %v2465
    %v2472 = vld [vmem:[#allocation2 + $0x8] sm:$0xf0]
    %v2473 = vld [vmem:[#allocation2 + $0x10] sm:$0xf0]
    %v2474 = vld [vmem:[#allocation2 + $0x18] sm:$0xf0]
    %v2475 = vld [vmem:[#allocation2 + $0x20] sm:$0xf0]
    %v2476 = vld [vmem:[#allocation2 + $0x28] sm:$0xf0]
    %2477 = vset.pattern.permute.xlu0 21
    %2478 = vperm.xlu0 %2477, %v1758
    %v2479 = vpop.permute.xlu0 %2478
    %v2480 = vrot.slane %v2479, 4
    %v2482 = vmul.f32 %v2472, %v2480
    %v2483 = vmul.f32 %v2473, %v2480
    %v2484 = vmul.f32 %v2474, %v2480
    %v2485 = vmul.f32 %v2475, %v2480
    %v2486 = vmul.f32 %v2476, %v2480
    %v2487 = vld [vmem:[#allocation2 + $0x38] sm:$0xf]
    %v2488 = vld [vmem:[#allocation2 + $0x40] sm:$0xf]
    %v2489 = vld [vmem:[#allocation2 + $0x48] sm:$0xf]
    %v2490 = vld [vmem:[#allocation2 + $0x50] sm:$0xf]
    %v2491 = vld [vmem:[#allocation2 + $0x58] sm:$0xf]
    %2492 = vset.pattern.permute.xlu0 22
    %2493 = vperm.xlu0 %2492, %v1758
    %v2494 = vpop.permute.xlu0 %2493
    %v2496 = vmul.f32 %v2487, %v2494
    %v2497 = vmul.f32 %v2488, %v2494
    %v2498 = vmul.f32 %v2489, %v2494
    %v2499 = vmul.f32 %v2490, %v2494
    %v2500 = vmul.f32 %v2491, %v2494
    %v2501 = vld [vmem:[#allocation2 + $0x38] sm:$0xf0]
    %v2502 = vld [vmem:[#allocation2 + $0x40] sm:$0xf0]
    %v2503 = vld [vmem:[#allocation2 + $0x48] sm:$0xf0]
    %v2504 = vld [vmem:[#allocation2 + $0x50] sm:$0xf0]
    %v2505 = vld [vmem:[#allocation2 + $0x58] sm:$0xf0]
    %2506 = vset.pattern.permute.xlu0 23
    %2507 = vperm.xlu0 %2506, %v1758
    %v2508 = vpop.permute.xlu0 %2507
    %v2509 = vrot.slane %v2508, 4
    %v2511 = vmul.f32 %v2501, %v2509
    %v2512 = vmul.f32 %v2502, %v2509
    %v2513 = vmul.f32 %v2503, %v2509
    %v2514 = vmul.f32 %v2504, %v2509
    %v2515 = vmul.f32 %v2505, %v2509
    %v2521 = vrot.slane %v2482, 4
    %v2522 = vrot.slane %v2483, 4
    %v2523 = vrot.slane %v2484, 4
    %v2524 = vrot.slane %v2485, 4
    %v2525 = vrot.slane %v2486, 4
    %v2531 = vadd.f32 %v2467, %v2521
    %v2532 = vadd.f32 %v2468, %v2522
    %v2533 = vadd.f32 %v2469, %v2523
    %v2534 = vadd.f32 %v2470, %v2524
    %v2535 = vadd.f32 %v2471, %v2525
    %v2541 = vrot.slane %v2511, 4
    %v2542 = vrot.slane %v2512, 4
    %v2543 = vrot.slane %v2513, 4
    %v2544 = vrot.slane %v2514, 4
    %v2545 = vrot.slane %v2515, 4
    %v2551 = vadd.f32 %v2496, %v2541
    %v2552 = vadd.f32 %v2497, %v2542
    %v2553 = vadd.f32 %v2498, %v2543
    %v2554 = vadd.f32 %v2499, %v2544
    %v2555 = vadd.f32 %v2500, %v2545
    %v2556 = vadd.f32 %v2531, %v2551
    %v2557 = vadd.f32 %v2532, %v2552
    %v2558 = vadd.f32 %v2533, %v2553
    %v2559 = vadd.f32 %v2534, %v2554
    %v2560 = vadd.f32 %v2535, %v2555
    %v2561 = vld [vmem:[%s1037] sm:$0xff]
    %v2562 = vld [vmem:[%s1037 + $0x8] sm:$0xff]
    %v2565 = vcombine.high %v2561, %v2561
    %v2566 = vcombine.high %v2562, %v2562
    %2567 = vrot.lane.b32.xlu0 %v2561, 1
    %v2568 = vpop.permute.xlu0 %2567
    %2569 = vrot.lane.b32.xlu0 %v2565, 1
    %v2570 = vpop.permute.xlu0 %2569
    %2571 = vrot.lane.b32.xlu0 %v2562, 1
    %v2572 = vpop.permute.xlu0 %2571
    %2573 = vrot.lane.b32.xlu0 %v2566, 1
    %v2574 = vpop.permute.xlu0 %2573
    %v2575 = vsel %vm1052, %v2568, %v2570
    %v2576 = vsel %vm1052, %v2570, %v2572
    %v2577 = vsel %vm1052, %v2572, %v2574
    %v2583 = vmul.f32 %v2556, %v2568
    %v2584 = vmul.f32 %v2557, %v2575
    %v2585 = vmul.f32 %v2558, %v2576
    %v2586 = vmul.f32 %v2559, %v2577
    %v2587 = vmul.f32 %v2560, %v2574
    %2593 = vrot.lane.b32.xlu0 %v2583, 126
    %v2594 = vpop.permute.xlu0 %2593
    %2595 = vrot.lane.b32.xlu0 %v2584, 126
    %v2596 = vpop.permute.xlu0 %2595
    %2597 = vrot.lane.b32.xlu0 %v2585, 126
    %v2598 = vpop.permute.xlu0 %2597
    %2599 = vrot.lane.b32.xlu0 %v2586, 126
    %v2600 = vpop.permute.xlu0 %2599
    %2601 = vrot.lane.b32.xlu0 %v2587, 126
    %v2602 = vpop.permute.xlu0 %2601
    %v2603 = vsel %vm672, %v2594, %v2596
    %v2604 = vsel %vm672, %v2596, %v2598
    %v2605 = vsel %vm672, %v2598, %v2600
    %v2606 = vsel %vm672, %v2600, %v2602
    %v2612 = vadd.f32 %v2453, %v2594
    %v2613 = vadd.f32 %v2454, %v2603
    %v2614 = vadd.f32 %v2455, %v2604
    %v2615 = vadd.f32 %v2456, %v2605
    %v2616 = vadd.f32 %v2457, %v2606
    %v2617 = vld [vmem:[#allocation2 + $0x8] sm:$0xf]
    %v2618 = vld [vmem:[#allocation2 + $0x10] sm:$0xf]
    %v2619 = vld [vmem:[#allocation2 + $0x18] sm:$0xf]
    %v2620 = vld [vmem:[#allocation2 + $0x20] sm:$0xf]
    %v2621 = vld [vmem:[#allocation2 + $0x28] sm:$0xf]
    %2622 = vset.pattern.permute.xlu0 24
    %2623 = vperm.xlu0 %2622, %v1758
    %v2624 = vpop.permute.xlu0 %2623
    %v2626 = vmul.f32 %v2617, %v2624
    %v2627 = vmul.f32 %v2618, %v2624
    %v2628 = vmul.f32 %v2619, %v2624
    %v2629 = vmul.f32 %v2620, %v2624
    %v2630 = vmul.f32 %v2621, %v2624
    %v2631 = vld [vmem:[#allocation2 + $0x8] sm:$0xf0]
    %v2632 = vld [vmem:[#allocation2 + $0x10] sm:$0xf0]
    %v2633 = vld [vmem:[#allocation2 + $0x18] sm:$0xf0]
    %v2634 = vld [vmem:[#allocation2 + $0x20] sm:$0xf0]
    %v2635 = vld [vmem:[#allocation2 + $0x28] sm:$0xf0]
    %2636 = vset.pattern.permute.xlu0 25
    %2637 = vperm.xlu0 %2636, %v1758
    %v2638 = vpop.permute.xlu0 %2637
    %v2639 = vrot.slane %v2638, 4
    %v2641 = vmul.f32 %v2631, %v2639
    %v2642 = vmul.f32 %v2632, %v2639
    %v2643 = vmul.f32 %v2633, %v2639
    %v2644 = vmul.f32 %v2634, %v2639
    %v2645 = vmul.f32 %v2635, %v2639
    %v2646 = vld [vmem:[#allocation2 + $0x38] sm:$0xf]
    %v2647 = vld [vmem:[#allocation2 + $0x40] sm:$0xf]
    %v2648 = vld [vmem:[#allocation2 + $0x48] sm:$0xf]
    %v2649 = vld [vmem:[#allocation2 + $0x50] sm:$0xf]
    %v2650 = vld [vmem:[#allocation2 + $0x58] sm:$0xf]
    %2651 = vset.pattern.permute.xlu0 26
    %2652 = vperm.xlu0 %2651, %v1758
    %v2653 = vpop.permute.xlu0 %2652
    %v2655 = vmul.f32 %v2646, %v2653
    %v2656 = vmul.f32 %v2647, %v2653
    %v2657 = vmul.f32 %v2648, %v2653
    %v2658 = vmul.f32 %v2649, %v2653
    %v2659 = vmul.f32 %v2650, %v2653
    %v2660 = vld [vmem:[#allocation2 + $0x38] sm:$0xf0]
    %v2661 = vld [vmem:[#allocation2 + $0x40] sm:$0xf0]
    %v2662 = vld [vmem:[#allocation2 + $0x48] sm:$0xf0]
    %v2663 = vld [vmem:[#allocation2 + $0x50] sm:$0xf0]
    %v2664 = vld [vmem:[#allocation2 + $0x58] sm:$0xf0]
    %2665 = vset.pattern.permute.xlu0 27
    %2666 = vperm.xlu0 %2665, %v1758
    %v2667 = vpop.permute.xlu0 %2666
    %v2668 = vrot.slane %v2667, 4
    %v2670 = vmul.f32 %v2660, %v2668
    %v2671 = vmul.f32 %v2661, %v2668
    %v2672 = vmul.f32 %v2662, %v2668
    %v2673 = vmul.f32 %v2663, %v2668
    %v2674 = vmul.f32 %v2664, %v2668
    %v2680 = vrot.slane %v2641, 4
    %v2681 = vrot.slane %v2642, 4
    %v2682 = vrot.slane %v2643, 4
    %v2683 = vrot.slane %v2644, 4
    %v2684 = vrot.slane %v2645, 4
    %v2690 = vadd.f32 %v2626, %v2680
    %v2691 = vadd.f32 %v2627, %v2681
    %v2692 = vadd.f32 %v2628, %v2682
    %v2693 = vadd.f32 %v2629, %v2683
    %v2694 = vadd.f32 %v2630, %v2684
    %v2700 = vrot.slane %v2670, 4
    %v2701 = vrot.slane %v2671, 4
    %v2702 = vrot.slane %v2672, 4
    %v2703 = vrot.slane %v2673, 4
    %v2704 = vrot.slane %v2674, 4
    %v2710 = vadd.f32 %v2655, %v2700
    %v2711 = vadd.f32 %v2656, %v2701
    %v2712 = vadd.f32 %v2657, %v2702
    %v2713 = vadd.f32 %v2658, %v2703
    %v2714 = vadd.f32 %v2659, %v2704
    %v2715 = vadd.f32 %v2690, %v2710
    %v2716 = vadd.f32 %v2691, %v2711
    %v2717 = vadd.f32 %v2692, %v2712
    %v2718 = vadd.f32 %v2693, %v2713
    %v2719 = vadd.f32 %v2694, %v2714
    %v2720 = vld [vmem:[%s1198] sm:$0xff]
    %v2721 = vld [vmem:[%s1198 + $0x8] sm:$0xff]
    %v2724 = vcombine.high %v2720, %v2720
    %v2725 = vcombine.high %v2721, %v2721
    %2726 = vrot.lane.b32.xlu0 %v2720, 15
    %v2727 = vpop.permute.xlu0 %2726
    %2728 = vrot.lane.b32.xlu0 %v2724, 15
    %v2729 = vpop.permute.xlu0 %2728
    %2730 = vrot.lane.b32.xlu0 %v2721, 15
    %v2731 = vpop.permute.xlu0 %2730
    %2732 = vrot.lane.b32.xlu0 %v2725, 15
    %v2733 = vpop.permute.xlu0 %2732
    %v2734 = vsel %vm1213, %v2727, %v2729
    %v2735 = vsel %vm1213, %v2729, %v2731
    %v2736 = vsel %vm1213, %v2731, %v2733
    %v2742 = vmul.f32 %v2715, %v2727
    %v2743 = vmul.f32 %v2716, %v2734
    %v2744 = vmul.f32 %v2717, %v2735
    %v2745 = vmul.f32 %v2718, %v2736
    %v2746 = vmul.f32 %v2719, %v2733
    %v2747 = vld [vmem:[#allocation2 + $0x8] sm:$0xf]
    %v2748 = vld [vmem:[#allocation2 + $0x10] sm:$0xf]
    %v2749 = vld [vmem:[#allocation2 + $0x18] sm:$0xf]
    %v2750 = vld [vmem:[#allocation2 + $0x20] sm:$0xf]
    %v2751 = vld [vmem:[#allocation2 + $0x28] sm:$0xf]
    %2752 = vset.pattern.permute.xlu0 28
    %2753 = vperm.xlu0 %2752, %v1758
    %v2754 = vpop.permute.xlu0 %2753
    %v2756 = vmul.f32 %v2747, %v2754
    %v2757 = vmul.f32 %v2748, %v2754
    %v2758 = vmul.f32 %v2749, %v2754
    %v2759 = vmul.f32 %v2750, %v2754
    %v2760 = vmul.f32 %v2751, %v2754
    %v2761 = vld [vmem:[#allocation2 + $0x8] sm:$0xf0]
    %v2762 = vld [vmem:[#allocation2 + $0x10] sm:$0xf0]
    %v2763 = vld [vmem:[#allocation2 + $0x18] sm:$0xf0]
    %v2764 = vld [vmem:[#allocation2 + $0x20] sm:$0xf0]
    %v2765 = vld [vmem:[#allocation2 + $0x28] sm:$0xf0]
    %2766 = vset.pattern.permute.xlu0 29
    %2767 = vperm.xlu0 %2766, %v1758
    %v2768 = vpop.permute.xlu0 %2767
    %v2769 = vrot.slane %v2768, 4
    %v2771 = vmul.f32 %v2761, %v2769
    %v2772 = vmul.f32 %v2762, %v2769
    %v2773 = vmul.f32 %v2763, %v2769
    %v2774 = vmul.f32 %v2764, %v2769
    %v2775 = vmul.f32 %v2765, %v2769
    %v2776 = vld [vmem:[#allocation2 + $0x38] sm:$0xf]
    %v2777 = vld [vmem:[#allocation2 + $0x40] sm:$0xf]
    %v2778 = vld [vmem:[#allocation2 + $0x48] sm:$0xf]
    %v2779 = vld [vmem:[#allocation2 + $0x50] sm:$0xf]
    %v2780 = vld [vmem:[#allocation2 + $0x58] sm:$0xf]
    %2781 = vset.pattern.permute.xlu0 30
    %2782 = vperm.xlu0 %2781, %v1758
    %v2783 = vpop.permute.xlu0 %2782
    %v2785 = vmul.f32 %v2776, %v2783
    %v2786 = vmul.f32 %v2777, %v2783
    %v2787 = vmul.f32 %v2778, %v2783
    %v2788 = vmul.f32 %v2779, %v2783
    %v2789 = vmul.f32 %v2780, %v2783
    %v2790 = vld [vmem:[#allocation2 + $0x38] sm:$0xf0]
    %v2791 = vld [vmem:[#allocation2 + $0x40] sm:$0xf0]
    %v2792 = vld [vmem:[#allocation2 + $0x48] sm:$0xf0]
    %v2793 = vld [vmem:[#allocation2 + $0x50] sm:$0xf0]
    %v2794 = vld [vmem:[#allocation2 + $0x58] sm:$0xf0]
    %2795 = vset.pattern.permute.xlu0 31
    %2796 = vperm.xlu0 %2795, %v1758
    %v2797 = vpop.permute.xlu0 %2796
    %v2798 = vrot.slane %v2797, 4
    %v2800 = vmul.f32 %v2790, %v2798
    %v2801 = vmul.f32 %v2791, %v2798
    %v2802 = vmul.f32 %v2792, %v2798
    %v2803 = vmul.f32 %v2793, %v2798
    %v2804 = vmul.f32 %v2794, %v2798
    %v2810 = vrot.slane %v2771, 4
    %v2811 = vrot.slane %v2772, 4
    %v2812 = vrot.slane %v2773, 4
    %v2813 = vrot.slane %v2774, 4
    %v2814 = vrot.slane %v2775, 4
    %v2820 = vadd.f32 %v2756, %v2810
    %v2821 = vadd.f32 %v2757, %v2811
    %v2822 = vadd.f32 %v2758, %v2812
    %v2823 = vadd.f32 %v2759, %v2813
    %v2824 = vadd.f32 %v2760, %v2814
    %v2830 = vrot.slane %v2800, 4
    %v2831 = vrot.slane %v2801, 4
    %v2832 = vrot.slane %v2802, 4
    %v2833 = vrot.slane %v2803, 4
    %v2834 = vrot.slane %v2804, 4
    %v2840 = vadd.f32 %v2785, %v2830
    %v2841 = vadd.f32 %v2786, %v2831
    %v2842 = vadd.f32 %v2787, %v2832
    %v2843 = vadd.f32 %v2788, %v2833
    %v2844 = vadd.f32 %v2789, %v2834
    %v2845 = vadd.f32 %v2820, %v2840
    %v2846 = vadd.f32 %v2821, %v2841
    %v2847 = vadd.f32 %v2822, %v2842
    %v2848 = vadd.f32 %v2823, %v2843
    %v2849 = vadd.f32 %v2824, %v2844
    %v2850 = vld [vmem:[%s1330] sm:$0xff]
    %v2851 = vld [vmem:[%s1330 + $0x8] sm:$0xff]
    %v2854 = vcombine.high %v2850, %v2850
    %v2855 = vcombine.high %v2851, %v2851
    %2856 = vrot.lane.b32.xlu0 %v2850, 16
    %v2857 = vpop.permute.xlu0 %2856
    %2858 = vrot.lane.b32.xlu0 %v2854, 16
    %v2859 = vpop.permute.xlu0 %2858
    %2860 = vrot.lane.b32.xlu0 %v2851, 16
    %v2861 = vpop.permute.xlu0 %2860
    %2862 = vrot.lane.b32.xlu0 %v2855, 16
    %v2863 = vpop.permute.xlu0 %2862
    %v2864 = vsel %vm1345, %v2857, %v2859
    %v2865 = vsel %vm1345, %v2859, %v2861
    %v2866 = vsel %vm1345, %v2861, %v2863
    %v2872 = vmul.f32 %v2845, %v2857
    %v2873 = vmul.f32 %v2846, %v2864
    %v2874 = vmul.f32 %v2847, %v2865
    %v2875 = vmul.f32 %v2848, %v2866
    %v2876 = vmul.f32 %v2849, %v2863
    %2882 = vrot.lane.b32.xlu0 %v2872, 127
    %v2883 = vpop.permute.xlu0 %2882
    %2884 = vrot.lane.b32.xlu0 %v2873, 127
    %v2885 = vpop.permute.xlu0 %2884
    %2886 = vrot.lane.b32.xlu0 %v2874, 127
    %v2887 = vpop.permute.xlu0 %2886
    %2888 = vrot.lane.b32.xlu0 %v2875, 127
    %v2889 = vpop.permute.xlu0 %2888
    %2890 = vrot.lane.b32.xlu0 %v2876, 127
    %v2891 = vpop.permute.xlu0 %2890
    %v2892 = vsel %vm510, %v2883, %v2885
    %v2893 = vsel %vm510, %v2885, %v2887
    %v2894 = vsel %vm510, %v2887, %v2889
    %v2895 = vsel %vm510, %v2889, %v2891
    %v2901 = vadd.f32 %v2742, %v2892
    %v2902 = vadd.f32 %v2743, %v2893
    %v2903 = vadd.f32 %v2744, %v2894
    %v2904 = vadd.f32 %v2745, %v2895
    %v2905 = vadd.f32 %v2746, %v2891
    %v2906 = vld [vmem:[#allocation2 + $0x8] sm:$0xf]
    %v2907 = vld [vmem:[#allocation2 + $0x10] sm:$0xf]
    %v2908 = vld [vmem:[#allocation2 + $0x18] sm:$0xf]
    %v2909 = vld [vmem:[#allocation2 + $0x20] sm:$0xf]
    %v2910 = vld [vmem:[#allocation2 + $0x28] sm:$0xf]
    %2911 = vset.pattern.permute.xlu0 32
    %2912 = vperm.xlu0 %2911, %v1758
    %v2913 = vpop.permute.xlu0 %2912
    %v2915 = vmul.f32 %v2906, %v2913
    %v2916 = vmul.f32 %v2907, %v2913
    %v2917 = vmul.f32 %v2908, %v2913
    %v2918 = vmul.f32 %v2909, %v2913
    %v2919 = vmul.f32 %v2910, %v2913
    %v2920 = vld [vmem:[#allocation2 + $0x8] sm:$0xf0]
    %v2921 = vld [vmem:[#allocation2 + $0x10] sm:$0xf0]
    %v2922 = vld [vmem:[#allocation2 + $0x18] sm:$0xf0]
    %v2923 = vld [vmem:[#allocation2 + $0x20] sm:$0xf0]
    %v2924 = vld [vmem:[#allocation2 + $0x28] sm:$0xf0]
    %2925 = vset.pattern.permute.xlu0 33
    %2926 = vperm.xlu0 %2925, %v1758
    %v2927 = vpop.permute.xlu0 %2926
    %v2928 = vrot.slane %v2927, 4
    %v2930 = vmul.f32 %v2920, %v2928
    %v2931 = vmul.f32 %v2921, %v2928
    %v2932 = vmul.f32 %v2922, %v2928
    %v2933 = vmul.f32 %v2923, %v2928
    %v2934 = vmul.f32 %v2924, %v2928
    %v2935 = vld [vmem:[#allocation2 + $0x38] sm:$0xf]
    %v2936 = vld [vmem:[#allocation2 + $0x40] sm:$0xf]
    %v2937 = vld [vmem:[#allocation2 + $0x48] sm:$0xf]
    %v2938 = vld [vmem:[#allocation2 + $0x50] sm:$0xf]
    %v2939 = vld [vmem:[#allocation2 + $0x58] sm:$0xf]
    %2940 = vset.pattern.permute.xlu0 34
    %2941 = vperm.xlu0 %2940, %v1758
    %v2942 = vpop.permute.xlu0 %2941
    %v2944 = vmul.f32 %v2935, %v2942
    %v2945 = vmul.f32 %v2936, %v2942
    %v2946 = vmul.f32 %v2937, %v2942
    %v2947 = vmul.f32 %v2938, %v2942
    %v2948 = vmul.f32 %v2939, %v2942
    %v2949 = vld [vmem:[#allocation2 + $0x38] sm:$0xf0]
    %v2950 = vld [vmem:[#allocation2 + $0x40] sm:$0xf0]
    %v2951 = vld [vmem:[#allocation2 + $0x48] sm:$0xf0]
    %v2952 = vld [vmem:[#allocation2 + $0x50] sm:$0xf0]
    %v2953 = vld [vmem:[#allocation2 + $0x58] sm:$0xf0]
    %2954 = vset.pattern.permute.xlu0 35
    %2955 = vperm.xlu0 %2954, %v1758
    %v2956 = vpop.permute.xlu0 %2955
    %v2957 = vrot.slane %v2956, 4
    %v2959 = vmul.f32 %v2949, %v2957
    %v2960 = vmul.f32 %v2950, %v2957
    %v2961 = vmul.f32 %v2951, %v2957
    %v2962 = vmul.f32 %v2952, %v2957
    %v2963 = vmul.f32 %v2953, %v2957
    %v2969 = vrot.slane %v2930, 4
    %v2970 = vrot.slane %v2931, 4
    %v2971 = vrot.slane %v2932, 4
    %v2972 = vrot.slane %v2933, 4
    %v2973 = vrot.slane %v2934, 4
    %v2979 = vadd.f32 %v2915, %v2969
    %v2980 = vadd.f32 %v2916, %v2970
    %v2981 = vadd.f32 %v2917, %v2971
    %v2982 = vadd.f32 %v2918, %v2972
    %v2983 = vadd.f32 %v2919, %v2973
    %v2989 = vrot.slane %v2959, 4
    %v2990 = vrot.slane %v2960, 4
    %v2991 = vrot.slane %v2961, 4
    %v2992 = vrot.slane %v2962, 4
    %v2993 = vrot.slane %v2963, 4
    %v2999 = vadd.f32 %v2944, %v2989
    %v3000 = vadd.f32 %v2945, %v2990
    %v3001 = vadd.f32 %v2946, %v2991
    %v3002 = vadd.f32 %v2947, %v2992
    %v3003 = vadd.f32 %v2948, %v2993
    %v3004 = vadd.f32 %v2979, %v2999
    %v3005 = vadd.f32 %v2980, %v3000
    %v3006 = vadd.f32 %v2981, %v3001
    %v3007 = vadd.f32 %v2982, %v3002
    %v3008 = vadd.f32 %v2983, %v3003
    %v3009 = vld [vmem:[%s1491] sm:$0xff]
    %v3010 = vld [vmem:[%s1491 + $0x8] sm:$0xff]
    %v3013 = vcombine.high %v3009, %v3009
    %v3014 = vcombine.high %v3010, %v3010
    %3015 = vrot.lane.b32.xlu0 %v3009, 17
    %v3016 = vpop.permute.xlu0 %3015
    %3017 = vrot.lane.b32.xlu0 %v3013, 17
    %v3018 = vpop.permute.xlu0 %3017
    %3019 = vrot.lane.b32.xlu0 %v3010, 17
    %v3020 = vpop.permute.xlu0 %3019
    %3021 = vrot.lane.b32.xlu0 %v3014, 17
    %v3022 = vpop.permute.xlu0 %3021
    %v3023 = vsel %vm1506, %v3016, %v3018
    %v3024 = vsel %vm1506, %v3018, %v3020
    %v3025 = vsel %vm1506, %v3020, %v3022
    %v3031 = vmul.f32 %v3004, %v3016
    %v3032 = vmul.f32 %v3005, %v3023
    %v3033 = vmul.f32 %v3006, %v3024
    %v3034 = vmul.f32 %v3007, %v3025
    %v3035 = vmul.f32 %v3008, %v3022
    %3041 = vrot.lane.b32.xlu0 %v3031, 126
    %v3042 = vpop.permute.xlu0 %3041
    %3043 = vrot.lane.b32.xlu0 %v3032, 126
    %v3044 = vpop.permute.xlu0 %3043
    %3045 = vrot.lane.b32.xlu0 %v3033, 126
    %v3046 = vpop.permute.xlu0 %3045
    %3047 = vrot.lane.b32.xlu0 %v3034, 126
    %v3048 = vpop.permute.xlu0 %3047
    %3049 = vrot.lane.b32.xlu0 %v3035, 126
    %v3050 = vpop.permute.xlu0 %3049
    %v3051 = vsel %vm672, %v3042, %v3044
    %v3052 = vsel %vm672, %v3044, %v3046
    %v3053 = vsel %vm672, %v3046, %v3048
    %v3054 = vsel %vm672, %v3048, %v3050
    %v3060 = vadd.f32 %v2901, %v3051
    %v3061 = vadd.f32 %v2902, %v3052
    %v3062 = vadd.f32 %v2903, %v3053
    %v3063 = vadd.f32 %v2904, %v3054
    %v3064 = vadd.f32 %v2905, %v3050
    %3070 = vrot.lane.b32.xlu0 %v2612, 112
    %v3071 = vpop.permute.xlu0 %3070
    %3072 = vrot.lane.b32.xlu0 %v2613, 112
    %v3073 = vpop.permute.xlu0 %3072
    %3074 = vrot.lane.b32.xlu0 %v2614, 112
    %v3075 = vpop.permute.xlu0 %3074
    %3076 = vrot.lane.b32.xlu0 %v2615, 112
    %v3077 = vpop.permute.xlu0 %3076
    %3078 = vrot.lane.b32.xlu0 %v2616, 112
    %v3079 = vpop.permute.xlu0 %3078
    %v3080 = vsel %vm481, %v3071, %v3073
    %v3081 = vsel %vm481, %v3073, %v3075
    %v3082 = vsel %vm481, %v3075, %v3077
    %v3083 = vsel %vm481, %v3077, %v3079
    %v3089 = vadd.f32 %v2207, %v3080
    %v3090 = vadd.f32 %v2208, %v3081
    %v3091 = vadd.f32 %v2209, %v3082
    %v3092 = vadd.f32 %v2210, %v3083
    %v3093 = vadd.f32 %v2211, %v3079
    %3099 = vrot.lane.b32.xlu0 %v3060, 96
    %v3100 = vpop.permute.xlu0 %3099
    %3101 = vrot.lane.b32.xlu0 %v3061, 96
    %v3102 = vpop.permute.xlu0 %3101
    %3103 = vrot.lane.b32.xlu0 %v3062, 96
    %v3104 = vpop.permute.xlu0 %3103
    %3105 = vrot.lane.b32.xlu0 %v3063, 96
    %v3106 = vpop.permute.xlu0 %3105
    %3107 = vrot.lane.b32.xlu0 %v3064, 96
    %v3108 = vpop.permute.xlu0 %3107
    %v3109 = vsel %vm1593, %v3100, %v3102
    %v3110 = vsel %vm1593, %v3102, %v3104
    %v3111 = vsel %vm1593, %v3104, %v3106
    %v3112 = vsel %vm1593, %v3106, %v3108
    %v3118 = vadd.f32 %v3089, %v3100
    %v3119 = vadd.f32 %v3090, %v3109
    %v3120 = vadd.f32 %v3091, %v3110
    %v3121 = vadd.f32 %v3092, %v3111
    %v3122 = vadd.f32 %v3093, %v3112
    %v3123 = vld [vmem:[#allocation3] sm:$0xff]
    %v3125 = vcombine.high %v3123, %v3123
    %3126 = vrot.lane.b32.xlu0 %v3123, 111
    %v3127 = vpop.permute.xlu0 %3126
    %3128 = vrot.lane.b32.xlu0 %v3125, 111
    %v3129 = vpop.permute.xlu0 %3128
    %v3130 = vsel %vm349, %v3127, %v3129
    %v3134 = vadd.f32 %v3118, %v3127
    %v3135 = vadd.f32 %v3119, %v3130
    %v3136 = vadd.f32 %v3120, %v3129
    %v3140 = vcombine.low %v3134, %v3135
    %3141 = vrot.lane.b32.xlu0 %v3140, 17
    %v3142 = vpop.permute.xlu0 %3141
    %3143 = vrot.lane.b32.xlu0 %v3136, 17
    %v3144 = vpop.permute.xlu0 %3143
    %v3145 = vrot.slane %v3142, 4
    %v3146 = vrot.slane %v3144, 4
    %v3147 = vsel %vm134, %v3145, %v3146
    %v3148 = vsel %vm1506, %v3142, %v3147
    %3150 = vst [vmem:[#allocation9] sm:$0xff] %v3148
    %v3151 = vld [vmem:[%s143] sm:$0xff]
    %v3153 = vcombine.high %v3151, %v3151
    %3154 = vrot.lane.b32.xlu0 %v3151, 111
    %v3155 = vpop.permute.xlu0 %3154
    %3156 = vrot.lane.b32.xlu0 %v3153, 111
    %v3157 = vpop.permute.xlu0 %3156
    %v3158 = vsel %vm349, %v3155, %v3157
    %v3162 = vadd.f32 %v3120, %v3155
    %v3163 = vadd.f32 %v3121, %v3158
    %v3164 = vadd.f32 %v3122, %v3157
    %v3168 = vcombine.low %v3162, %v3163
    %3169 = vrot.lane.b32.xlu0 %v3168, 17
    %v3170 = vpop.permute.xlu0 %3169
    %3171 = vrot.lane.b32.xlu0 %v3164, 17
    %v3172 = vpop.permute.xlu0 %3171
    %v3173 = vrot.slane %v3170, 4
    %v3174 = vrot.slane %v3172, 4
    %v3175 = vsel %vm134, %v3173, %v3174
    %v3176 = vsel %vm1506, %v3170, %v3175
    %s3178 = scalar_lea.vmem [#allocation9], 8
    %3179 = vst [vmem:[%s3178] sm:$0xff] %v3176
    // Predicated region
    $region26: #{tpu_custom_call.1} parent=1 // pred_check
      _
    $region27: #{tpu_custom_call.1} parent=1 // pred_check_branch
      %3181 = sbr.rel (0) target = $region29
    $region28: #{tpu_custom_call.1} parent=1 // pred_region
      %s3183 = ssub.s32 256, 256
      %3184 = vsyncadd [#allocation5], %s3183
      %s3185 = sshll.u32 [#allocation9], 4
      %s3186 = int_to_ptr.vmem [resolvable:$true] %s3185
      %3191 = dma.vmem_to_hbm [thread:$0]  %s3186, 256, %s3, [#allocation5], 128, 128, 8
    $region29: #{tpu_custom_call.1} parent=1 // pred_fallthru
      _
    // Predicated region
    $region30: #{tpu_custom_call.1} parent=1 // pred_check
      _
    $region31: #{tpu_custom_call.1} parent=1 // pred_check_branch
      %3193 = sbr.rel (0) target = $region33
    $region32: #{tpu_custom_call.1} parent=1 // pred_region
      %3194 = dma.done [#allocation5], 256
    $region33: #{tpu_custom_call.1} parent=1 // pred_fallthru
      _
    %3195 = vsyncpa [#allocation4], 1
    %3196 = vsyncpa [#allocation7], 1
    %3197 = vsyncpa [#allocation5], 1

</llo_original>
